<compile_context>
chip_gen: v7x
topology: tpu7x:2x2x1
jax: 0.10.0
libtpu: 0.0.40
codegen_flags: <defaults>
</compile_context>

<pallas_src>
import numpy as np
import jax
import jax.numpy as jnp
from jax.experimental import pallas as pl
from jax.experimental.pallas import tpu as pltpu

NEG_SLOPE = 0.01   # nn.LeakyReLU default
BN_EPS = 1e-5      # nn.BatchNorm1d default
DROP_P = 0.1       # nn.Dropout(p=0.1)

N_CELLS = 27                    # 3x3x3 pooled output cells
N_PAIRS = (N_CELLS + 1) // 2    # 14 (second slot of the last pair is zero pad)


# --------------------------------------------------------------------------
# Static tables for the pool-cell blocking and the expanded conv weight.
# --------------------------------------------------------------------------
def _build_pool_tables():
    # block_idx[p, j]: flat index into the 9x9x9 cube of element j of the 4x4x4
    # input block feeding pool cell p (p = pd*9+ph*3+pw, j = a*16+b*4+c).
    pd, ph, pw = np.meshgrid(np.arange(3), np.arange(3), np.arange(3), indexing="ij")
    a, b, c = np.meshgrid(np.arange(4), np.arange(4), np.arange(4), indexing="ij")
    z = 2 * pd.reshape(27, 1) + a.reshape(1, 64)
    y = 2 * ph.reshape(27, 1) + b.reshape(1, 64)
    x = 2 * pw.reshape(27, 1) + c.reshape(1, 64)
    block_idx = z * 81 + y * 9 + x                              # (27, 64)

    # expand[o, k, j] = 1 where block element j == (od+kd, oh+kh, ow+kw) for
    # pool offset o = od*4+oh*2+ow and kernel offset k = kd*9+kh*3+kw.
    expand = np.zeros((8, 27, 64), np.float32)
    for od in range(2):
        for oh in range(2):
            for ow in range(2):
                o = od * 4 + oh * 2 + ow
                for kd in range(3):
                    for kh in range(3):
                        for kw in range(3):
                            k = kd * 9 + kh * 3 + kw
                            j = (od + kd) * 16 + (oh + kh) * 4 + (ow + kw)
                            expand[o, k, j] = 1.0
    return block_idx, expand


_POOL_BLOCK_IDX, _POOL_EXPAND = _build_pool_tables()


# --------------------------------------------------------------------------
# Fused kernel: Conv3d(3x3x3) + LeakyReLU + MaxPool3d(2) + features Linear/ReLU
#               + fc1 + LeakyReLU + BN1 + dropout + fc2 + LeakyReLU + BN2
#               + dropout + fc3.   Batch lives on the lane axis (TM lanes).
# --------------------------------------------------------------------------
def fused_kernel(blocks_ref, xd_ref, m1_ref, m2_ref,
                 wexp_ref, bc_ref, wf_ref, bf_ref,
                 w1_ref, b1_ref, s1_ref, t1_ref,
                 w2_ref, b2_ref, s2_ref, t2_ref,
                 w3_ref, b3_ref,
                 out_ref, cat_ref):
    tm = out_ref.shape[1]
    wexp = wexp_ref[...]                         # (256, 2*C*64) bf16, block-diag
    bias_c = bc_ref[...].reshape(1, 16, 1)       # conv bias, shared by both cells

    # Conv for BOTH cells of a pair and all 8 pool offsets in one bf16 MXU
    # matmul (f32 accumulation); rows = (cell_in_pair, offset, oc), so the
    # 2x2x2 max-pool is a leading-axis reduction over aligned 16-sublane slabs.
    # Results go straight into the fc1 input slab: cell p = 2q+m occupies rows
    # p*16 .. p*16+16, i.e. pair q writes 32 contiguous rows (16 for the last
    # pair, whose second slot is zero padding).
    for q in range(N_PAIRS):
        c = jnp.dot(wexp, blocks_ref[q], preferred_element_type=jnp.float32)  # (256, tm)
        cell = jnp.max(c.reshape(2, 8, 16, tm), axis=1) + bias_c              # (2, 16, tm)
        cell = jnp.where(cell > 0, cell, NEG_SLOPE * cell)
        rows = min(32, 16 * N_CELLS - q * 32)
        cat_ref[q * 32:q * 32 + rows, :] = cell.reshape(32, tm)[:rows, :]

    # features Linear(3,10) + ReLU -> rows 432:448 (wf/bf are zero-padded to 16
    # rows, so rows 442:448 stay exact zeros, matching fc1's zero-padded cols).
    xdf = jnp.dot(wf_ref[...], xd_ref[...], preferred_element_type=jnp.float32) + bf_ref[...]
    cat_ref[432:448, :] = jnp.maximum(xdf, 0.0)

    # fc1 (single K=448 matmul on the concatenated slab) + LeakyReLU + BN1 + drop
    h1 = jnp.dot(w1_ref[...], cat_ref[...], preferred_element_type=jnp.float32) + b1_ref[...]
    h1 = jnp.where(h1 > 0, h1, NEG_SLOPE * h1)
    h1 = (h1 * s1_ref[...] + t1_ref[...]) * m1_ref[...]

    # fc2 + LeakyReLU + BN2 + drop
    h2 = jnp.dot(w2_ref[...], h1, preferred_element_type=jnp.float32) + b2_ref[...]
    h2 = jnp.where(h2 > 0, h2, NEG_SLOPE * h2)
    h2 = (h2 * s2_ref[...] + t2_ref[...]) * m2_ref[...]

    # fc3
    out_ref[...] = jnp.dot(w3_ref[...], h2, preferred_element_type=jnp.float32) + b3_ref[...]


def _resident(shape):
    """Whole-array VMEM-resident spec (constant block index => DMA'd once)."""
    return pl.BlockSpec(shape, lambda i, _z=(0,) * len(shape): _z)


def _batch_tile(n):
    # Lane-dense batch tile (multiple of 128).  For N > 128 always produce
    # >= 2 grid steps so the "parallel" batch axis can be split across the two
    # v7x TensorCores; raise the tile for big batches to amortize the ~0.35 us
    # per-step overhead and the re-staged per-step input DMAs (biggest relative
    # win on v5e).  Even tm=1024 keeps the double-buffered bf16 blocks slab
    # (~7 MiB) + f32 cat scratch (~1.75 MiB) around 10 MiB of VMEM.
    if n <= 256:
        return 128
    if n <= 1024:
        return 256
    if n <= 4096:
        return 512
    return 1024


# --------------------------------------------------------------------------
# Wrapper: layout plumbing (blocking, transposes, weight folding) + pallas_call
# --------------------------------------------------------------------------
def simplenet3d_forward(xd, xw, params, mask1, mask2):
    N, C = xw.shape[0], xw.shape[1]
    tm = _batch_tile(N)
    n_pad = ((N + tm - 1) // tm) * tm

    # Re-block the cube into the 27 overlapping 4x4x4 pool-cell blocks with the
    # batch last (lane axis), in bf16 (halves the dominant HBM stream), and
    # group the cells in pairs along K for the block-diagonal paired matmul:
    # (14, 2*C*64, Np).  2.37x expansion, no 8x im2col.
    xw_flat = xw.astype(jnp.bfloat16).reshape(N, C, 729)
    blocks = xw_flat[:, :, _POOL_BLOCK_IDX]                        # (N, C, 27, 64)
    blocks = jnp.transpose(blocks, (2, 1, 3, 0)).reshape(N_CELLS, C * 64, N)
    blocks = jnp.pad(blocks, ((0, 2 * N_PAIRS - N_CELLS), (0, 0), (0, n_pad - N)))
    blocks = blocks.reshape(N_PAIRS, 2 * C * 64, n_pad)

    xd_t = jnp.pad(xd.T, ((0, 0), (0, n_pad - N)))                 # (3, Np)
    m1_t = jnp.pad(mask1.T, ((0, 0), (0, n_pad - N)))              # (32, Np)
    m2_t = jnp.pad(mask2.T, ((0, 0), (0, n_pad - N)))              # (8, Np)

    # Expanded conv weight: rows = (pool_offset*16 + oc), cols = (ch*64 + pos),
    # then paired block-diagonally (rows 0:128 / cols 0:64C = first cell of a
    # pair, rows 128:256 / cols 64C:128C = second cell) and cast to bf16.
    w_r = params['conv_w'].reshape(16, C, 27)
    wexp = jnp.einsum('qck,okj->oqcj', w_r,
                      jnp.asarray(_POOL_EXPAND)).reshape(8 * 16, C * 64)
    zed = jnp.zeros_like(wexp)
    wexp_pair = jnp.concatenate(
        [jnp.concatenate([wexp, zed], axis=1),
         jnp.concatenate([zed, wexp], axis=1)], axis=0).astype(jnp.bfloat16)
    bc = params['conv_b'].reshape(16, 1)

    # features Linear padded to 16 rows (rows 10:16 are zero).
    wf = jnp.pad(params['feat_w'], ((0, 6), (0, 0)))               # (16, 3)
    bf = jnp.pad(params['feat_b'], (0, 6)).reshape(16, 1)

    # fc1 weight permuted to the kernel's cat layout:
    #   cols 0:432   -> pooled, column index p*16 + oc
    #   cols 432:442 -> xd features
    #   cols 442:448 -> zero padding
    w1 = params['fc1_w']                                           # (32, 442)
    w1w = w1[:, 10:].reshape(32, 16, 27).transpose(0, 2, 1).reshape(32, 432)
    w1k = jnp.concatenate([w1w, w1[:, :10], jnp.zeros((32, 6), jnp.float32)], axis=1)

    # Fold BatchNorm1d into scale/shift column vectors.  The PyTorch forward
    # flips to eval() around batch1/batch2 (running stats) while dropout stays
    # in train mode — the kernel reproduces exactly that regime.
    s1v = params['bn1_g'] / jnp.sqrt(params['bn1_v'] + BN_EPS)
    t1v = params['bn1_b'] - params['bn1_m'] * s1v
    s2v = params['bn2_g'] / jnp.sqrt(params['bn2_v'] + BN_EPS)
    t2v = params['bn2_b'] - params['bn2_m'] * s2v

    out_t = pl.pallas_call(
        fused_kernel,
        out_shape=jax.ShapeDtypeStruct((3, n_pad), jnp.float32),
        grid=(n_pad // tm,),
        in_specs=[
            pl.BlockSpec((N_PAIRS, 2 * C * 64, tm), lambda i: (0, 0, i)),  # blocks (bf16)
            pl.BlockSpec((3, tm), lambda i: (0, i)),               # xd
            pl.BlockSpec((32, tm), lambda i: (0, i)),              # dropout mask 1
            pl.BlockSpec((8, tm), lambda i: (0, i)),               # dropout mask 2
            _resident((2 * 8 * 16, 2 * C * 64)),                   # paired conv weight (bf16)
            _resident((16, 1)),                                    # conv bias
            _resident((16, 3)), _resident((16, 1)),                # features W, b
            _resident((32, 448)), _resident((32, 1)),              # fc1 W, b
            _resident((32, 1)), _resident((32, 1)),                # bn1 scale, shift
            _resident((8, 32)), _resident((8, 1)),                 # fc2 W, b
            _resident((8, 1)), _resident((8, 1)),                  # bn2 scale, shift
            _resident((3, 8)), _resident((3, 1)),                  # fc3 W, b
        ],
        out_specs=pl.BlockSpec((3, tm), lambda i: (0, i)),
        scratch_shapes=[pltpu.VMEM((448, tm), jnp.float32)],
        compiler_params=pltpu.CompilerParams(
            dimension_semantics=("parallel",),
            vmem_limit_bytes=32 * 1024 * 1024),
    )(blocks, xd_t, m1_t, m2_t, wexp_pair, bc, wf, bf,
      w1k, params['fc1_b'].reshape(32, 1), s1v.reshape(32, 1), t1v.reshape(32, 1),
      params['fc2_w'], params['fc2_b'].reshape(8, 1), s2v.reshape(8, 1), t2v.reshape(8, 1),
      params['fc3_w'], params['fc3_b'].reshape(3, 1))

    return out_t[:, :N].T


# --------------------------------------------------------------------------
# Deterministic parameter init (shapes from SimpleNet3D.__init__, window=9)
# --------------------------------------------------------------------------
def init_params(key, C=1):
    ks = jax.random.split(key, 10)

    def u(k, shape, fan_in):
        bound = 1.0 / np.sqrt(fan_in)
        return jax.random.uniform(k, shape, jnp.float32, -bound, bound)

    return dict(
        feat_w=u(ks[0], (10, 3), 3),             feat_b=u(ks[1], (10,), 3),
        conv_w=u(ks[2], (16, C, 3, 3, 3), C * 27), conv_b=u(ks[3], (16,), C * 27),
        fc1_w=u(ks[4], (32, 16 * 27 + 10), 442), fc1_b=u(ks[5], (32,), 442),
        fc2_w=u(ks[6], (8, 32), 32),             fc2_b=u(ks[7], (8,), 32),
        fc3_w=u(ks[8], (3, 8), 8),               fc3_b=u(ks[9], (3,), 8),
        bn1_g=jnp.ones((32,), jnp.float32), bn1_b=jnp.zeros((32,), jnp.float32),
        bn1_m=jnp.zeros((32,), jnp.float32), bn1_v=jnp.ones((32,), jnp.float32),
        bn2_g=jnp.ones((8,), jnp.float32),  bn2_b=jnp.zeros((8,), jnp.float32),
        bn2_m=jnp.zeros((8,), jnp.float32), bn2_v=jnp.ones((8,), jnp.float32),
    )


# --------------------------------------------------------------------------
# Pure-JAX reference with exact PyTorch semantics (NCDHW conv, PT flatten order)
# --------------------------------------------------------------------------
def reference_forward(xd, xw, params, mask1, mask2):
    def lin(x, w, b): return x @ w.T + b
    def leaky(x): return jnp.where(x > 0, x, NEG_SLOPE * x)
    def bn(x, g, b, m, v): return (x - m) / jnp.sqrt(v + BN_EPS) * g + b

    y = jnp.maximum(lin(xd, params['feat_w'], params['feat_b']), 0.0)
    conv = jax.lax.conv_general_dilated(
        xw, params['conv_w'], window_strides=(1, 1, 1), padding='VALID',
        dimension_numbers=('NCDHW', 'OIDHW', 'NCDHW'))
    conv = conv + params['conv_b'].reshape(1, 16, 1, 1, 1)
    conv = leaky(conv)
    pooled = jax.lax.reduce_window(conv, -jnp.inf, jax.lax.max,
                                   (1, 1, 2, 2, 2), (1, 1, 2, 2, 2), 'VALID')
    x = jnp.concatenate([y, pooled.reshape(xw.shape[0], -1)], axis=1)
    x = leaky(lin(x, params['fc1_w'], params['fc1_b']))
    x = bn(x, params['bn1_g'], params['bn1_b'], params['bn1_m'], params['bn1_v'])
    x = x * mask1
    x = leaky(lin(x, params['fc2_w'], params['fc2_b']))
    x = bn(x, params['bn2_g'], params['bn2_b'], params['bn2_m'], params['bn2_v'])
    x = x * mask2
    return lin(x, params['fc3_w'], params['fc3_b'])


if __name__ == "__main__":
    key = jax.random.PRNGKey(0)
    k_p, k_xd, k_xw, k_m1, k_m2 = jax.random.split(key, 5)
    N, C = 2, 1
    params = init_params(k_p, C)
    xd = jax.random.normal(k_xd, (N, 3), jnp.float32)
    xw = jax.random.normal(k_xw, (N, C, 9, 9, 9), jnp.float32)

    # The conv path inside the kernel now runs in bf16 (f32 MXU accumulation).
    # For a tight numerical check we pre-round the conv inputs to bf16-
    # representable values so the kernel's bf16 cast is lossless; for arbitrary
    # f32 inputs expect ~1e-2 relative error from the bf16 conv path.
    xw = xw.astype(jnp.bfloat16).astype(jnp.float32)
    params['conv_w'] = params['conv_w'].astype(jnp.bfloat16).astype(jnp.float32)

    # TODO(synk): Dropout(p=0.1) runs in train mode in the PyTorch forward; it is
    # stochastic, so masks come from a deterministic JAX PRNG stream (not torch's
    # RNG), pre-scaled by 1/(1-p), and are applied inside the kernel.
    mask1 = (jax.random.bernoulli(k_m1, 1.0 - DROP_P, (N, 32)).astype(jnp.float32)
             / (1.0 - DROP_P))
    mask2 = (jax.random.bernoulli(k_m2, 1.0 - DROP_P, (N, 8)).astype(jnp.float32)
             / (1.0 - DROP_P))

    fwd = jax.jit(simplenet3d_forward)
    out = fwd(xd, xw, params, mask1, mask2)
    out = jax.block_until_ready(out)

    ref = reference_forward(xd, xw, params, mask1, mask2)
    assert out.shape == (N, 3), out.shape
    assert jnp.allclose(out, ref, rtol=1e-3, atol=1e-3), (out, ref)
    print("KERNEL_OK")
</pallas_src>

<mosaic_0001>
module attributes {stable_mosaic.version = 11 : i64} {
  func.func @fused_kernel(%arg0: i32, %arg1: memref<14x128x128xbf16, #tpu.memory_space<vmem>>, %arg2: memref<3x128xf32, #tpu.memory_space<vmem>>, %arg3: memref<32x128xf32, #tpu.memory_space<vmem>>, %arg4: memref<8x128xf32, #tpu.memory_space<vmem>>, %arg5: memref<256x128xbf16, #tpu.memory_space<vmem>>, %arg6: memref<16x1xf32, #tpu.memory_space<vmem>>, %arg7: memref<16x3xf32, #tpu.memory_space<vmem>>, %arg8: memref<16x1xf32, #tpu.memory_space<vmem>>, %arg9: memref<32x448xf32, #tpu.memory_space<vmem>>, %arg10: memref<32x1xf32, #tpu.memory_space<vmem>>, %arg11: memref<32x1xf32, #tpu.memory_space<vmem>>, %arg12: memref<32x1xf32, #tpu.memory_space<vmem>>, %arg13: memref<8x32xf32, #tpu.memory_space<vmem>>, %arg14: memref<8x1xf32, #tpu.memory_space<vmem>>, %arg15: memref<8x1xf32, #tpu.memory_space<vmem>>, %arg16: memref<8x1xf32, #tpu.memory_space<vmem>>, %arg17: memref<3x8xf32, #tpu.memory_space<vmem>>, %arg18: memref<3x1xf32, #tpu.memory_space<vmem>>, %arg19: memref<3x128xf32, #tpu.memory_space<vmem>>, %arg20: memref<448x128xf32, #tpu.memory_space<vmem>>) attributes {dimension_semantics = [#tpu.dimension_semantics<parallel>], iteration_bounds = array<i64: 1>, scalar_prefetch = 0 : i64, scratch_operands = 1 : i64, tpu.core_type = #tpu.core_type<tc>, window_params = [{transform_indices = @transform_0, window_bounds = array<i64: 14, 128, 128>}, {transform_indices = @transform_1, window_bounds = array<i64: 3, 128>}, {transform_indices = @transform_2, window_bounds = array<i64: 32, 128>}, {transform_indices = @transform_3, window_bounds = array<i64: 8, 128>}, {pipeline_mode = #tpu.pipeline_mode<synchronous>, transform_indices = @transform_4, window_bounds = array<i64: 256, 128>}, {pipeline_mode = #tpu.pipeline_mode<synchronous>, transform_indices = @transform_5, window_bounds = array<i64: 16, 1>}, {pipeline_mode = #tpu.pipeline_mode<synchronous>, transform_indices = @transform_6, window_bounds = array<i64: 16, 3>}, {pipeline_mode = #tpu.pipeline_mode<synchronous>, transform_indices = @transform_7, window_bounds = array<i64: 16, 1>}, {pipeline_mode = #tpu.pipeline_mode<synchronous>, transform_indices = @transform_8, window_bounds = array<i64: 32, 448>}, {pipeline_mode = #tpu.pipeline_mode<synchronous>, transform_indices = @transform_9, window_bounds = array<i64: 32, 1>}, {pipeline_mode = #tpu.pipeline_mode<synchronous>, transform_indices = @transform_10, window_bounds = array<i64: 32, 1>}, {pipeline_mode = #tpu.pipeline_mode<synchronous>, transform_indices = @transform_11, window_bounds = array<i64: 32, 1>}, {pipeline_mode = #tpu.pipeline_mode<synchronous>, transform_indices = @transform_12, window_bounds = array<i64: 8, 32>}, {pipeline_mode = #tpu.pipeline_mode<synchronous>, transform_indices = @transform_13, window_bounds = array<i64: 8, 1>}, {pipeline_mode = #tpu.pipeline_mode<synchronous>, transform_indices = @transform_14, window_bounds = array<i64: 8, 1>}, {pipeline_mode = #tpu.pipeline_mode<synchronous>, transform_indices = @transform_15, window_bounds = array<i64: 8, 1>}, {pipeline_mode = #tpu.pipeline_mode<synchronous>, transform_indices = @transform_16, window_bounds = array<i64: 3, 8>}, {pipeline_mode = #tpu.pipeline_mode<synchronous>, transform_indices = @transform_17, window_bounds = array<i64: 3, 1>}, {transform_indices = @transform_18, window_bounds = array<i64: 3, 128>}]} {
    %c0 = arith.constant 0 : index
    %c0_0 = arith.constant 0 : index
    %0 = vector.load %arg5[%c0, %c0_0] : memref<256x128xbf16, #tpu.memory_space<vmem>>, vector<256x128xbf16>
    %c0_1 = arith.constant 0 : index
    %c0_2 = arith.constant 0 : index
    %1 = vector.load %arg6[%c0_1, %c0_2] : memref<16x1xf32, #tpu.memory_space<vmem>>, vector<16x1xf32>
    %2 = vector.shape_cast %1 : vector<16x1xf32> to vector<1x16x1xf32>
    %c0_3 = arith.constant 0 : index
    %c0_4 = arith.constant 0 : index
    %c0_5 = arith.constant 0 : index
    %3 = vector.load %arg1[%c0_3, %c0_4, %c0_5] : memref<14x128x128xbf16, #tpu.memory_space<vmem>>, vector<1x128x128xbf16>
    %4 = vector.shape_cast %3 : vector<1x128x128xbf16> to vector<128x128xbf16>
    %cst = arith.constant dense<0.000000e+00> : vector<256x128xf32>
    %5 = tpu.matmul %0, %4, %cst {dimension_numbers = #tpu.dot_dimension_numbers<[1], [0], [0], [1], [0, 0, 1, 1], [], []>} : vector<256x128xbf16>, vector<128x128xbf16>, vector<256x128xf32> -> vector<256x128xf32>
    %6 = vector.shape_cast %5 : vector<256x128xf32> to vector<2x8x16x128xf32>
    %cst_6 = arith.constant dense<0xFF800000> : vector<2x16x128xf32>
    %7 = vector.multi_reduction <maximumf>, %6, %cst_6 [1] : vector<2x8x16x128xf32> to vector<2x16x128xf32>
    %8 = vector.broadcast %2 : vector<1x16x1xf32> to vector<2x16x128xf32>
    %9 = arith.addf %7, %8 : vector<2x16x128xf32>
    %cst_7 = arith.constant 0.000000e+00 : f32
    %10 = vector.broadcast %cst_7 : f32 to vector<2x16x128xf32>
    %11 = arith.cmpf ogt, %9, %10 : vector<2x16x128xf32>
    %cst_8 = arith.constant 0.00999999977 : f32
    %12 = vector.broadcast %cst_8 : f32 to vector<2x16x128xf32>
    %13 = arith.mulf %12, %9 : vector<2x16x128xf32>
    %14 = arith.select %11, %9, %13 : vector<2x16x128xi1>, vector<2x16x128xf32>
    %15 = vector.shape_cast %14 : vector<2x16x128xf32> to vector<32x128xf32>
    %c0_9 = arith.constant 0 : index
    %c0_10 = arith.constant 0 : index
    %16 = vector.load %arg20[%c0_9, %c0_10] : memref<448x128xf32, #tpu.memory_space<vmem>>, vector<32x128xf32>
    tpu.vector_store %arg20[%c0_9, %c0_10], %15 {strides = array<i32>} : memref<448x128xf32, #tpu.memory_space<vmem>>, vector<32x128xf32>,
    %c1 = arith.constant 1 : index
    %c0_11 = arith.constant 0 : index
    %c0_12 = arith.constant 0 : index
    %17 = vector.load %arg1[%c1, %c0_11, %c0_12] : memref<14x128x128xbf16, #tpu.memory_space<vmem>>, vector<1x128x128xbf16>
    %18 = vector.shape_cast %17 : vector<1x128x128xbf16> to vector<128x128xbf16>
    %cst_13 = arith.constant dense<0.000000e+00> : vector<256x128xf32>
    %19 = tpu.matmul %0, %18, %cst_13 {dimension_numbers = #tpu.dot_dimension_numbers<[1], [0], [0], [1], [0, 0, 1, 1], [], []>} : vector<256x128xbf16>, vector<128x128xbf16>, vector<256x128xf32> -> vector<256x128xf32>
    %20 = vector.shape_cast %19 : vector<256x128xf32> to vector<2x8x16x128xf32>
    %cst_14 = arith.constant dense<0xFF800000> : vector<2x16x128xf32>
    %21 = vector.multi_reduction <maximumf>, %20, %cst_14 [1] : vector<2x8x16x128xf32> to vector<2x16x128xf32>
    %22 = vector.broadcast %2 : vector<1x16x1xf32> to vector<2x16x128xf32>
    %23 = arith.addf %21, %22 : vector<2x16x128xf32>
    %cst_15 = arith.constant 0.000000e+00 : f32
    %24 = vector.broadcast %cst_15 : f32 to vector<2x16x128xf32>
    %25 = arith.cmpf ogt, %23, %24 : vector<2x16x128xf32>
    %cst_16 = arith.constant 0.00999999977 : f32
    %26 = vector.broadcast %cst_16 : f32 to vector<2x16x128xf32>
    %27 = arith.mulf %26, %23 : vector<2x16x128xf32>
    %28 = arith.select %25, %23, %27 : vector<2x16x128xi1>, vector<2x16x128xf32>
    %29 = vector.shape_cast %28 : vector<2x16x128xf32> to vector<32x128xf32>
    %c32 = arith.constant 32 : index
    %c0_17 = arith.constant 0 : index
    %30 = vector.load %arg20[%c32, %c0_17] : memref<448x128xf32, #tpu.memory_space<vmem>>, vector<32x128xf32>
    tpu.vector_store %arg20[%c32, %c0_17], %29 {strides = array<i32>} : memref<448x128xf32, #tpu.memory_space<vmem>>, vector<32x128xf32>,
    %c2 = arith.constant 2 : index
    %c0_18 = arith.constant 0 : index
    %c0_19 = arith.constant 0 : index
    %31 = vector.load %arg1[%c2, %c0_18, %c0_19] : memref<14x128x128xbf16, #tpu.memory_space<vmem>>, vector<1x128x128xbf16>
    %32 = vector.shape_cast %31 : vector<1x128x128xbf16> to vector<128x128xbf16>
    %cst_20 = arith.constant dense<0.000000e+00> : vector<256x128xf32>
    %33 = tpu.matmul %0, %32, %cst_20 {dimension_numbers = #tpu.dot_dimension_numbers<[1], [0], [0], [1], [0, 0, 1, 1], [], []>} : vector<256x128xbf16>, vector<128x128xbf16>, vector<256x128xf32> -> vector<256x128xf32>
    %34 = vector.shape_cast %33 : vector<256x128xf32> to vector<2x8x16x128xf32>
    %cst_21 = arith.constant dense<0xFF800000> : vector<2x16x128xf32>
    %35 = vector.multi_reduction <maximumf>, %34, %cst_21 [1] : vector<2x8x16x128xf32> to vector<2x16x128xf32>
    %36 = vector.broadcast %2 : vector<1x16x1xf32> to vector<2x16x128xf32>
    %37 = arith.addf %35, %36 : vector<2x16x128xf32>
    %cst_22 = arith.constant 0.000000e+00 : f32
    %38 = vector.broadcast %cst_22 : f32 to vector<2x16x128xf32>
    %39 = arith.cmpf ogt, %37, %38 : vector<2x16x128xf32>
    %cst_23 = arith.constant 0.00999999977 : f32
    %40 = vector.broadcast %cst_23 : f32 to vector<2x16x128xf32>
    %41 = arith.mulf %40, %37 : vector<2x16x128xf32>
    %42 = arith.select %39, %37, %41 : vector<2x16x128xi1>, vector<2x16x128xf32>
    %43 = vector.shape_cast %42 : vector<2x16x128xf32> to vector<32x128xf32>
    %c64 = arith.constant 64 : index
    %c0_24 = arith.constant 0 : index
    %44 = vector.load %arg20[%c64, %c0_24] : memref<448x128xf32, #tpu.memory_space<vmem>>, vector<32x128xf32>
    tpu.vector_store %arg20[%c64, %c0_24], %43 {strides = array<i32>} : memref<448x128xf32, #tpu.memory_space<vmem>>, vector<32x128xf32>,
    %c3 = arith.constant 3 : index
    %c0_25 = arith.constant 0 : index
    %c0_26 = arith.constant 0 : index
    %45 = vector.load %arg1[%c3, %c0_25, %c0_26] : memref<14x128x128xbf16, #tpu.memory_space<vmem>>, vector<1x128x128xbf16>
    %46 = vector.shape_cast %45 : vector<1x128x128xbf16> to vector<128x128xbf16>
    %cst_27 = arith.constant dense<0.000000e+00> : vector<256x128xf32>
    %47 = tpu.matmul %0, %46, %cst_27 {dimension_numbers = #tpu.dot_dimension_numbers<[1], [0], [0], [1], [0, 0, 1, 1], [], []>} : vector<256x128xbf16>, vector<128x128xbf16>, vector<256x128xf32> -> vector<256x128xf32>
    %48 = vector.shape_cast %47 : vector<256x128xf32> to vector<2x8x16x128xf32>
    %cst_28 = arith.constant dense<0xFF800000> : vector<2x16x128xf32>
    %49 = vector.multi_reduction <maximumf>, %48, %cst_28 [1] : vector<2x8x16x128xf32> to vector<2x16x128xf32>
    %50 = vector.broadcast %2 : vector<1x16x1xf32> to vector<2x16x128xf32>
    %51 = arith.addf %49, %50 : vector<2x16x128xf32>
    %cst_29 = arith.constant 0.000000e+00 : f32
    %52 = vector.broadcast %cst_29 : f32 to vector<2x16x128xf32>
    %53 = arith.cmpf ogt, %51, %52 : vector<2x16x128xf32>
    %cst_30 = arith.constant 0.00999999977 : f32
    %54 = vector.broadcast %cst_30 : f32 to vector<2x16x128xf32>
    %55 = arith.mulf %54, %51 : vector<2x16x128xf32>
    %56 = arith.select %53, %51, %55 : vector<2x16x128xi1>, vector<2x16x128xf32>
    %57 = vector.shape_cast %56 : vector<2x16x128xf32> to vector<32x128xf32>
    %c96 = arith.constant 96 : index
    %c0_31 = arith.constant 0 : index
    %58 = vector.load %arg20[%c96, %c0_31] : memref<448x128xf32, #tpu.memory_space<vmem>>, vector<32x128xf32>
    tpu.vector_store %arg20[%c96, %c0_31], %57 {strides = array<i32>} : memref<448x128xf32, #tpu.memory_space<vmem>>, vector<32x128xf32>,
    %c4 = arith.constant 4 : index
    %c0_32 = arith.constant 0 : index
    %c0_33 = arith.constant 0 : index
    %59 = vector.load %arg1[%c4, %c0_32, %c0_33] : memref<14x128x128xbf16, #tpu.memory_space<vmem>>, vector<1x128x128xbf16>
    %60 = vector.shape_cast %59 : vector<1x128x128xbf16> to vector<128x128xbf16>
    %cst_34 = arith.constant dense<0.000000e+00> : vector<256x128xf32>
    %61 = tpu.matmul %0, %60, %cst_34 {dimension_numbers = #tpu.dot_dimension_numbers<[1], [0], [0], [1], [0, 0, 1, 1], [], []>} : vector<256x128xbf16>, vector<128x128xbf16>, vector<256x128xf32> -> vector<256x128xf32>
    %62 = vector.shape_cast %61 : vector<256x128xf32> to vector<2x8x16x128xf32>
    %cst_35 = arith.constant dense<0xFF800000> : vector<2x16x128xf32>
    %63 = vector.multi_reduction <maximumf>, %62, %cst_35 [1] : vector<2x8x16x128xf32> to vector<2x16x128xf32>
    %64 = vector.broadcast %2 : vector<1x16x1xf32> to vector<2x16x128xf32>
    %65 = arith.addf %63, %64 : vector<2x16x128xf32>
    %cst_36 = arith.constant 0.000000e+00 : f32
    %66 = vector.broadcast %cst_36 : f32 to vector<2x16x128xf32>
    %67 = arith.cmpf ogt, %65, %66 : vector<2x16x128xf32>
    %cst_37 = arith.constant 0.00999999977 : f32
    %68 = vector.broadcast %cst_37 : f32 to vector<2x16x128xf32>
    %69 = arith.mulf %68, %65 : vector<2x16x128xf32>
    %70 = arith.select %67, %65, %69 : vector<2x16x128xi1>, vector<2x16x128xf32>
    %71 = vector.shape_cast %70 : vector<2x16x128xf32> to vector<32x128xf32>
    %c128 = arith.constant 128 : index
    %c0_38 = arith.constant 0 : index
    %72 = vector.load %arg20[%c128, %c0_38] : memref<448x128xf32, #tpu.memory_space<vmem>>, vector<32x128xf32>
    tpu.vector_store %arg20[%c128, %c0_38], %71 {strides = array<i32>} : memref<448x128xf32, #tpu.memory_space<vmem>>, vector<32x128xf32>,
    %c5 = arith.constant 5 : index
    %c0_39 = arith.constant 0 : index
    %c0_40 = arith.constant 0 : index
    %73 = vector.load %arg1[%c5, %c0_39, %c0_40] : memref<14x128x128xbf16, #tpu.memory_space<vmem>>, vector<1x128x128xbf16>
    %74 = vector.shape_cast %73 : vector<1x128x128xbf16> to vector<128x128xbf16>
    %cst_41 = arith.constant dense<0.000000e+00> : vector<256x128xf32>
    %75 = tpu.matmul %0, %74, %cst_41 {dimension_numbers = #tpu.dot_dimension_numbers<[1], [0], [0], [1], [0, 0, 1, 1], [], []>} : vector<256x128xbf16>, vector<128x128xbf16>, vector<256x128xf32> -> vector<256x128xf32>
    %76 = vector.shape_cast %75 : vector<256x128xf32> to vector<2x8x16x128xf32>
    %cst_42 = arith.constant dense<0xFF800000> : vector<2x16x128xf32>
    %77 = vector.multi_reduction <maximumf>, %76, %cst_42 [1] : vector<2x8x16x128xf32> to vector<2x16x128xf32>
    %78 = vector.broadcast %2 : vector<1x16x1xf32> to vector<2x16x128xf32>
    %79 = arith.addf %77, %78 : vector<2x16x128xf32>
    %cst_43 = arith.constant 0.000000e+00 : f32
    %80 = vector.broadcast %cst_43 : f32 to vector<2x16x128xf32>
    %81 = arith.cmpf ogt, %79, %80 : vector<2x16x128xf32>
    %cst_44 = arith.constant 0.00999999977 : f32
    %82 = vector.broadcast %cst_44 : f32 to vector<2x16x128xf32>
    %83 = arith.mulf %82, %79 : vector<2x16x128xf32>
    %84 = arith.select %81, %79, %83 : vector<2x16x128xi1>, vector<2x16x128xf32>
    %85 = vector.shape_cast %84 : vector<2x16x128xf32> to vector<32x128xf32>
    %c160 = arith.constant 160 : index
    %c0_45 = arith.constant 0 : index
    %86 = vector.load %arg20[%c160, %c0_45] : memref<448x128xf32, #tpu.memory_space<vmem>>, vector<32x128xf32>
    tpu.vector_store %arg20[%c160, %c0_45], %85 {strides = array<i32>} : memref<448x128xf32, #tpu.memory_space<vmem>>, vector<32x128xf32>,
    %c6 = arith.constant 6 : index
    %c0_46 = arith.constant 0 : index
    %c0_47 = arith.constant 0 : index
    %87 = vector.load %arg1[%c6, %c0_46, %c0_47] : memref<14x128x128xbf16, #tpu.memory_space<vmem>>, vector<1x128x128xbf16>
    %88 = vector.shape_cast %87 : vector<1x128x128xbf16> to vector<128x128xbf16>
    %cst_48 = arith.constant dense<0.000000e+00> : vector<256x128xf32>
    %89 = tpu.matmul %0, %88, %cst_48 {dimension_numbers = #tpu.dot_dimension_numbers<[1], [0], [0], [1], [0, 0, 1, 1], [], []>} : vector<256x128xbf16>, vector<128x128xbf16>, vector<256x128xf32> -> vector<256x128xf32>
    %90 = vector.shape_cast %89 : vector<256x128xf32> to vector<2x8x16x128xf32>
    %cst_49 = arith.constant dense<0xFF800000> : vector<2x16x128xf32>
    %91 = vector.multi_reduction <maximumf>, %90, %cst_49 [1] : vector<2x8x16x128xf32> to vector<2x16x128xf32>
    %92 = vector.broadcast %2 : vector<1x16x1xf32> to vector<2x16x128xf32>
    %93 = arith.addf %91, %92 : vector<2x16x128xf32>
    %cst_50 = arith.constant 0.000000e+00 : f32
    %94 = vector.broadcast %cst_50 : f32 to vector<2x16x128xf32>
    %95 = arith.cmpf ogt, %93, %94 : vector<2x16x128xf32>
    %cst_51 = arith.constant 0.00999999977 : f32
    %96 = vector.broadcast %cst_51 : f32 to vector<2x16x128xf32>
    %97 = arith.mulf %96, %93 : vector<2x16x128xf32>
    %98 = arith.select %95, %93, %97 : vector<2x16x128xi1>, vector<2x16x128xf32>
    %99 = vector.shape_cast %98 : vector<2x16x128xf32> to vector<32x128xf32>
    %c192 = arith.constant 192 : index
    %c0_52 = arith.constant 0 : index
    %100 = vector.load %arg20[%c192, %c0_52] : memref<448x128xf32, #tpu.memory_space<vmem>>, vector<32x128xf32>
    tpu.vector_store %arg20[%c192, %c0_52], %99 {strides = array<i32>} : memref<448x128xf32, #tpu.memory_space<vmem>>, vector<32x128xf32>,
    %c7 = arith.constant 7 : index
    %c0_53 = arith.constant 0 : index
    %c0_54 = arith.constant 0 : index
    %101 = vector.load %arg1[%c7, %c0_53, %c0_54] : memref<14x128x128xbf16, #tpu.memory_space<vmem>>, vector<1x128x128xbf16>
    %102 = vector.shape_cast %101 : vector<1x128x128xbf16> to vector<128x128xbf16>
    %cst_55 = arith.constant dense<0.000000e+00> : vector<256x128xf32>
    %103 = tpu.matmul %0, %102, %cst_55 {dimension_numbers = #tpu.dot_dimension_numbers<[1], [0], [0], [1], [0, 0, 1, 1], [], []>} : vector<256x128xbf16>, vector<128x128xbf16>, vector<256x128xf32> -> vector<256x128xf32>
    %104 = vector.shape_cast %103 : vector<256x128xf32> to vector<2x8x16x128xf32>
    %cst_56 = arith.constant dense<0xFF800000> : vector<2x16x128xf32>
    %105 = vector.multi_reduction <maximumf>, %104, %cst_56 [1] : vector<2x8x16x128xf32> to vector<2x16x128xf32>
    %106 = vector.broadcast %2 : vector<1x16x1xf32> to vector<2x16x128xf32>
    %107 = arith.addf %105, %106 : vector<2x16x128xf32>
    %cst_57 = arith.constant 0.000000e+00 : f32
    %108 = vector.broadcast %cst_57 : f32 to vector<2x16x128xf32>
    %109 = arith.cmpf ogt, %107, %108 : vector<2x16x128xf32>
    %cst_58 = arith.constant 0.00999999977 : f32
    %110 = vector.broadcast %cst_58 : f32 to vector<2x16x128xf32>
    %111 = arith.mulf %110, %107 : vector<2x16x128xf32>
    %112 = arith.select %109, %107, %111 : vector<2x16x128xi1>, vector<2x16x128xf32>
    %113 = vector.shape_cast %112 : vector<2x16x128xf32> to vector<32x128xf32>
    %c224 = arith.constant 224 : index
    %c0_59 = arith.constant 0 : index
    %114 = vector.load %arg20[%c224, %c0_59] : memref<448x128xf32, #tpu.memory_space<vmem>>, vector<32x128xf32>
    tpu.vector_store %arg20[%c224, %c0_59], %113 {strides = array<i32>} : memref<448x128xf32, #tpu.memory_space<vmem>>, vector<32x128xf32>,
    %c8 = arith.constant 8 : index
    %c0_60 = arith.constant 0 : index
    %c0_61 = arith.constant 0 : index
    %115 = vector.load %arg1[%c8, %c0_60, %c0_61] : memref<14x128x128xbf16, #tpu.memory_space<vmem>>, vector<1x128x128xbf16>
    %116 = vector.shape_cast %115 : vector<1x128x128xbf16> to vector<128x128xbf16>
    %cst_62 = arith.constant dense<0.000000e+00> : vector<256x128xf32>
    %117 = tpu.matmul %0, %116, %cst_62 {dimension_numbers = #tpu.dot_dimension_numbers<[1], [0], [0], [1], [0, 0, 1, 1], [], []>} : vector<256x128xbf16>, vector<128x128xbf16>, vector<256x128xf32> -> vector<256x128xf32>
    %118 = vector.shape_cast %117 : vector<256x128xf32> to vector<2x8x16x128xf32>
    %cst_63 = arith.constant dense<0xFF800000> : vector<2x16x128xf32>
    %119 = vector.multi_reduction <maximumf>, %118, %cst_63 [1] : vector<2x8x16x128xf32> to vector<2x16x128xf32>
    %120 = vector.broadcast %2 : vector<1x16x1xf32> to vector<2x16x128xf32>
    %121 = arith.addf %119, %120 : vector<2x16x128xf32>
    %cst_64 = arith.constant 0.000000e+00 : f32
    %122 = vector.broadcast %cst_64 : f32 to vector<2x16x128xf32>
    %123 = arith.cmpf ogt, %121, %122 : vector<2x16x128xf32>
    %cst_65 = arith.constant 0.00999999977 : f32
    %124 = vector.broadcast %cst_65 : f32 to vector<2x16x128xf32>
    %125 = arith.mulf %124, %121 : vector<2x16x128xf32>
    %126 = arith.select %123, %121, %125 : vector<2x16x128xi1>, vector<2x16x128xf32>
    %127 = vector.shape_cast %126 : vector<2x16x128xf32> to vector<32x128xf32>
    %c256 = arith.constant 256 : index
    %c0_66 = arith.constant 0 : index
    %128 = vector.load %arg20[%c256, %c0_66] : memref<448x128xf32, #tpu.memory_space<vmem>>, vector<32x128xf32>
    tpu.vector_store %arg20[%c256, %c0_66], %127 {strides = array<i32>} : memref<448x128xf32, #tpu.memory_space<vmem>>, vector<32x128xf32>,
    %c9 = arith.constant 9 : index
    %c0_67 = arith.constant 0 : index
    %c0_68 = arith.constant 0 : index
    %129 = vector.load %arg1[%c9, %c0_67, %c0_68] : memref<14x128x128xbf16, #tpu.memory_space<vmem>>, vector<1x128x128xbf16>
    %130 = vector.shape_cast %129 : vector<1x128x128xbf16> to vector<128x128xbf16>
    %cst_69 = arith.constant dense<0.000000e+00> : vector<256x128xf32>
    %131 = tpu.matmul %0, %130, %cst_69 {dimension_numbers = #tpu.dot_dimension_numbers<[1], [0], [0], [1], [0, 0, 1, 1], [], []>} : vector<256x128xbf16>, vector<128x128xbf16>, vector<256x128xf32> -> vector<256x128xf32>
    %132 = vector.shape_cast %131 : vector<256x128xf32> to vector<2x8x16x128xf32>
    %cst_70 = arith.constant dense<0xFF800000> : vector<2x16x128xf32>
    %133 = vector.multi_reduction <maximumf>, %132, %cst_70 [1] : vector<2x8x16x128xf32> to vector<2x16x128xf32>
    %134 = vector.broadcast %2 : vector<1x16x1xf32> to vector<2x16x128xf32>
    %135 = arith.addf %133, %134 : vector<2x16x128xf32>
    %cst_71 = arith.constant 0.000000e+00 : f32
    %136 = vector.broadcast %cst_71 : f32 to vector<2x16x128xf32>
    %137 = arith.cmpf ogt, %135, %136 : vector<2x16x128xf32>
    %cst_72 = arith.constant 0.00999999977 : f32
    %138 = vector.broadcast %cst_72 : f32 to vector<2x16x128xf32>
    %139 = arith.mulf %138, %135 : vector<2x16x128xf32>
    %140 = arith.select %137, %135, %139 : vector<2x16x128xi1>, vector<2x16x128xf32>
    %141 = vector.shape_cast %140 : vector<2x16x128xf32> to vector<32x128xf32>
    %c288 = arith.constant 288 : index
    %c0_73 = arith.constant 0 : index
    %142 = vector.load %arg20[%c288, %c0_73] : memref<448x128xf32, #tpu.memory_space<vmem>>, vector<32x128xf32>
    tpu.vector_store %arg20[%c288, %c0_73], %141 {strides = array<i32>} : memref<448x128xf32, #tpu.memory_space<vmem>>, vector<32x128xf32>,
    %c10 = arith.constant 10 : index
    %c0_74 = arith.constant 0 : index
    %c0_75 = arith.constant 0 : index
    %143 = vector.load %arg1[%c10, %c0_74, %c0_75] : memref<14x128x128xbf16, #tpu.memory_space<vmem>>, vector<1x128x128xbf16>
    %144 = vector.shape_cast %143 : vector<1x128x128xbf16> to vector<128x128xbf16>
    %cst_76 = arith.constant dense<0.000000e+00> : vector<256x128xf32>
    %145 = tpu.matmul %0, %144, %cst_76 {dimension_numbers = #tpu.dot_dimension_numbers<[1], [0], [0], [1], [0, 0, 1, 1], [], []>} : vector<256x128xbf16>, vector<128x128xbf16>, vector<256x128xf32> -> vector<256x128xf32>
    %146 = vector.shape_cast %145 : vector<256x128xf32> to vector<2x8x16x128xf32>
    %cst_77 = arith.constant dense<0xFF800000> : vector<2x16x128xf32>
    %147 = vector.multi_reduction <maximumf>, %146, %cst_77 [1] : vector<2x8x16x128xf32> to vector<2x16x128xf32>
    %148 = vector.broadcast %2 : vector<1x16x1xf32> to vector<2x16x128xf32>
    %149 = arith.addf %147, %148 : vector<2x16x128xf32>
    %cst_78 = arith.constant 0.000000e+00 : f32
    %150 = vector.broadcast %cst_78 : f32 to vector<2x16x128xf32>
    %151 = arith.cmpf ogt, %149, %150 : vector<2x16x128xf32>
    %cst_79 = arith.constant 0.00999999977 : f32
    %152 = vector.broadcast %cst_79 : f32 to vector<2x16x128xf32>
    %153 = arith.mulf %152, %149 : vector<2x16x128xf32>
    %154 = arith.select %151, %149, %153 : vector<2x16x128xi1>, vector<2x16x128xf32>
    %155 = vector.shape_cast %154 : vector<2x16x128xf32> to vector<32x128xf32>
    %c320 = arith.constant 320 : index
    %c0_80 = arith.constant 0 : index
    %156 = vector.load %arg20[%c320, %c0_80] : memref<448x128xf32, #tpu.memory_space<vmem>>, vector<32x128xf32>
    tpu.vector_store %arg20[%c320, %c0_80], %155 {strides = array<i32>} : memref<448x128xf32, #tpu.memory_space<vmem>>, vector<32x128xf32>,
    %c11 = arith.constant 11 : index
    %c0_81 = arith.constant 0 : index
    %c0_82 = arith.constant 0 : index
    %157 = vector.load %arg1[%c11, %c0_81, %c0_82] : memref<14x128x128xbf16, #tpu.memory_space<vmem>>, vector<1x128x128xbf16>
    %158 = vector.shape_cast %157 : vector<1x128x128xbf16> to vector<128x128xbf16>
    %cst_83 = arith.constant dense<0.000000e+00> : vector<256x128xf32>
    %159 = tpu.matmul %0, %158, %cst_83 {dimension_numbers = #tpu.dot_dimension_numbers<[1], [0], [0], [1], [0, 0, 1, 1], [], []>} : vector<256x128xbf16>, vector<128x128xbf16>, vector<256x128xf32> -> vector<256x128xf32>
    %160 = vector.shape_cast %159 : vector<256x128xf32> to vector<2x8x16x128xf32>
    %cst_84 = arith.constant dense<0xFF800000> : vector<2x16x128xf32>
    %161 = vector.multi_reduction <maximumf>, %160, %cst_84 [1] : vector<2x8x16x128xf32> to vector<2x16x128xf32>
    %162 = vector.broadcast %2 : vector<1x16x1xf32> to vector<2x16x128xf32>
    %163 = arith.addf %161, %162 : vector<2x16x128xf32>
    %cst_85 = arith.constant 0.000000e+00 : f32
    %164 = vector.broadcast %cst_85 : f32 to vector<2x16x128xf32>
    %165 = arith.cmpf ogt, %163, %164 : vector<2x16x128xf32>
    %cst_86 = arith.constant 0.00999999977 : f32
    %166 = vector.broadcast %cst_86 : f32 to vector<2x16x128xf32>
    %167 = arith.mulf %166, %163 : vector<2x16x128xf32>
    %168 = arith.select %165, %163, %167 : vector<2x16x128xi1>, vector<2x16x128xf32>
    %169 = vector.shape_cast %168 : vector<2x16x128xf32> to vector<32x128xf32>
    %c352 = arith.constant 352 : index
    %c0_87 = arith.constant 0 : index
    %170 = vector.load %arg20[%c352, %c0_87] : memref<448x128xf32, #tpu.memory_space<vmem>>, vector<32x128xf32>
    tpu.vector_store %arg20[%c352, %c0_87], %169 {strides = array<i32>} : memref<448x128xf32, #tpu.memory_space<vmem>>, vector<32x128xf32>,
    %c12 = arith.constant 12 : index
    %c0_88 = arith.constant 0 : index
    %c0_89 = arith.constant 0 : index
    %171 = vector.load %arg1[%c12, %c0_88, %c0_89] : memref<14x128x128xbf16, #tpu.memory_space<vmem>>, vector<1x128x128xbf16>
    %172 = vector.shape_cast %171 : vector<1x128x128xbf16> to vector<128x128xbf16>
    %cst_90 = arith.constant dense<0.000000e+00> : vector<256x128xf32>
    %173 = tpu.matmul %0, %172, %cst_90 {dimension_numbers = #tpu.dot_dimension_numbers<[1], [0], [0], [1], [0, 0, 1, 1], [], []>} : vector<256x128xbf16>, vector<128x128xbf16>, vector<256x128xf32> -> vector<256x128xf32>
    %174 = vector.shape_cast %173 : vector<256x128xf32> to vector<2x8x16x128xf32>
    %cst_91 = arith.constant dense<0xFF800000> : vector<2x16x128xf32>
    %175 = vector.multi_reduction <maximumf>, %174, %cst_91 [1] : vector<2x8x16x128xf32> to vector<2x16x128xf32>
    %176 = vector.broadcast %2 : vector<1x16x1xf32> to vector<2x16x128xf32>
    %177 = arith.addf %175, %176 : vector<2x16x128xf32>
    %cst_92 = arith.constant 0.000000e+00 : f32
    %178 = vector.broadcast %cst_92 : f32 to vector<2x16x128xf32>
    %179 = arith.cmpf ogt, %177, %178 : vector<2x16x128xf32>
    %cst_93 = arith.constant 0.00999999977 : f32
    %180 = vector.broadcast %cst_93 : f32 to vector<2x16x128xf32>
    %181 = arith.mulf %180, %177 : vector<2x16x128xf32>
    %182 = arith.select %179, %177, %181 : vector<2x16x128xi1>, vector<2x16x128xf32>
    %183 = vector.shape_cast %182 : vector<2x16x128xf32> to vector<32x128xf32>
    %c384 = arith.constant 384 : index
    %c0_94 = arith.constant 0 : index
    %184 = vector.load %arg20[%c384, %c0_94] : memref<448x128xf32, #tpu.memory_space<vmem>>, vector<32x128xf32>
    tpu.vector_store %arg20[%c384, %c0_94], %183 {strides = array<i32>} : memref<448x128xf32, #tpu.memory_space<vmem>>, vector<32x128xf32>,
    %c13 = arith.constant 13 : index
    %c0_95 = arith.constant 0 : index
    %c0_96 = arith.constant 0 : index
    %185 = vector.load %arg1[%c13, %c0_95, %c0_96] : memref<14x128x128xbf16, #tpu.memory_space<vmem>>, vector<1x128x128xbf16>
    %186 = vector.shape_cast %185 : vector<1x128x128xbf16> to vector<128x128xbf16>
    %cst_97 = arith.constant dense<0.000000e+00> : vector<256x128xf32>
    %187 = tpu.matmul %0, %186, %cst_97 {dimension_numbers = #tpu.dot_dimension_numbers<[1], [0], [0], [1], [0, 0, 1, 1], [], []>} : vector<256x128xbf16>, vector<128x128xbf16>, vector<256x128xf32> -> vector<256x128xf32>
    %188 = vector.shape_cast %187 : vector<256x128xf32> to vector<2x8x16x128xf32>
    %cst_98 = arith.constant dense<0xFF800000> : vector<2x16x128xf32>
    %189 = vector.multi_reduction <maximumf>, %188, %cst_98 [1] : vector<2x8x16x128xf32> to vector<2x16x128xf32>
    %190 = vector.broadcast %2 : vector<1x16x1xf32> to vector<2x16x128xf32>
    %191 = arith.addf %189, %190 : vector<2x16x128xf32>
    %cst_99 = arith.constant 0.000000e+00 : f32
    %192 = vector.broadcast %cst_99 : f32 to vector<2x16x128xf32>
    %193 = arith.cmpf ogt, %191, %192 : vector<2x16x128xf32>
    %cst_100 = arith.constant 0.00999999977 : f32
    %194 = vector.broadcast %cst_100 : f32 to vector<2x16x128xf32>
    %195 = arith.mulf %194, %191 : vector<2x16x128xf32>
    %196 = arith.select %193, %191, %195 : vector<2x16x128xi1>, vector<2x16x128xf32>
    %197 = vector.shape_cast %196 : vector<2x16x128xf32> to vector<32x128xf32>
    %198 = vector.extract_strided_slice %197 {offsets = [0, 0], sizes = [16, 128], strides = [1, 1]} : vector<32x128xf32> to vector<16x128xf32>
    %c416 = arith.constant 416 : index
    %c0_101 = arith.constant 0 : index
    %199 = vector.load %arg20[%c416, %c0_101] : memref<448x128xf32, #tpu.memory_space<vmem>>, vector<16x128xf32>
    tpu.vector_store %arg20[%c416, %c0_101], %198 {strides = array<i32>} : memref<448x128xf32, #tpu.memory_space<vmem>>, vector<16x128xf32>,
    %c0_102 = arith.constant 0 : index
    %c0_103 = arith.constant 0 : index
    %200 = vector.load %arg7[%c0_102, %c0_103] : memref<16x3xf32, #tpu.memory_space<vmem>>, vector<16x3xf32>
    %c0_104 = arith.constant 0 : index
    %c0_105 = arith.constant 0 : index
    %201 = vector.load %arg2[%c0_104, %c0_105] : memref<3x128xf32, #tpu.memory_space<vmem>>, vector<3x128xf32>
    %cst_106 = arith.constant dense<0.000000e+00> : vector<16x128xf32>
    %202 = tpu.matmul %200, %201, %cst_106 {dimension_numbers = #tpu.dot_dimension_numbers<[1], [0], [0], [1], [0, 0, 1, 1], [], []>} : vector<16x3xf32>, vector<3x128xf32>, vector<16x128xf32> -> vector<16x128xf32>
    %c0_107 = arith.constant 0 : index
    %c0_108 = arith.constant 0 : index
    %203 = vector.load %arg8[%c0_107, %c0_108] : memref<16x1xf32, #tpu.memory_space<vmem>>, vector<16x1xf32>
    %204 = vector.broadcast %203 : vector<16x1xf32> to vector<16x128xf32>
    %205 = arith.addf %202, %204 : vector<16x128xf32>
    %cst_109 = arith.constant 0.000000e+00 : f32
    %206 = vector.broadcast %cst_109 : f32 to vector<16x128xf32>
    %207 = arith.maximumf %205, %206 : vector<16x128xf32>
    %c432 = arith.constant 432 : index
    %c0_110 = arith.constant 0 : index
    %208 = vector.load %arg20[%c432, %c0_110] : memref<448x128xf32, #tpu.memory_space<vmem>>, vector<16x128xf32>
    tpu.vector_store %arg20[%c432, %c0_110], %207 {strides = array<i32>} : memref<448x128xf32, #tpu.memory_space<vmem>>, vector<16x128xf32>,
    %c0_111 = arith.constant 0 : index
    %c0_112 = arith.constant 0 : index
    %209 = vector.load %arg9[%c0_111, %c0_112] : memref<32x448xf32, #tpu.memory_space<vmem>>, vector<32x448xf32>
    %c0_113 = arith.constant 0 : index
    %c0_114 = arith.constant 0 : index
    %210 = vector.load %arg20[%c0_113, %c0_114] : memref<448x128xf32, #tpu.memory_space<vmem>>, vector<448x128xf32>
    %cst_115 = arith.constant dense<0.000000e+00> : vector<32x128xf32>
    %211 = tpu.matmul %209, %210, %cst_115 {dimension_numbers = #tpu.dot_dimension_numbers<[1], [0], [0], [1], [0, 0, 1, 1], [], []>} : vector<32x448xf32>, vector<448x128xf32>, vector<32x128xf32> -> vector<32x128xf32>
    %c0_116 = arith.constant 0 : index
    %c0_117 = arith.constant 0 : index
    %212 = vector.load %arg10[%c0_116, %c0_117] : memref<32x1xf32, #tpu.memory_space<vmem>>, vector<32x1xf32>
    %213 = vector.broadcast %212 : vector<32x1xf32> to vector<32x128xf32>
    %214 = arith.addf %211, %213 : vector<32x128xf32>
    %cst_118 = arith.constant 0.000000e+00 : f32
    %215 = vector.broadcast %cst_118 : f32 to vector<32x128xf32>
    %216 = arith.cmpf ogt, %214, %215 : vector<32x128xf32>
    %cst_119 = arith.constant 0.00999999977 : f32
    %217 = vector.broadcast %cst_119 : f32 to vector<32x128xf32>
    %218 = arith.mulf %217, %214 : vector<32x128xf32>
    %219 = arith.select %216, %214, %218 : vector<32x128xi1>, vector<32x128xf32>
    %c0_120 = arith.constant 0 : index
    %c0_121 = arith.constant 0 : index
    %220 = vector.load %arg11[%c0_120, %c0_121] : memref<32x1xf32, #tpu.memory_space<vmem>>, vector<32x1xf32>
    %221 = vector.broadcast %220 : vector<32x1xf32> to vector<32x128xf32>
    %222 = arith.mulf %219, %221 : vector<32x128xf32>
    %c0_122 = arith.constant 0 : index
    %c0_123 = arith.constant 0 : index
    %223 = vector.load %arg12[%c0_122, %c0_123] : memref<32x1xf32, #tpu.memory_space<vmem>>, vector<32x1xf32>
    %224 = vector.broadcast %223 : vector<32x1xf32> to vector<32x128xf32>
    %225 = arith.addf %222, %224 : vector<32x128xf32>
    %c0_124 = arith.constant 0 : index
    %c0_125 = arith.constant 0 : index
    %226 = vector.load %arg3[%c0_124, %c0_125] : memref<32x128xf32, #tpu.memory_space<vmem>>, vector<32x128xf32>
    %227 = arith.mulf %225, %226 : vector<32x128xf32>
    %c0_126 = arith.constant 0 : index
    %c0_127 = arith.constant 0 : index
    %228 = vector.load %arg13[%c0_126, %c0_127] : memref<8x32xf32, #tpu.memory_space<vmem>>, vector<8x32xf32>
    %cst_128 = arith.constant dense<0.000000e+00> : vector<8x128xf32>
    %229 = tpu.matmul %228, %227, %cst_128 {dimension_numbers = #tpu.dot_dimension_numbers<[1], [0], [0], [1], [0, 0, 1, 1], [], []>} : vector<8x32xf32>, vector<32x128xf32>, vector<8x128xf32> -> vector<8x128xf32>
    %c0_129 = arith.constant 0 : index
    %c0_130 = arith.constant 0 : index
    %230 = vector.load %arg14[%c0_129, %c0_130] : memref<8x1xf32, #tpu.memory_space<vmem>>, vector<8x1xf32>
    %231 = vector.broadcast %230 : vector<8x1xf32> to vector<8x128xf32>
    %232 = arith.addf %229, %231 : vector<8x128xf32>
    %cst_131 = arith.constant 0.000000e+00 : f32
    %233 = vector.broadcast %cst_131 : f32 to vector<8x128xf32>
    %234 = arith.cmpf ogt, %232, %233 : vector<8x128xf32>
    %cst_132 = arith.constant 0.00999999977 : f32
    %235 = vector.broadcast %cst_132 : f32 to vector<8x128xf32>
    %236 = arith.mulf %235, %232 : vector<8x128xf32>
    %237 = arith.select %234, %232, %236 : vector<8x128xi1>, vector<8x128xf32>
    %c0_133 = arith.constant 0 : index
    %c0_134 = arith.constant 0 : index
    %238 = vector.load %arg15[%c0_133, %c0_134] : memref<8x1xf32, #tpu.memory_space<vmem>>, vector<8x1xf32>
    %239 = vector.broadcast %238 : vector<8x1xf32> to vector<8x128xf32>
    %240 = arith.mulf %237, %239 : vector<8x128xf32>
    %c0_135 = arith.constant 0 : index
    %c0_136 = arith.constant 0 : index
    %241 = vector.load %arg16[%c0_135, %c0_136] : memref<8x1xf32, #tpu.memory_space<vmem>>, vector<8x1xf32>
    %242 = vector.broadcast %241 : vector<8x1xf32> to vector<8x128xf32>
    %243 = arith.addf %240, %242 : vector<8x128xf32>
    %c0_137 = arith.constant 0 : index
    %c0_138 = arith.constant 0 : index
    %244 = vector.load %arg4[%c0_137, %c0_138] : memref<8x128xf32, #tpu.memory_space<vmem>>, vector<8x128xf32>
    %245 = arith.mulf %243, %244 : vector<8x128xf32>
    %c0_139 = arith.constant 0 : index
    %c0_140 = arith.constant 0 : index
    %246 = vector.load %arg17[%c0_139, %c0_140] : memref<3x8xf32, #tpu.memory_space<vmem>>, vector<3x8xf32>
    %cst_141 = arith.constant dense<0.000000e+00> : vector<3x128xf32>
    %247 = tpu.matmul %246, %245, %cst_141 {dimension_numbers = #tpu.dot_dimension_numbers<[1], [0], [0], [1], [0, 0, 1, 1], [], []>} : vector<3x8xf32>, vector<8x128xf32>, vector<3x128xf32> -> vector<3x128xf32>
    %c0_142 = arith.constant 0 : index
    %c0_143 = arith.constant 0 : index
    %248 = vector.load %arg18[%c0_142, %c0_143] : memref<3x1xf32, #tpu.memory_space<vmem>>, vector<3x1xf32>
    %249 = vector.broadcast %248 : vector<3x1xf32> to vector<3x128xf32>
    %250 = arith.addf %247, %249 : vector<3x128xf32>
    %c0_144 = arith.constant 0 : index
    %c0_145 = arith.constant 0 : index
    %251 = vector.load %arg19[%c0_144, %c0_145] : memref<3x128xf32, #tpu.memory_space<vmem>>, vector<3x128xf32>
    tpu.vector_store %arg19[%c0_144, %c0_145], %250 {strides = array<i32>} : memref<3x128xf32, #tpu.memory_space<vmem>>, vector<3x128xf32>,
    return
  }
  func.func @transform_0(%arg0: i32) -> (i32, i32, i32) {
    %c0_i32 = arith.constant 0 : i32
    %c0_i32_0 = arith.constant 0 : i32
    %c0_i32_1 = arith.constant 0 : i32
    return %c0_i32, %c0_i32_0, %arg0 : i32, i32, i32
  }
  func.func @transform_1(%arg0: i32) -> (i32, i32) {
    %c0_i32 = arith.constant 0 : i32
    %c0_i32_0 = arith.constant 0 : i32
    return %c0_i32, %arg0 : i32, i32
  }
  func.func @transform_2(%arg0: i32) -> (i32, i32) {
    %c0_i32 = arith.constant 0 : i32
    %c0_i32_0 = arith.constant 0 : i32
    return %c0_i32, %arg0 : i32, i32
  }
  func.func @transform_3(%arg0: i32) -> (i32, i32) {
    %c0_i32 = arith.constant 0 : i32
    %c0_i32_0 = arith.constant 0 : i32
    return %c0_i32, %arg0 : i32, i32
  }
  func.func @transform_4(%arg0: i32) -> (i32, i32) {
    %c0_i32 = arith.constant 0 : i32
    %c0_i32_0 = arith.constant 0 : i32
    %c0_i32_1 = arith.constant 0 : i32
    return %c0_i32, %c0_i32_0 : i32, i32
  }
  func.func @transform_5(%arg0: i32) -> (i32, i32) {
    %c0_i32 = arith.constant 0 : i32
    %c0_i32_0 = arith.constant 0 : i32
    %c0_i32_1 = arith.constant 0 : i32
    return %c0_i32, %c0_i32_0 : i32, i32
  }
  func.func @transform_6(%arg0: i32) -> (i32, i32) {
    %c0_i32 = arith.constant 0 : i32
    %c0_i32_0 = arith.constant 0 : i32
    %c0_i32_1 = arith.constant 0 : i32
    return %c0_i32, %c0_i32_0 : i32, i32
  }
  func.func @transform_7(%arg0: i32) -> (i32, i32) {
    %c0_i32 = arith.constant 0 : i32
    %c0_i32_0 = arith.constant 0 : i32
    %c0_i32_1 = arith.constant 0 : i32
    return %c0_i32, %c0_i32_0 : i32, i32
  }
  func.func @transform_8(%arg0: i32) -> (i32, i32) {
    %c0_i32 = arith.constant 0 : i32
    %c0_i32_0 = arith.constant 0 : i32
    %c0_i32_1 = arith.constant 0 : i32
    return %c0_i32, %c0_i32_0 : i32, i32
  }
  func.func @transform_9(%arg0: i32) -> (i32, i32) {
    %c0_i32 = arith.constant 0 : i32
    %c0_i32_0 = arith.constant 0 : i32
    %c0_i32_1 = arith.constant 0 : i32
    return %c0_i32, %c0_i32_0 : i32, i32
  }
  func.func @transform_10(%arg0: i32) -> (i32, i32) {
    %c0_i32 = arith.constant 0 : i32
    %c0_i32_0 = arith.constant 0 : i32
    %c0_i32_1 = arith.constant 0 : i32
    return %c0_i32, %c0_i32_0 : i32, i32
  }
  func.func @transform_11(%arg0: i32) -> (i32, i32) {
    %c0_i32 = arith.constant 0 : i32
    %c0_i32_0 = arith.constant 0 : i32
    %c0_i32_1 = arith.constant 0 : i32
    return %c0_i32, %c0_i32_0 : i32, i32
  }
  func.func @transform_12(%arg0: i32) -> (i32, i32) {
    %c0_i32 = arith.constant 0 : i32
    %c0_i32_0 = arith.constant 0 : i32
    %c0_i32_1 = arith.constant 0 : i32
    return %c0_i32, %c0_i32_0 : i32, i32
  }
  func.func @transform_13(%arg0: i32) -> (i32, i32) {
    %c0_i32 = arith.constant 0 : i32
    %c0_i32_0 = arith.constant 0 : i32
    %c0_i32_1 = arith.constant 0 : i32
    return %c0_i32, %c0_i32_0 : i32, i32
  }
  func.func @transform_14(%arg0: i32) -> (i32, i32) {
    %c0_i32 = arith.constant 0 : i32
    %c0_i32_0 = arith.constant 0 : i32
    %c0_i32_1 = arith.constant 0 : i32
    return %c0_i32, %c0_i32_0 : i32, i32
  }
  func.func @transform_15(%arg0: i32) -> (i32, i32) {
    %c0_i32 = arith.constant 0 : i32
    %c0_i32_0 = arith.constant 0 : i32
    %c0_i32_1 = arith.constant 0 : i32
    return %c0_i32, %c0_i32_0 : i32, i32
  }
  func.func @transform_16(%arg0: i32) -> (i32, i32) {
    %c0_i32 = arith.constant 0 : i32
    %c0_i32_0 = arith.constant 0 : i32
    %c0_i32_1 = arith.constant 0 : i32
    return %c0_i32, %c0_i32_0 : i32, i32
  }
  func.func @transform_17(%arg0: i32) -> (i32, i32) {
    %c0_i32 = arith.constant 0 : i32
    %c0_i32_0 = arith.constant 0 : i32
    %c0_i32_1 = arith.constant 0 : i32
    return %c0_i32, %c0_i32_0 : i32, i32
  }
  func.func @transform_18(%arg0: i32) -> (i32, i32) {
    %c0_i32 = arith.constant 0 : i32
    %c0_i32_0 = arith.constant 0 : i32
    return %c0_i32, %arg0 : i32, i32
  }
}

</mosaic_0001>

<llo_original>
// kernel: simplenet3d_forward.1
$region0: #{simplenet3d_forward.1}
  #allocation0 [shape = 'u32[]', space=smem, size = 0x4, offset = 0x4, fixed_abs, tag = 'smem constant byte address 0x4 - core index']
  #allocation1 [shape = 'u32[144,128]{1,0:T(1,128)}', space=vmem, size = 0x12000, scoped, tag = 'internal scratch']
  #allocation2 [shape = 'f32[448,128]{1,0:T(8,128)}', space=vmem, size = 0x38000, scoped, tag = 'scratch operand']
  %s0 = inlined_call_operand.vmem [shape: bf16[14,128,128], index: 0, kind: input, shape index: {}]
  %s1 = inlined_call_operand.vmem [shape: f32[3,128], index: 1, kind: input, shape index: {}]
  %s2 = inlined_call_operand.vmem [shape: f32[32,128], index: 2, kind: input, shape index: {}]
  %s3 = inlined_call_operand.vmem [shape: f32[8,128], index: 3, kind: input, shape index: {}]
  %s4 = inlined_call_operand.vmem [shape: bf16[256,128], index: 4, kind: input, shape index: {}]
  %s5 = inlined_call_operand.vmem [shape: f32[16,1], index: 5, kind: input, shape index: {}]
  %s6 = inlined_call_operand.vmem [shape: f32[16,3], index: 6, kind: input, shape index: {}]
  %s7 = inlined_call_operand.vmem [shape: f32[16,1], index: 7, kind: input, shape index: {}]
  %s8 = inlined_call_operand.vmem [shape: f32[32,448], index: 8, kind: input, shape index: {}]
  %s9 = inlined_call_operand.vmem [shape: f32[32,1], index: 9, kind: input, shape index: {}]
  %s10 = inlined_call_operand.vmem [shape: f32[32,1], index: 10, kind: input, shape index: {}]
  %s11 = inlined_call_operand.vmem [shape: f32[32,1], index: 11, kind: input, shape index: {}]
  %s12 = inlined_call_operand.vmem [shape: f32[8,32], index: 12, kind: input, shape index: {}]
  %s13 = inlined_call_operand.vmem [shape: f32[8,1], index: 13, kind: input, shape index: {}]
  %s14 = inlined_call_operand.vmem [shape: f32[8,1], index: 14, kind: input, shape index: {}]
  %s15 = inlined_call_operand.vmem [shape: f32[8,1], index: 15, kind: input, shape index: {}]
  %s16 = inlined_call_operand.vmem [shape: f32[3,8], index: 16, kind: input, shape index: {}]
  %s17 = inlined_call_operand.vmem [shape: f32[3,1], index: 17, kind: input, shape index: {}]
  %s18 = inlined_call_operand.vmem [shape: f32[3,128], index: 18, kind: output, shape index: {}]
  %s19 = sld [smem:[#allocation0]]
  $region82: #{simplenet3d_forward.1} parent=0
    _
  %s21 = ssub.s32 1, %s19
  %s22 = scalar_select 0, %s21, %s19
  // Predicated region
  $region2: #{simplenet3d_forward.1} parent=0 // pred_check
    _
  $region3: #{simplenet3d_forward.1} parent=0 // pred_check_branch
    %24 = sbr.rel (0) target = $region5
  $region4: #{simplenet3d_forward.1} parent=0 // pred_region
    _
  $region5: #{simplenet3d_forward.1} parent=0 // pred_fallthru
    _
  // Predicated region
  $region6: #{simplenet3d_forward.1} parent=0 // pred_check
    _
  $region7: #{simplenet3d_forward.1} parent=0 // pred_check_branch
    %26 = sbr.rel (0) target = $region9
  $region8: #{simplenet3d_forward.1} parent=0 // pred_region
    _
  $region9: #{simplenet3d_forward.1} parent=0 // pred_fallthru
    _
  // Predicated region
  $region10: #{simplenet3d_forward.1} parent=0 // pred_check
    _
  $region11: #{simplenet3d_forward.1} parent=0 // pred_check_branch
    %28 = sbr.rel (0) target = $region13
  $region12: #{simplenet3d_forward.1} parent=0 // pred_region
    _
  $region13: #{simplenet3d_forward.1} parent=0 // pred_fallthru
    _
  // Predicated region
  $region14: #{simplenet3d_forward.1} parent=0 // pred_check
    _
  $region15: #{simplenet3d_forward.1} parent=0 // pred_check_branch
    %30 = sbr.rel (0) target = $region17
  $region16: #{simplenet3d_forward.1} parent=0 // pred_region
    _
  $region17: #{simplenet3d_forward.1} parent=0 // pred_fallthru
    _
  // Predicated region
  $region18: #{simplenet3d_forward.1} parent=0 // pred_check
    _
  $region19: #{simplenet3d_forward.1} parent=0 // pred_check_branch
    %32 = sbr.rel (0) target = $region21
  $region20: #{simplenet3d_forward.1} parent=0 // pred_region
    _
  $region21: #{simplenet3d_forward.1} parent=0 // pred_fallthru
    _
  // Predicated region
  $region22: #{simplenet3d_forward.1} parent=0 // pred_check
    _
  $region23: #{simplenet3d_forward.1} parent=0 // pred_check_branch
    %34 = sbr.rel (0) target = $region25
  $region24: #{simplenet3d_forward.1} parent=0 // pred_region
    _
  $region25: #{simplenet3d_forward.1} parent=0 // pred_fallthru
    _
  // Predicated region
  $region26: #{simplenet3d_forward.1} parent=0 // pred_check
    _
  $region27: #{simplenet3d_forward.1} parent=0 // pred_check_branch
    %36 = sbr.rel (0) target = $region29
  $region28: #{simplenet3d_forward.1} parent=0 // pred_region
    _
  $region29: #{simplenet3d_forward.1} parent=0 // pred_fallthru
    _
  // Predicated region
  $region30: #{simplenet3d_forward.1} parent=0 // pred_check
    _
  $region31: #{simplenet3d_forward.1} parent=0 // pred_check_branch
    %38 = sbr.rel (0) target = $region33
  $region32: #{simplenet3d_forward.1} parent=0 // pred_region
    _
  $region33: #{simplenet3d_forward.1} parent=0 // pred_fallthru
    _
  // Predicated region
  $region34: #{simplenet3d_forward.1} parent=0 // pred_check
    _
  $region35: #{simplenet3d_forward.1} parent=0 // pred_check_branch
    %40 = sbr.rel (0) target = $region37
  $region36: #{simplenet3d_forward.1} parent=0 // pred_region
    _
  $region37: #{simplenet3d_forward.1} parent=0 // pred_fallthru
    _
  // Predicated region
  $region38: #{simplenet3d_forward.1} parent=0 // pred_check
    _
  $region39: #{simplenet3d_forward.1} parent=0 // pred_check_branch
    %42 = sbr.rel (0) target = $region41
  $region40: #{simplenet3d_forward.1} parent=0 // pred_region
    _
  $region41: #{simplenet3d_forward.1} parent=0 // pred_fallthru
    _
  // Predicated region
  $region42: #{simplenet3d_forward.1} parent=0 // pred_check
    _
  $region43: #{simplenet3d_forward.1} parent=0 // pred_check_branch
    %44 = sbr.rel (0) target = $region45
  $region44: #{simplenet3d_forward.1} parent=0 // pred_region
    _
  $region45: #{simplenet3d_forward.1} parent=0 // pred_fallthru
    _
  // Predicated region
  $region46: #{simplenet3d_forward.1} parent=0 // pred_check
    _
  $region47: #{simplenet3d_forward.1} parent=0 // pred_check_branch
    %46 = sbr.rel (0) target = $region49
  $region48: #{simplenet3d_forward.1} parent=0 // pred_region
    _
  $region49: #{simplenet3d_forward.1} parent=0 // pred_fallthru
    _
  // Predicated region
  $region50: #{simplenet3d_forward.1} parent=0 // pred_check
    _
  $region51: #{simplenet3d_forward.1} parent=0 // pred_check_branch
    %48 = sbr.rel (0) target = $region53
  $region52: #{simplenet3d_forward.1} parent=0 // pred_region
    _
  $region53: #{simplenet3d_forward.1} parent=0 // pred_fallthru
    _
  // Predicated region
  $region54: #{simplenet3d_forward.1} parent=0 // pred_check
    _
  $region55: #{simplenet3d_forward.1} parent=0 // pred_check_branch
    %50 = sbr.rel (0) target = $region57
  $region56: #{simplenet3d_forward.1} parent=0 // pred_region
    _
  $region57: #{simplenet3d_forward.1} parent=0 // pred_fallthru
    _
  // Predicated region
  $region58: #{simplenet3d_forward.1} parent=0 // pred_check
    _
  $region59: #{simplenet3d_forward.1} parent=0 // pred_check_branch
    %52 = sbr.rel (0) target = $region61
  $region60: #{simplenet3d_forward.1} parent=0 // pred_region
    _
  $region61: #{simplenet3d_forward.1} parent=0 // pred_fallthru
    _
  // Predicated region
  $region62: #{simplenet3d_forward.1} parent=0 // pred_check
    _
  $region63: #{simplenet3d_forward.1} parent=0 // pred_check_branch
    %54 = sbr.rel (0) target = $region65
  $region64: #{simplenet3d_forward.1} parent=0 // pred_region
    _
  $region65: #{simplenet3d_forward.1} parent=0 // pred_fallthru
    _
  // Predicated region
  $region66: #{simplenet3d_forward.1} parent=0 // pred_check
    _
  $region67: #{simplenet3d_forward.1} parent=0 // pred_check_branch
    %56 = sbr.rel (0) target = $region69
  $region68: #{simplenet3d_forward.1} parent=0 // pred_region
    _
  $region69: #{simplenet3d_forward.1} parent=0 // pred_fallthru
    _
  // Predicated region
  $region70: #{simplenet3d_forward.1} parent=0 // pred_check
    _
  $region71: #{simplenet3d_forward.1} parent=0 // pred_check_branch
    %58 = sbr.rel (0) target = $region73
  $region72: #{simplenet3d_forward.1} parent=0 // pred_region
    _
  $region73: #{simplenet3d_forward.1} parent=0 // pred_fallthru
    _
  %v60 = vld [vmem:[%s4] sm:$0xf]
  %v61 = vld [vmem:[%s4 + $0x4] sm:$0xf]
  %v62 = vld [vmem:[%s4 + $0x8] sm:$0xf]
  %v63 = vld [vmem:[%s4 + $0xc] sm:$0xf]
  %v64 = vld [vmem:[%s4 + $0x10] sm:$0xf]
  %v65 = vld [vmem:[%s4 + $0x14] sm:$0xf]
  %v66 = vld [vmem:[%s4 + $0x18] sm:$0xf]
  %v67 = vld [vmem:[%s4 + $0x1c] sm:$0xf]
  %v68 = vld [vmem:[%s4 + $0x20] sm:$0xf]
  %v69 = vld [vmem:[%s4 + $0x24] sm:$0xf]
  %v70 = vld [vmem:[%s4 + $0x28] sm:$0xf]
  %v71 = vld [vmem:[%s4 + $0x2c] sm:$0xf]
  %v72 = vld [vmem:[%s4 + $0x30] sm:$0xf]
  %v73 = vld [vmem:[%s4 + $0x34] sm:$0xf]
  %v74 = vld [vmem:[%s4 + $0x38] sm:$0xf]
  %v75 = vld [vmem:[%s4 + $0x3c] sm:$0xf]
  %v76 = vld [vmem:[%s4 + $0x40] sm:$0xf]
  %v77 = vld [vmem:[%s4 + $0x44] sm:$0xf]
  %v78 = vld [vmem:[%s4 + $0x48] sm:$0xf]
  %v79 = vld [vmem:[%s4 + $0x4c] sm:$0xf]
  %v80 = vld [vmem:[%s4 + $0x50] sm:$0xf]
  %v81 = vld [vmem:[%s4 + $0x54] sm:$0xf]
  %v82 = vld [vmem:[%s4 + $0x58] sm:$0xf]
  %v83 = vld [vmem:[%s4 + $0x5c] sm:$0xf]
  %v84 = vld [vmem:[%s4 + $0x60] sm:$0xf]
  %v85 = vld [vmem:[%s4 + $0x64] sm:$0xf]
  %v86 = vld [vmem:[%s4 + $0x68] sm:$0xf]
  %v87 = vld [vmem:[%s4 + $0x6c] sm:$0xf]
  %v88 = vld [vmem:[%s4 + $0x70] sm:$0xf]
  %v89 = vld [vmem:[%s4 + $0x74] sm:$0xf]
  %v90 = vld [vmem:[%s4 + $0x78] sm:$0xf]
  %v91 = vld [vmem:[%s4 + $0x7c] sm:$0xf]
  %v92 = vld [vmem:[%s5] sm:$0xff]
  %v93 = vld [vmem:[%s5 + $0x8] sm:$0xff]
  %v94 = vld [vmem:[%s0] sm:$0xf]
  %v95 = vld [vmem:[%s0 + $0x4] sm:$0xf]
  %v96 = vld [vmem:[%s0 + $0x8] sm:$0xf]
  %v97 = vld [vmem:[%s0 + $0xc] sm:$0xf]
  %v98 = vld [vmem:[%s0 + $0x10] sm:$0xf]
  %v99 = vld [vmem:[%s0 + $0x14] sm:$0xf]
  %v100 = vld [vmem:[%s0 + $0x18] sm:$0xf]
  %v101 = vld [vmem:[%s0 + $0x1c] sm:$0xf]
  %v102 = vld [vmem:[%s0 + $0x20] sm:$0xf]
  %v103 = vld [vmem:[%s0 + $0x24] sm:$0xf]
  %v104 = vld [vmem:[%s0 + $0x28] sm:$0xf]
  %v105 = vld [vmem:[%s0 + $0x2c] sm:$0xf]
  %v106 = vld [vmem:[%s0 + $0x30] sm:$0xf]
  %v107 = vld [vmem:[%s0 + $0x34] sm:$0xf]
  %v108 = vld [vmem:[%s0 + $0x38] sm:$0xf]
  %v109 = vld [vmem:[%s0 + $0x3c] sm:$0xf]
  %v142 = vunpack.c.l.b16 %v60
  %v143 = vunpack.c.l.b16 %v61
  %v144 = vunpack.c.l.b16 %v62
  %v145 = vunpack.c.l.b16 %v63
  %v146 = vunpack.c.l.b16 %v64
  %v147 = vunpack.c.l.b16 %v65
  %v148 = vunpack.c.l.b16 %v66
  %v149 = vunpack.c.l.b16 %v67
  %v150 = vunpack.c.l.b16 %v68
  %v151 = vunpack.c.l.b16 %v69
  %v152 = vunpack.c.l.b16 %v70
  %v153 = vunpack.c.l.b16 %v71
  %v154 = vunpack.c.l.b16 %v72
  %v155 = vunpack.c.l.b16 %v73
  %v156 = vunpack.c.l.b16 %v74
  %v157 = vunpack.c.l.b16 %v75
  %v158 = vunpack.c.l.b16 %v76
  %v159 = vunpack.c.l.b16 %v77
  %v160 = vunpack.c.l.b16 %v78
  %v161 = vunpack.c.l.b16 %v79
  %v162 = vunpack.c.l.b16 %v80
  %v163 = vunpack.c.l.b16 %v81
  %v164 = vunpack.c.l.b16 %v82
  %v165 = vunpack.c.l.b16 %v83
  %v166 = vunpack.c.l.b16 %v84
  %v167 = vunpack.c.l.b16 %v85
  %v168 = vunpack.c.l.b16 %v86
  %v169 = vunpack.c.l.b16 %v87
  %v170 = vunpack.c.l.b16 %v88
  %v171 = vunpack.c.l.b16 %v89
  %v172 = vunpack.c.l.b16 %v90
  %v173 = vunpack.c.l.b16 %v91
  %v174 = vpack.c.b16 %v143, %v142
  %v175 = vpack.c.b16 %v145, %v144
  %v176 = vpack.c.b16 %v147, %v146
  %v177 = vpack.c.b16 %v149, %v148
  %v178 = vpack.c.b16 %v151, %v150
  %v179 = vpack.c.b16 %v153, %v152
  %v180 = vpack.c.b16 %v155, %v154
  %v181 = vpack.c.b16 %v157, %v156
  %v182 = vpack.c.b16 %v159, %v158
  %v183 = vpack.c.b16 %v161, %v160
  %v184 = vpack.c.b16 %v163, %v162
  %v185 = vpack.c.b16 %v165, %v164
  %v186 = vpack.c.b16 %v167, %v166
  %v187 = vpack.c.b16 %v169, %v168
  %v188 = vpack.c.b16 %v171, %v170
  %v189 = vpack.c.b16 %v173, %v172
  %v222 = vunpack.c.l.b16 %v94
  %v223 = vunpack.c.l.b16 %v95
  %v224 = vunpack.c.l.b16 %v96
  %v225 = vunpack.c.l.b16 %v97
  %v226 = vunpack.c.l.b16 %v98
  %v227 = vunpack.c.l.b16 %v99
  %v228 = vunpack.c.l.b16 %v100
  %v229 = vunpack.c.l.b16 %v101
  %v230 = vunpack.c.l.b16 %v102
  %v231 = vunpack.c.l.b16 %v103
  %v232 = vunpack.c.l.b16 %v104
  %v233 = vunpack.c.l.b16 %v105
  %v234 = vunpack.c.l.b16 %v106
  %v235 = vunpack.c.l.b16 %v107
  %v236 = vunpack.c.l.b16 %v108
  %v237 = vunpack.c.l.b16 %v109
  %v238 = vpack.c.b16 %v223, %v222
  %v239 = vpack.c.b16 %v225, %v224
  %v240 = vpack.c.b16 %v227, %v226
  %v241 = vpack.c.b16 %v229, %v228
  %v242 = vpack.c.b16 %v231, %v230
  %v243 = vpack.c.b16 %v233, %v232
  %v244 = vpack.c.b16 %v235, %v234
  %v245 = vpack.c.b16 %v237, %v236
  %254 = vmatprep.subr.bf16.mxu0 0
  %255 = vmatpush1.bf16.msra.mxu0 %v238
  %256 = vmatprep.subr.bf16.mxu0 0
  %257 = vmatpush1.bf16.msra.mxu0 %v239
  %258 = vmatprep.subr.bf16.mxu0 0
  %259 = vmatpush1.bf16.msra.mxu0 %v240
  %260 = vmatprep.subr.bf16.mxu0 0
  %261 = vmatpush1.bf16.msra.mxu0 %v241
  %262 = vmatprep.subr.bf16.mxu0 0
  %263 = vmatpush1.bf16.msra.mxu0 %v242
  %264 = vmatprep.subr.bf16.mxu0 0
  %265 = vmatpush1.bf16.msra.mxu0 %v243
  %266 = vmatprep.subr.bf16.mxu0 0
  %267 = vmatpush1.bf16.msra.mxu0 %v244
  %268 = vmatprep.subr.bf16.mxu0 0
  %269 = vmatpush1.bf16.msra.mxu0 %v245
  %270 = vmatprep.subr.bf16.mxu0 0
  %271 = vmatpush1.bf16.msra.mxu0 0
  %272 = vmatprep.subr.bf16.mxu0 0
  %273 = vmatpush1.bf16.msra.mxu0 0
  %274 = vmatprep.subr.bf16.mxu0 0
  %275 = vmatpush1.bf16.msra.mxu0 0
  %276 = vmatprep.subr.bf16.mxu0 0
  %277 = vmatpush1.bf16.msra.mxu0 0
  %278 = vmatprep.subr.bf16.mxu0 0
  %279 = vmatpush1.bf16.msra.mxu0 0
  %280 = vmatprep.subr.bf16.mxu0 0
  %281 = vmatpush1.bf16.msra.mxu0 0
  %282 = vmatprep.subr.bf16.mxu0 0
  %283 = vmatpush1.bf16.msra.mxu0 0
  %284 = vmatprep.subr.bf16.mxu0 0
  %285 = vmatpush1.bf16.msra.mxu0 0
  %286 = vmatprep.mubr.bf16.mxu0 0
  %287 = vmatmul.mubr.bf16.gmra.mrb[0].mxu0 %v174
  %v288 = vpop.f32.mrb[0].mxu0
  %v289 = vadd.f32 0.0, %v288
  %v290 = vpop.f32.mrb[0].mxu0
  %v291 = vpop.f32.mrb[0].mxu0
  %v292 = vadd.f32 0.0, %v291
  %v293 = vpop.f32.mrb[0].mxu0
  %294 = vmatprep.mubr.bf16.mxu0 0
  %295 = vmatmul.mubr.bf16.gmra.mrb[0].mxu0 %v175
  %v296 = vpop.f32.mrb[0].mxu0
  %v297 = vadd.f32 0.0, %v296
  %v298 = vpop.f32.mrb[0].mxu0
  %v299 = vpop.f32.mrb[0].mxu0
  %v300 = vadd.f32 0.0, %v299
  %v301 = vpop.f32.mrb[0].mxu0
  %302 = vmatprep.mubr.bf16.mxu0 0
  %303 = vmatmul.mubr.bf16.gmra.mrb[0].mxu0 %v176
  %v304 = vpop.f32.mrb[0].mxu0
  %v305 = vadd.f32 0.0, %v304
  %v306 = vpop.f32.mrb[0].mxu0
  %v307 = vpop.f32.mrb[0].mxu0
  %v308 = vadd.f32 0.0, %v307
  %v309 = vpop.f32.mrb[0].mxu0
  %310 = vmatprep.mubr.bf16.mxu0 0
  %311 = vmatmul.mubr.bf16.gmra.mrb[0].mxu0 %v177
  %v312 = vpop.f32.mrb[0].mxu0
  %v313 = vadd.f32 0.0, %v312
  %v314 = vpop.f32.mrb[0].mxu0
  %v315 = vpop.f32.mrb[0].mxu0
  %v316 = vadd.f32 0.0, %v315
  %v317 = vpop.f32.mrb[0].mxu0
  %318 = vmatprep.mubr.bf16.mxu0 0
  %319 = vmatmul.mubr.bf16.gmra.mrb[0].mxu0 %v178
  %v320 = vpop.f32.mrb[0].mxu0
  %v321 = vadd.f32 0.0, %v320
  %v322 = vpop.f32.mrb[0].mxu0
  %v323 = vpop.f32.mrb[0].mxu0
  %v324 = vadd.f32 0.0, %v323
  %v325 = vpop.f32.mrb[0].mxu0
  %326 = vmatprep.mubr.bf16.mxu0 0
  %327 = vmatmul.mubr.bf16.gmra.mrb[0].mxu0 %v179
  %v328 = vpop.f32.mrb[0].mxu0
  %v329 = vadd.f32 0.0, %v328
  %v330 = vpop.f32.mrb[0].mxu0
  %v331 = vpop.f32.mrb[0].mxu0
  %v332 = vadd.f32 0.0, %v331
  %v333 = vpop.f32.mrb[0].mxu0
  %334 = vmatprep.mubr.bf16.mxu0 0
  %335 = vmatmul.mubr.bf16.gmra.mrb[0].mxu0 %v180
  %v336 = vpop.f32.mrb[0].mxu0
  %v337 = vadd.f32 0.0, %v336
  %v338 = vpop.f32.mrb[0].mxu0
  %v339 = vpop.f32.mrb[0].mxu0
  %v340 = vadd.f32 0.0, %v339
  %v341 = vpop.f32.mrb[0].mxu0
  %342 = vmatprep.mubr.bf16.mxu0 0
  %343 = vmatmul.mubr.bf16.gmra.mrb[0].mxu0 %v181
  %v344 = vpop.f32.mrb[0].mxu0
  %v345 = vadd.f32 0.0, %v344
  %v346 = vpop.f32.mrb[0].mxu0
  %v347 = vpop.f32.mrb[0].mxu0
  %v348 = vadd.f32 0.0, %v347
  %v349 = vpop.f32.mrb[0].mxu0
  %350 = vmatprep.mubr.bf16.mxu0 0
  %351 = vmatmul.mubr.bf16.gmra.mrb[0].mxu0 %v182
  %v352 = vpop.f32.mrb[0].mxu0
  %v353 = vadd.f32 0.0, %v352
  %v354 = vpop.f32.mrb[0].mxu0
  %v355 = vpop.f32.mrb[0].mxu0
  %v356 = vadd.f32 0.0, %v355
  %v357 = vpop.f32.mrb[0].mxu0
  %358 = vmatprep.mubr.bf16.mxu0 0
  %359 = vmatmul.mubr.bf16.gmra.mrb[0].mxu0 %v183
  %v360 = vpop.f32.mrb[0].mxu0
  %v361 = vadd.f32 0.0, %v360
  %v362 = vpop.f32.mrb[0].mxu0
  %v363 = vpop.f32.mrb[0].mxu0
  %v364 = vadd.f32 0.0, %v363
  %v365 = vpop.f32.mrb[0].mxu0
  %366 = vmatprep.mubr.bf16.mxu0 0
  %367 = vmatmul.mubr.bf16.gmra.mrb[0].mxu0 %v184
  %v368 = vpop.f32.mrb[0].mxu0
  %v369 = vadd.f32 0.0, %v368
  %v370 = vpop.f32.mrb[0].mxu0
  %v371 = vpop.f32.mrb[0].mxu0
  %v372 = vadd.f32 0.0, %v371
  %v373 = vpop.f32.mrb[0].mxu0
  %374 = vmatprep.mubr.bf16.mxu0 0
  %375 = vmatmul.mubr.bf16.gmra.mrb[0].mxu0 %v185
  %v376 = vpop.f32.mrb[0].mxu0
  %v377 = vadd.f32 0.0, %v376
  %v378 = vpop.f32.mrb[0].mxu0
  %v379 = vpop.f32.mrb[0].mxu0
  %v380 = vadd.f32 0.0, %v379
  %v381 = vpop.f32.mrb[0].mxu0
  %382 = vmatprep.mubr.bf16.mxu0 0
  %383 = vmatmul.mubr.bf16.gmra.mrb[0].mxu0 %v186
  %v384 = vpop.f32.mrb[0].mxu0
  %v385 = vadd.f32 0.0, %v384
  %v386 = vpop.f32.mrb[0].mxu0
  %v387 = vpop.f32.mrb[0].mxu0
  %v388 = vadd.f32 0.0, %v387
  %v389 = vpop.f32.mrb[0].mxu0
  %390 = vmatprep.mubr.bf16.mxu0 0
  %391 = vmatmul.mubr.bf16.gmra.mrb[0].mxu0 %v187
  %v392 = vpop.f32.mrb[0].mxu0
  %v393 = vadd.f32 0.0, %v392
  %v394 = vpop.f32.mrb[0].mxu0
  %v395 = vpop.f32.mrb[0].mxu0
  %v396 = vadd.f32 0.0, %v395
  %v397 = vpop.f32.mrb[0].mxu0
  %398 = vmatprep.mubr.bf16.mxu0 0
  %399 = vmatmul.mubr.bf16.gmra.mrb[0].mxu0 %v188
  %v400 = vpop.f32.mrb[0].mxu0
  %v401 = vadd.f32 0.0, %v400
  %v402 = vpop.f32.mrb[0].mxu0
  %v403 = vpop.f32.mrb[0].mxu0
  %v404 = vadd.f32 0.0, %v403
  %v405 = vpop.f32.mrb[0].mxu0
  %406 = vmatprep.mubr.bf16.mxu0 0
  %407 = vmatmul.mubr.bf16.gmra.mrb[0].mxu0 %v189
  %v408 = vpop.f32.mrb[0].mxu0
  %v409 = vadd.f32 0.0, %v408
  %v410 = vpop.f32.mrb[0].mxu0
  %v411 = vpop.f32.mrb[0].mxu0
  %v412 = vadd.f32 0.0, %v411
  %v413 = vpop.f32.mrb[0].mxu0
  %414 = vdwg.mxu0
  %v415 = vmax.f32 %v289, %v297
  %v416 = vmax.f32 %v415, %v305
  %v417 = vmax.f32 %v416, %v313
  %v418 = vmax.f32 %v417, %v321
  %v419 = vmax.f32 %v418, %v329
  %v420 = vmax.f32 %v419, %v337
  %v421 = vmax.f32 %v420, %v345
  %v422 = vmax.f32 %v292, %v300
  %v423 = vmax.f32 %v422, %v308
  %v424 = vmax.f32 %v423, %v316
  %v425 = vmax.f32 %v424, %v324
  %v426 = vmax.f32 %v425, %v332
  %v427 = vmax.f32 %v426, %v340
  %v428 = vmax.f32 %v427, %v348
  %v429 = vmax.f32 %v353, %v361
  %v430 = vmax.f32 %v429, %v369
  %v431 = vmax.f32 %v430, %v377
  %v432 = vmax.f32 %v431, %v385
  %v433 = vmax.f32 %v432, %v393
  %v434 = vmax.f32 %v433, %v401
  %v435 = vmax.f32 %v434, %v409
  %v436 = vmax.f32 %v356, %v364
  %v437 = vmax.f32 %v436, %v372
  %v438 = vmax.f32 %v437, %v380
  %v439 = vmax.f32 %v438, %v388
  %v440 = vmax.f32 %v439, %v396
  %v441 = vmax.f32 %v440, %v404
  %v442 = vmax.f32 %v441, %v412
  %444 = vset.pattern.permute.xlu0 0
  %445 = vperm.xlu0 %444, %v92
  %v446 = vpop.permute.xlu0 %445
  %449 = vset.pattern.permute.xlu0 0
  %450 = vperm.xlu0 %449, %v93
  %v451 = vpop.permute.xlu0 %450
  %v453 = vadd.f32 %v421, %v446
  %v454 = vadd.f32 %v428, %v451
  %v455 = vadd.f32 %v435, %v446
  %v456 = vadd.f32 %v442, %v451
  %vm457 = vcmp.gt.f32.partialorder %v453, 0.0
  %vm458 = vcmp.gt.f32.partialorder %v454, 0.0
  %vm459 = vcmp.gt.f32.partialorder %v455, 0.0
  %vm460 = vcmp.gt.f32.partialorder %v456, 0.0
  %v461 = vmul.f32 %v453, 0.01
  %v462 = vmul.f32 %v454, 0.01
  %v463 = vmul.f32 %v455, 0.01
  %v464 = vmul.f32 %v456, 0.01
  %v465 = vsel %vm457, %v453, %v461
  %v466 = vsel %vm458, %v454, %v462
  %v467 = vsel %vm459, %v455, %v463
  %v468 = vsel %vm460, %v456, %v464
  %469 = vst [vmem:[#allocation2] sm:$0xff] %v465
  %470 = vst [vmem:[#allocation2 + $0x8] sm:$0xff] %v466
  %471 = vst [vmem:[#allocation2 + $0x10] sm:$0xff] %v467
  %472 = vst [vmem:[#allocation2 + $0x18] sm:$0xff] %v468
  %s473 = scalar_lea.vmem %s0, 64
  %v474 = vld [vmem:[%s473] sm:$0xf]
  %v475 = vld [vmem:[%s473 + $0x4] sm:$0xf]
  %v476 = vld [vmem:[%s473 + $0x8] sm:$0xf]
  %v477 = vld [vmem:[%s473 + $0xc] sm:$0xf]
  %v478 = vld [vmem:[%s473 + $0x10] sm:$0xf]
  %v479 = vld [vmem:[%s473 + $0x14] sm:$0xf]
  %v480 = vld [vmem:[%s473 + $0x18] sm:$0xf]
  %v481 = vld [vmem:[%s473 + $0x1c] sm:$0xf]
  %v482 = vld [vmem:[%s473 + $0x20] sm:$0xf]
  %v483 = vld [vmem:[%s473 + $0x24] sm:$0xf]
  %v484 = vld [vmem:[%s473 + $0x28] sm:$0xf]
  %v485 = vld [vmem:[%s473 + $0x2c] sm:$0xf]
  %v486 = vld [vmem:[%s473 + $0x30] sm:$0xf]
  %v487 = vld [vmem:[%s473 + $0x34] sm:$0xf]
  %v488 = vld [vmem:[%s473 + $0x38] sm:$0xf]
  %v489 = vld [vmem:[%s473 + $0x3c] sm:$0xf]
  %v506 = vunpack.c.l.b16 %v474
  %v507 = vunpack.c.l.b16 %v475
  %v508 = vunpack.c.l.b16 %v476
  %v509 = vunpack.c.l.b16 %v477
  %v510 = vunpack.c.l.b16 %v478
  %v511 = vunpack.c.l.b16 %v479
  %v512 = vunpack.c.l.b16 %v480
  %v513 = vunpack.c.l.b16 %v481
  %v514 = vunpack.c.l.b16 %v482
  %v515 = vunpack.c.l.b16 %v483
  %v516 = vunpack.c.l.b16 %v484
  %v517 = vunpack.c.l.b16 %v485
  %v518 = vunpack.c.l.b16 %v486
  %v519 = vunpack.c.l.b16 %v487
  %v520 = vunpack.c.l.b16 %v488
  %v521 = vunpack.c.l.b16 %v489
  %v522 = vpack.c.b16 %v507, %v506
  %v523 = vpack.c.b16 %v509, %v508
  %v524 = vpack.c.b16 %v511, %v510
  %v525 = vpack.c.b16 %v513, %v512
  %v526 = vpack.c.b16 %v515, %v514
  %v527 = vpack.c.b16 %v517, %v516
  %v528 = vpack.c.b16 %v519, %v518
  %v529 = vpack.c.b16 %v521, %v520
  %538 = vmatprep.subr.bf16.mxu0 0
  %539 = vmatpush1.bf16.msra.mxu0 %v522
  %540 = vmatprep.subr.bf16.mxu0 0
  %541 = vmatpush1.bf16.msra.mxu0 %v523
  %542 = vmatprep.subr.bf16.mxu0 0
  %543 = vmatpush1.bf16.msra.mxu0 %v524
  %544 = vmatprep.subr.bf16.mxu0 0
  %545 = vmatpush1.bf16.msra.mxu0 %v525
  %546 = vmatprep.subr.bf16.mxu0 0
  %547 = vmatpush1.bf16.msra.mxu0 %v526
  %548 = vmatprep.subr.bf16.mxu0 0
  %549 = vmatpush1.bf16.msra.mxu0 %v527
  %550 = vmatprep.subr.bf16.mxu0 0
  %551 = vmatpush1.bf16.msra.mxu0 %v528
  %552 = vmatprep.subr.bf16.mxu0 0
  %553 = vmatpush1.bf16.msra.mxu0 %v529
  %554 = vmatprep.subr.bf16.mxu0 0
  %555 = vmatpush1.bf16.msra.mxu0 0
  %556 = vmatprep.subr.bf16.mxu0 0
  %557 = vmatpush1.bf16.msra.mxu0 0
  %558 = vmatprep.subr.bf16.mxu0 0
  %559 = vmatpush1.bf16.msra.mxu0 0
  %560 = vmatprep.subr.bf16.mxu0 0
  %561 = vmatpush1.bf16.msra.mxu0 0
  %562 = vmatprep.subr.bf16.mxu0 0
  %563 = vmatpush1.bf16.msra.mxu0 0
  %564 = vmatprep.subr.bf16.mxu0 0
  %565 = vmatpush1.bf16.msra.mxu0 0
  %566 = vmatprep.subr.bf16.mxu0 0
  %567 = vmatpush1.bf16.msra.mxu0 0
  %568 = vmatprep.subr.bf16.mxu0 0
  %569 = vmatpush1.bf16.msra.mxu0 0
  %570 = vmatprep.mubr.bf16.mxu0 0
  %571 = vmatmul.mubr.bf16.gmra.mrb[0].mxu0 %v174
  %v572 = vpop.f32.mrb[0].mxu0
  %v573 = vadd.f32 0.0, %v572
  %v574 = vpop.f32.mrb[0].mxu0
  %v575 = vpop.f32.mrb[0].mxu0
  %v576 = vadd.f32 0.0, %v575
  %v577 = vpop.f32.mrb[0].mxu0
  %578 = vmatprep.mubr.bf16.mxu0 0
  %579 = vmatmul.mubr.bf16.gmra.mrb[0].mxu0 %v175
  %v580 = vpop.f32.mrb[0].mxu0
  %v581 = vadd.f32 0.0, %v580
  %v582 = vpop.f32.mrb[0].mxu0
  %v583 = vpop.f32.mrb[0].mxu0
  %v584 = vadd.f32 0.0, %v583
  %v585 = vpop.f32.mrb[0].mxu0
  %586 = vmatprep.mubr.bf16.mxu0 0
  %587 = vmatmul.mubr.bf16.gmra.mrb[0].mxu0 %v176
  %v588 = vpop.f32.mrb[0].mxu0
  %v589 = vadd.f32 0.0, %v588
  %v590 = vpop.f32.mrb[0].mxu0
  %v591 = vpop.f32.mrb[0].mxu0
  %v592 = vadd.f32 0.0, %v591
  %v593 = vpop.f32.mrb[0].mxu0
  %594 = vmatprep.mubr.bf16.mxu0 0
  %595 = vmatmul.mubr.bf16.gmra.mrb[0].mxu0 %v177
  %v596 = vpop.f32.mrb[0].mxu0
  %v597 = vadd.f32 0.0, %v596
  %v598 = vpop.f32.mrb[0].mxu0
  %v599 = vpop.f32.mrb[0].mxu0
  %v600 = vadd.f32 0.0, %v599
  %v601 = vpop.f32.mrb[0].mxu0
  %602 = vmatprep.mubr.bf16.mxu0 0
  %603 = vmatmul.mubr.bf16.gmra.mrb[0].mxu0 %v178
  %v604 = vpop.f32.mrb[0].mxu0
  %v605 = vadd.f32 0.0, %v604
  %v606 = vpop.f32.mrb[0].mxu0
  %v607 = vpop.f32.mrb[0].mxu0
  %v608 = vadd.f32 0.0, %v607
  %v609 = vpop.f32.mrb[0].mxu0
  %610 = vmatprep.mubr.bf16.mxu0 0
  %611 = vmatmul.mubr.bf16.gmra.mrb[0].mxu0 %v179
  %v612 = vpop.f32.mrb[0].mxu0
  %v613 = vadd.f32 0.0, %v612
  %v614 = vpop.f32.mrb[0].mxu0
  %v615 = vpop.f32.mrb[0].mxu0
  %v616 = vadd.f32 0.0, %v615
  %v617 = vpop.f32.mrb[0].mxu0
  %618 = vmatprep.mubr.bf16.mxu0 0
  %619 = vmatmul.mubr.bf16.gmra.mrb[0].mxu0 %v180
  %v620 = vpop.f32.mrb[0].mxu0
  %v621 = vadd.f32 0.0, %v620
  %v622 = vpop.f32.mrb[0].mxu0
  %v623 = vpop.f32.mrb[0].mxu0
  %v624 = vadd.f32 0.0, %v623
  %v625 = vpop.f32.mrb[0].mxu0
  %626 = vmatprep.mubr.bf16.mxu0 0
  %627 = vmatmul.mubr.bf16.gmra.mrb[0].mxu0 %v181
  %v628 = vpop.f32.mrb[0].mxu0
  %v629 = vadd.f32 0.0, %v628
  %v630 = vpop.f32.mrb[0].mxu0
  %v631 = vpop.f32.mrb[0].mxu0
  %v632 = vadd.f32 0.0, %v631
  %v633 = vpop.f32.mrb[0].mxu0
  %634 = vmatprep.mubr.bf16.mxu0 0
  %635 = vmatmul.mubr.bf16.gmra.mrb[0].mxu0 %v182
  %v636 = vpop.f32.mrb[0].mxu0
  %v637 = vadd.f32 0.0, %v636
  %v638 = vpop.f32.mrb[0].mxu0
  %v639 = vpop.f32.mrb[0].mxu0
  %v640 = vadd.f32 0.0, %v639
  %v641 = vpop.f32.mrb[0].mxu0
  %642 = vmatprep.mubr.bf16.mxu0 0
  %643 = vmatmul.mubr.bf16.gmra.mrb[0].mxu0 %v183
  %v644 = vpop.f32.mrb[0].mxu0
  %v645 = vadd.f32 0.0, %v644
  %v646 = vpop.f32.mrb[0].mxu0
  %v647 = vpop.f32.mrb[0].mxu0
  %v648 = vadd.f32 0.0, %v647
  %v649 = vpop.f32.mrb[0].mxu0
  %650 = vmatprep.mubr.bf16.mxu0 0
  %651 = vmatmul.mubr.bf16.gmra.mrb[0].mxu0 %v184
  %v652 = vpop.f32.mrb[0].mxu0
  %v653 = vadd.f32 0.0, %v652
  %v654 = vpop.f32.mrb[0].mxu0
  %v655 = vpop.f32.mrb[0].mxu0
  %v656 = vadd.f32 0.0, %v655
  %v657 = vpop.f32.mrb[0].mxu0
  %658 = vmatprep.mubr.bf16.mxu0 0
  %659 = vmatmul.mubr.bf16.gmra.mrb[0].mxu0 %v185
  %v660 = vpop.f32.mrb[0].mxu0
  %v661 = vadd.f32 0.0, %v660
  %v662 = vpop.f32.mrb[0].mxu0
  %v663 = vpop.f32.mrb[0].mxu0
  %v664 = vadd.f32 0.0, %v663
  %v665 = vpop.f32.mrb[0].mxu0
  %666 = vmatprep.mubr.bf16.mxu0 0
  %667 = vmatmul.mubr.bf16.gmra.mrb[0].mxu0 %v186
  %v668 = vpop.f32.mrb[0].mxu0
  %v669 = vadd.f32 0.0, %v668
  %v670 = vpop.f32.mrb[0].mxu0
  %v671 = vpop.f32.mrb[0].mxu0
  %v672 = vadd.f32 0.0, %v671
  %v673 = vpop.f32.mrb[0].mxu0
  %674 = vmatprep.mubr.bf16.mxu0 0
  %675 = vmatmul.mubr.bf16.gmra.mrb[0].mxu0 %v187
  %v676 = vpop.f32.mrb[0].mxu0
  %v677 = vadd.f32 0.0, %v676
  %v678 = vpop.f32.mrb[0].mxu0
  %v679 = vpop.f32.mrb[0].mxu0
  %v680 = vadd.f32 0.0, %v679
  %v681 = vpop.f32.mrb[0].mxu0
  %682 = vmatprep.mubr.bf16.mxu0 0
  %683 = vmatmul.mubr.bf16.gmra.mrb[0].mxu0 %v188
  %v684 = vpop.f32.mrb[0].mxu0
  %v685 = vadd.f32 0.0, %v684
  %v686 = vpop.f32.mrb[0].mxu0
  %v687 = vpop.f32.mrb[0].mxu0
  %v688 = vadd.f32 0.0, %v687
  %v689 = vpop.f32.mrb[0].mxu0
  %690 = vmatprep.mubr.bf16.mxu0 0
  %691 = vmatmul.mubr.bf16.gmra.mrb[0].mxu0 %v189
  %v692 = vpop.f32.mrb[0].mxu0
  %v693 = vadd.f32 0.0, %v692
  %v694 = vpop.f32.mrb[0].mxu0
  %v695 = vpop.f32.mrb[0].mxu0
  %v696 = vadd.f32 0.0, %v695
  %v697 = vpop.f32.mrb[0].mxu0
  %698 = vdwg.mxu0
  %v699 = vmax.f32 %v573, %v581
  %v700 = vmax.f32 %v699, %v589
  %v701 = vmax.f32 %v700, %v597
  %v702 = vmax.f32 %v701, %v605
  %v703 = vmax.f32 %v702, %v613
  %v704 = vmax.f32 %v703, %v621
  %v705 = vmax.f32 %v704, %v629
  %v706 = vmax.f32 %v576, %v584
  %v707 = vmax.f32 %v706, %v592
  %v708 = vmax.f32 %v707, %v600
  %v709 = vmax.f32 %v708, %v608
  %v710 = vmax.f32 %v709, %v616
  %v711 = vmax.f32 %v710, %v624
  %v712 = vmax.f32 %v711, %v632
  %v713 = vmax.f32 %v637, %v645
  %v714 = vmax.f32 %v713, %v653
  %v715 = vmax.f32 %v714, %v661
  %v716 = vmax.f32 %v715, %v669
  %v717 = vmax.f32 %v716, %v677
  %v718 = vmax.f32 %v717, %v685
  %v719 = vmax.f32 %v718, %v693
  %v720 = vmax.f32 %v640, %v648
  %v721 = vmax.f32 %v720, %v656
  %v722 = vmax.f32 %v721, %v664
  %v723 = vmax.f32 %v722, %v672
  %v724 = vmax.f32 %v723, %v680
  %v725 = vmax.f32 %v724, %v688
  %v726 = vmax.f32 %v725, %v696
  %v727 = vadd.f32 %v705, %v446
  %v728 = vadd.f32 %v712, %v451
  %v729 = vadd.f32 %v719, %v446
  %v730 = vadd.f32 %v726, %v451
  %vm731 = vcmp.gt.f32.partialorder %v727, 0.0
  %vm732 = vcmp.gt.f32.partialorder %v728, 0.0
  %vm733 = vcmp.gt.f32.partialorder %v729, 0.0
  %vm734 = vcmp.gt.f32.partialorder %v730, 0.0
  %v735 = vmul.f32 %v727, 0.01
  %v736 = vmul.f32 %v728, 0.01
  %v737 = vmul.f32 %v729, 0.01
  %v738 = vmul.f32 %v730, 0.01
  %v739 = vsel %vm731, %v727, %v735
  %v740 = vsel %vm732, %v728, %v736
  %v741 = vsel %vm733, %v729, %v737
  %v742 = vsel %vm734, %v730, %v738
  %743 = vst [vmem:[#allocation2 + $0x20] sm:$0xff] %v739
  %744 = vst [vmem:[#allocation2 + $0x28] sm:$0xff] %v740
  %745 = vst [vmem:[#allocation2 + $0x30] sm:$0xff] %v741
  %746 = vst [vmem:[#allocation2 + $0x38] sm:$0xff] %v742
  %s747 = scalar_lea.vmem %s0, 128
  %v748 = vld [vmem:[%s747] sm:$0xf]
  %v749 = vld [vmem:[%s747 + $0x4] sm:$0xf]
  %v750 = vld [vmem:[%s747 + $0x8] sm:$0xf]
  %v751 = vld [vmem:[%s747 + $0xc] sm:$0xf]
  %v752 = vld [vmem:[%s747 + $0x10] sm:$0xf]
  %v753 = vld [vmem:[%s747 + $0x14] sm:$0xf]
  %v754 = vld [vmem:[%s747 + $0x18] sm:$0xf]
  %v755 = vld [vmem:[%s747 + $0x1c] sm:$0xf]
  %v756 = vld [vmem:[%s747 + $0x20] sm:$0xf]
  %v757 = vld [vmem:[%s747 + $0x24] sm:$0xf]
  %v758 = vld [vmem:[%s747 + $0x28] sm:$0xf]
  %v759 = vld [vmem:[%s747 + $0x2c] sm:$0xf]
  %v760 = vld [vmem:[%s747 + $0x30] sm:$0xf]
  %v761 = vld [vmem:[%s747 + $0x34] sm:$0xf]
  %v762 = vld [vmem:[%s747 + $0x38] sm:$0xf]
  %v763 = vld [vmem:[%s747 + $0x3c] sm:$0xf]
  %v780 = vunpack.c.l.b16 %v748
  %v781 = vunpack.c.l.b16 %v749
  %v782 = vunpack.c.l.b16 %v750
  %v783 = vunpack.c.l.b16 %v751
  %v784 = vunpack.c.l.b16 %v752
  %v785 = vunpack.c.l.b16 %v753
  %v786 = vunpack.c.l.b16 %v754
  %v787 = vunpack.c.l.b16 %v755
  %v788 = vunpack.c.l.b16 %v756
  %v789 = vunpack.c.l.b16 %v757
  %v790 = vunpack.c.l.b16 %v758
  %v791 = vunpack.c.l.b16 %v759
  %v792 = vunpack.c.l.b16 %v760
  %v793 = vunpack.c.l.b16 %v761
  %v794 = vunpack.c.l.b16 %v762
  %v795 = vunpack.c.l.b16 %v763
  %v796 = vpack.c.b16 %v781, %v780
  %v797 = vpack.c.b16 %v783, %v782
  %v798 = vpack.c.b16 %v785, %v784
  %v799 = vpack.c.b16 %v787, %v786
  %v800 = vpack.c.b16 %v789, %v788
  %v801 = vpack.c.b16 %v791, %v790
  %v802 = vpack.c.b16 %v793, %v792
  %v803 = vpack.c.b16 %v795, %v794
  %812 = vmatprep.subr.bf16.mxu0 0
  %813 = vmatpush1.bf16.msra.mxu0 %v796
  %814 = vmatprep.subr.bf16.mxu0 0
  %815 = vmatpush1.bf16.msra.mxu0 %v797
  %816 = vmatprep.subr.bf16.mxu0 0
  %817 = vmatpush1.bf16.msra.mxu0 %v798
  %818 = vmatprep.subr.bf16.mxu0 0
  %819 = vmatpush1.bf16.msra.mxu0 %v799
  %820 = vmatprep.subr.bf16.mxu0 0
  %821 = vmatpush1.bf16.msra.mxu0 %v800
  %822 = vmatprep.subr.bf16.mxu0 0
  %823 = vmatpush1.bf16.msra.mxu0 %v801
  %824 = vmatprep.subr.bf16.mxu0 0
  %825 = vmatpush1.bf16.msra.mxu0 %v802
  %826 = vmatprep.subr.bf16.mxu0 0
  %827 = vmatpush1.bf16.msra.mxu0 %v803
  %828 = vmatprep.subr.bf16.mxu0 0
  %829 = vmatpush1.bf16.msra.mxu0 0
  %830 = vmatprep.subr.bf16.mxu0 0
  %831 = vmatpush1.bf16.msra.mxu0 0
  %832 = vmatprep.subr.bf16.mxu0 0
  %833 = vmatpush1.bf16.msra.mxu0 0
  %834 = vmatprep.subr.bf16.mxu0 0
  %835 = vmatpush1.bf16.msra.mxu0 0
  %836 = vmatprep.subr.bf16.mxu0 0
  %837 = vmatpush1.bf16.msra.mxu0 0
  %838 = vmatprep.subr.bf16.mxu0 0
  %839 = vmatpush1.bf16.msra.mxu0 0
  %840 = vmatprep.subr.bf16.mxu0 0
  %841 = vmatpush1.bf16.msra.mxu0 0
  %842 = vmatprep.subr.bf16.mxu0 0
  %843 = vmatpush1.bf16.msra.mxu0 0
  %844 = vmatprep.mubr.bf16.mxu0 0
  %845 = vmatmul.mubr.bf16.gmra.mrb[0].mxu0 %v174
  %v846 = vpop.f32.mrb[0].mxu0
  %v847 = vadd.f32 0.0, %v846
  %v848 = vpop.f32.mrb[0].mxu0
  %v849 = vpop.f32.mrb[0].mxu0
  %v850 = vadd.f32 0.0, %v849
  %v851 = vpop.f32.mrb[0].mxu0
  %852 = vmatprep.mubr.bf16.mxu0 0
  %853 = vmatmul.mubr.bf16.gmra.mrb[0].mxu0 %v175
  %v854 = vpop.f32.mrb[0].mxu0
  %v855 = vadd.f32 0.0, %v854
  %v856 = vpop.f32.mrb[0].mxu0
  %v857 = vpop.f32.mrb[0].mxu0
  %v858 = vadd.f32 0.0, %v857
  %v859 = vpop.f32.mrb[0].mxu0
  %860 = vmatprep.mubr.bf16.mxu0 0
  %861 = vmatmul.mubr.bf16.gmra.mrb[0].mxu0 %v176
  %v862 = vpop.f32.mrb[0].mxu0
  %v863 = vadd.f32 0.0, %v862
  %v864 = vpop.f32.mrb[0].mxu0
  %v865 = vpop.f32.mrb[0].mxu0
  %v866 = vadd.f32 0.0, %v865
  %v867 = vpop.f32.mrb[0].mxu0
  %868 = vmatprep.mubr.bf16.mxu0 0
  %869 = vmatmul.mubr.bf16.gmra.mrb[0].mxu0 %v177
  %v870 = vpop.f32.mrb[0].mxu0
  %v871 = vadd.f32 0.0, %v870
  %v872 = vpop.f32.mrb[0].mxu0
  %v873 = vpop.f32.mrb[0].mxu0
  %v874 = vadd.f32 0.0, %v873
  %v875 = vpop.f32.mrb[0].mxu0
  %876 = vmatprep.mubr.bf16.mxu0 0
  %877 = vmatmul.mubr.bf16.gmra.mrb[0].mxu0 %v178
  %v878 = vpop.f32.mrb[0].mxu0
  %v879 = vadd.f32 0.0, %v878
  %v880 = vpop.f32.mrb[0].mxu0
  %v881 = vpop.f32.mrb[0].mxu0
  %v882 = vadd.f32 0.0, %v881
  %v883 = vpop.f32.mrb[0].mxu0
  %884 = vmatprep.mubr.bf16.mxu0 0
  %885 = vmatmul.mubr.bf16.gmra.mrb[0].mxu0 %v179
  %v886 = vpop.f32.mrb[0].mxu0
  %v887 = vadd.f32 0.0, %v886
  %v888 = vpop.f32.mrb[0].mxu0
  %v889 = vpop.f32.mrb[0].mxu0
  %v890 = vadd.f32 0.0, %v889
  %v891 = vpop.f32.mrb[0].mxu0
  %892 = vmatprep.mubr.bf16.mxu0 0
  %893 = vmatmul.mubr.bf16.gmra.mrb[0].mxu0 %v180
  %v894 = vpop.f32.mrb[0].mxu0
  %v895 = vadd.f32 0.0, %v894
  %v896 = vpop.f32.mrb[0].mxu0
  %v897 = vpop.f32.mrb[0].mxu0
  %v898 = vadd.f32 0.0, %v897
  %v899 = vpop.f32.mrb[0].mxu0
  %900 = vmatprep.mubr.bf16.mxu0 0
  %901 = vmatmul.mubr.bf16.gmra.mrb[0].mxu0 %v181
  %v902 = vpop.f32.mrb[0].mxu0
  %v903 = vadd.f32 0.0, %v902
  %v904 = vpop.f32.mrb[0].mxu0
  %v905 = vpop.f32.mrb[0].mxu0
  %v906 = vadd.f32 0.0, %v905
  %v907 = vpop.f32.mrb[0].mxu0
  %908 = vmatprep.mubr.bf16.mxu0 0
  %909 = vmatmul.mubr.bf16.gmra.mrb[0].mxu0 %v182
  %v910 = vpop.f32.mrb[0].mxu0
  %v911 = vadd.f32 0.0, %v910
  %v912 = vpop.f32.mrb[0].mxu0
  %v913 = vpop.f32.mrb[0].mxu0
  %v914 = vadd.f32 0.0, %v913
  %v915 = vpop.f32.mrb[0].mxu0
  %916 = vmatprep.mubr.bf16.mxu0 0
  %917 = vmatmul.mubr.bf16.gmra.mrb[0].mxu0 %v183
  %v918 = vpop.f32.mrb[0].mxu0
  %v919 = vadd.f32 0.0, %v918
  %v920 = vpop.f32.mrb[0].mxu0
  %v921 = vpop.f32.mrb[0].mxu0
  %v922 = vadd.f32 0.0, %v921
  %v923 = vpop.f32.mrb[0].mxu0
  %924 = vmatprep.mubr.bf16.mxu0 0
  %925 = vmatmul.mubr.bf16.gmra.mrb[0].mxu0 %v184
  %v926 = vpop.f32.mrb[0].mxu0
  %v927 = vadd.f32 0.0, %v926
  %v928 = vpop.f32.mrb[0].mxu0
  %v929 = vpop.f32.mrb[0].mxu0
  %v930 = vadd.f32 0.0, %v929
  %v931 = vpop.f32.mrb[0].mxu0
  %932 = vmatprep.mubr.bf16.mxu0 0
  %933 = vmatmul.mubr.bf16.gmra.mrb[0].mxu0 %v185
  %v934 = vpop.f32.mrb[0].mxu0
  %v935 = vadd.f32 0.0, %v934
  %v936 = vpop.f32.mrb[0].mxu0
  %v937 = vpop.f32.mrb[0].mxu0
  %v938 = vadd.f32 0.0, %v937
  %v939 = vpop.f32.mrb[0].mxu0
  %940 = vmatprep.mubr.bf16.mxu0 0
  %941 = vmatmul.mubr.bf16.gmra.mrb[0].mxu0 %v186
  %v942 = vpop.f32.mrb[0].mxu0
  %v943 = vadd.f32 0.0, %v942
  %v944 = vpop.f32.mrb[0].mxu0
  %v945 = vpop.f32.mrb[0].mxu0
  %v946 = vadd.f32 0.0, %v945
  %v947 = vpop.f32.mrb[0].mxu0
  %948 = vmatprep.mubr.bf16.mxu0 0
  %949 = vmatmul.mubr.bf16.gmra.mrb[0].mxu0 %v187
  %v950 = vpop.f32.mrb[0].mxu0
  %v951 = vadd.f32 0.0, %v950
  %v952 = vpop.f32.mrb[0].mxu0
  %v953 = vpop.f32.mrb[0].mxu0
  %v954 = vadd.f32 0.0, %v953
  %v955 = vpop.f32.mrb[0].mxu0
  %956 = vmatprep.mubr.bf16.mxu0 0
  %957 = vmatmul.mubr.bf16.gmra.mrb[0].mxu0 %v188
  %v958 = vpop.f32.mrb[0].mxu0
  %v959 = vadd.f32 0.0, %v958
  %v960 = vpop.f32.mrb[0].mxu0
  %v961 = vpop.f32.mrb[0].mxu0
  %v962 = vadd.f32 0.0, %v961
  %v963 = vpop.f32.mrb[0].mxu0
  %964 = vmatprep.mubr.bf16.mxu0 0
  %965 = vmatmul.mubr.bf16.gmra.mrb[0].mxu0 %v189
  %v966 = vpop.f32.mrb[0].mxu0
  %v967 = vadd.f32 0.0, %v966
  %v968 = vpop.f32.mrb[0].mxu0
  %v969 = vpop.f32.mrb[0].mxu0
  %v970 = vadd.f32 0.0, %v969
  %v971 = vpop.f32.mrb[0].mxu0
  %972 = vdwg.mxu0
  %v973 = vmax.f32 %v847, %v855
  %v974 = vmax.f32 %v973, %v863
  %v975 = vmax.f32 %v974, %v871
  %v976 = vmax.f32 %v975, %v879
  %v977 = vmax.f32 %v976, %v887
  %v978 = vmax.f32 %v977, %v895
  %v979 = vmax.f32 %v978, %v903
  %v980 = vmax.f32 %v850, %v858
  %v981 = vmax.f32 %v980, %v866
  %v982 = vmax.f32 %v981, %v874
  %v983 = vmax.f32 %v982, %v882
  %v984 = vmax.f32 %v983, %v890
  %v985 = vmax.f32 %v984, %v898
  %v986 = vmax.f32 %v985, %v906
  %v987 = vmax.f32 %v911, %v919
  %v988 = vmax.f32 %v987, %v927
  %v989 = vmax.f32 %v988, %v935
  %v990 = vmax.f32 %v989, %v943
  %v991 = vmax.f32 %v990, %v951
  %v992 = vmax.f32 %v991, %v959
  %v993 = vmax.f32 %v992, %v967
  %v994 = vmax.f32 %v914, %v922
  %v995 = vmax.f32 %v994, %v930
  %v996 = vmax.f32 %v995, %v938
  %v997 = vmax.f32 %v996, %v946
  %v998 = vmax.f32 %v997, %v954
  %v999 = vmax.f32 %v998, %v962
  %v1000 = vmax.f32 %v999, %v970
  %v1001 = vadd.f32 %v979, %v446
  %v1002 = vadd.f32 %v986, %v451
  %v1003 = vadd.f32 %v993, %v446
  %v1004 = vadd.f32 %v1000, %v451
  %vm1005 = vcmp.gt.f32.partialorder %v1001, 0.0
  %vm1006 = vcmp.gt.f32.partialorder %v1002, 0.0
  %vm1007 = vcmp.gt.f32.partialorder %v1003, 0.0
  %vm1008 = vcmp.gt.f32.partialorder %v1004, 0.0
  %v1009 = vmul.f32 %v1001, 0.01
  %v1010 = vmul.f32 %v1002, 0.01
  %v1011 = vmul.f32 %v1003, 0.01
  %v1012 = vmul.f32 %v1004, 0.01
  %v1013 = vsel %vm1005, %v1001, %v1009
  %v1014 = vsel %vm1006, %v1002, %v1010
  %v1015 = vsel %vm1007, %v1003, %v1011
  %v1016 = vsel %vm1008, %v1004, %v1012
  %1017 = vst [vmem:[#allocation2 + $0x40] sm:$0xff] %v1013
  %1018 = vst [vmem:[#allocation2 + $0x48] sm:$0xff] %v1014
  %1019 = vst [vmem:[#allocation2 + $0x50] sm:$0xff] %v1015
  %1020 = vst [vmem:[#allocation2 + $0x58] sm:$0xff] %v1016
  %s1021 = scalar_lea.vmem %s0, 192
  %v1022 = vld [vmem:[%s1021] sm:$0xf]
  %v1023 = vld [vmem:[%s1021 + $0x4] sm:$0xf]
  %v1024 = vld [vmem:[%s1021 + $0x8] sm:$0xf]
  %v1025 = vld [vmem:[%s1021 + $0xc] sm:$0xf]
  %v1026 = vld [vmem:[%s1021 + $0x10] sm:$0xf]
  %v1027 = vld [vmem:[%s1021 + $0x14] sm:$0xf]
  %v1028 = vld [vmem:[%s1021 + $0x18] sm:$0xf]
  %v1029 = vld [vmem:[%s1021 + $0x1c] sm:$0xf]
  %v1030 = vld [vmem:[%s1021 + $0x20] sm:$0xf]
  %v1031 = vld [vmem:[%s1021 + $0x24] sm:$0xf]
  %v1032 = vld [vmem:[%s1021 + $0x28] sm:$0xf]
  %v1033 = vld [vmem:[%s1021 + $0x2c] sm:$0xf]
  %v1034 = vld [vmem:[%s1021 + $0x30] sm:$0xf]
  %v1035 = vld [vmem:[%s1021 + $0x34] sm:$0xf]
  %v1036 = vld [vmem:[%s1021 + $0x38] sm:$0xf]
  %v1037 = vld [vmem:[%s1021 + $0x3c] sm:$0xf]
  %v1054 = vunpack.c.l.b16 %v1022
  %v1055 = vunpack.c.l.b16 %v1023
  %v1056 = vunpack.c.l.b16 %v1024
  %v1057 = vunpack.c.l.b16 %v1025
  %v1058 = vunpack.c.l.b16 %v1026
  %v1059 = vunpack.c.l.b16 %v1027
  %v1060 = vunpack.c.l.b16 %v1028
  %v1061 = vunpack.c.l.b16 %v1029
  %v1062 = vunpack.c.l.b16 %v1030
  %v1063 = vunpack.c.l.b16 %v1031
  %v1064 = vunpack.c.l.b16 %v1032
  %v1065 = vunpack.c.l.b16 %v1033
  %v1066 = vunpack.c.l.b16 %v1034
  %v1067 = vunpack.c.l.b16 %v1035
  %v1068 = vunpack.c.l.b16 %v1036
  %v1069 = vunpack.c.l.b16 %v1037
  %v1070 = vpack.c.b16 %v1055, %v1054
  %v1071 = vpack.c.b16 %v1057, %v1056
  %v1072 = vpack.c.b16 %v1059, %v1058
  %v1073 = vpack.c.b16 %v1061, %v1060
  %v1074 = vpack.c.b16 %v1063, %v1062
  %v1075 = vpack.c.b16 %v1065, %v1064
  %v1076 = vpack.c.b16 %v1067, %v1066
  %v1077 = vpack.c.b16 %v1069, %v1068
  %1086 = vmatprep.subr.bf16.mxu0 0
  %1087 = vmatpush1.bf16.msra.mxu0 %v1070
  %1088 = vmatprep.subr.bf16.mxu0 0
  %1089 = vmatpush1.bf16.msra.mxu0 %v1071
  %1090 = vmatprep.subr.bf16.mxu0 0
  %1091 = vmatpush1.bf16.msra.mxu0 %v1072
  %1092 = vmatprep.subr.bf16.mxu0 0
  %1093 = vmatpush1.bf16.msra.mxu0 %v1073
  %1094 = vmatprep.subr.bf16.mxu0 0
  %1095 = vmatpush1.bf16.msra.mxu0 %v1074
  %1096 = vmatprep.subr.bf16.mxu0 0
  %1097 = vmatpush1.bf16.msra.mxu0 %v1075
  %1098 = vmatprep.subr.bf16.mxu0 0
  %1099 = vmatpush1.bf16.msra.mxu0 %v1076
  %1100 = vmatprep.subr.bf16.mxu0 0
  %1101 = vmatpush1.bf16.msra.mxu0 %v1077
  %1102 = vmatprep.subr.bf16.mxu0 0
  %1103 = vmatpush1.bf16.msra.mxu0 0
  %1104 = vmatprep.subr.bf16.mxu0 0
  %1105 = vmatpush1.bf16.msra.mxu0 0
  %1106 = vmatprep.subr.bf16.mxu0 0
  %1107 = vmatpush1.bf16.msra.mxu0 0
  %1108 = vmatprep.subr.bf16.mxu0 0
  %1109 = vmatpush1.bf16.msra.mxu0 0
  %1110 = vmatprep.subr.bf16.mxu0 0
  %1111 = vmatpush1.bf16.msra.mxu0 0
  %1112 = vmatprep.subr.bf16.mxu0 0
  %1113 = vmatpush1.bf16.msra.mxu0 0
  %1114 = vmatprep.subr.bf16.mxu0 0
  %1115 = vmatpush1.bf16.msra.mxu0 0
  %1116 = vmatprep.subr.bf16.mxu0 0
  %1117 = vmatpush1.bf16.msra.mxu0 0
  %1118 = vmatprep.mubr.bf16.mxu0 0
  %1119 = vmatmul.mubr.bf16.gmra.mrb[0].mxu0 %v174
  %v1120 = vpop.f32.mrb[0].mxu0
  %v1121 = vadd.f32 0.0, %v1120
  %v1122 = vpop.f32.mrb[0].mxu0
  %v1123 = vpop.f32.mrb[0].mxu0
  %v1124 = vadd.f32 0.0, %v1123
  %v1125 = vpop.f32.mrb[0].mxu0
  %1126 = vmatprep.mubr.bf16.mxu0 0
  %1127 = vmatmul.mubr.bf16.gmra.mrb[0].mxu0 %v175
  %v1128 = vpop.f32.mrb[0].mxu0
  %v1129 = vadd.f32 0.0, %v1128
  %v1130 = vpop.f32.mrb[0].mxu0
  %v1131 = vpop.f32.mrb[0].mxu0
  %v1132 = vadd.f32 0.0, %v1131
  %v1133 = vpop.f32.mrb[0].mxu0
  %1134 = vmatprep.mubr.bf16.mxu0 0
  %1135 = vmatmul.mubr.bf16.gmra.mrb[0].mxu0 %v176
  %v1136 = vpop.f32.mrb[0].mxu0
  %v1137 = vadd.f32 0.0, %v1136
  %v1138 = vpop.f32.mrb[0].mxu0
  %v1139 = vpop.f32.mrb[0].mxu0
  %v1140 = vadd.f32 0.0, %v1139
  %v1141 = vpop.f32.mrb[0].mxu0
  %1142 = vmatprep.mubr.bf16.mxu0 0
  %1143 = vmatmul.mubr.bf16.gmra.mrb[0].mxu0 %v177
  %v1144 = vpop.f32.mrb[0].mxu0
  %v1145 = vadd.f32 0.0, %v1144
  %v1146 = vpop.f32.mrb[0].mxu0
  %v1147 = vpop.f32.mrb[0].mxu0
  %v1148 = vadd.f32 0.0, %v1147
  %v1149 = vpop.f32.mrb[0].mxu0
  %1150 = vmatprep.mubr.bf16.mxu0 0
  %1151 = vmatmul.mubr.bf16.gmra.mrb[0].mxu0 %v178
  %v1152 = vpop.f32.mrb[0].mxu0
  %v1153 = vadd.f32 0.0, %v1152
  %v1154 = vpop.f32.mrb[0].mxu0
  %v1155 = vpop.f32.mrb[0].mxu0
  %v1156 = vadd.f32 0.0, %v1155
  %v1157 = vpop.f32.mrb[0].mxu0
  %1158 = vmatprep.mubr.bf16.mxu0 0
  %1159 = vmatmul.mubr.bf16.gmra.mrb[0].mxu0 %v179
  %v1160 = vpop.f32.mrb[0].mxu0
  %v1161 = vadd.f32 0.0, %v1160
  %v1162 = vpop.f32.mrb[0].mxu0
  %v1163 = vpop.f32.mrb[0].mxu0
  %v1164 = vadd.f32 0.0, %v1163
  %v1165 = vpop.f32.mrb[0].mxu0
  %1166 = vmatprep.mubr.bf16.mxu0 0
  %1167 = vmatmul.mubr.bf16.gmra.mrb[0].mxu0 %v180
  %v1168 = vpop.f32.mrb[0].mxu0
  %v1169 = vadd.f32 0.0, %v1168
  %v1170 = vpop.f32.mrb[0].mxu0
  %v1171 = vpop.f32.mrb[0].mxu0
  %v1172 = vadd.f32 0.0, %v1171
  %v1173 = vpop.f32.mrb[0].mxu0
  %1174 = vmatprep.mubr.bf16.mxu0 0
  %1175 = vmatmul.mubr.bf16.gmra.mrb[0].mxu0 %v181
  %v1176 = vpop.f32.mrb[0].mxu0
  %v1177 = vadd.f32 0.0, %v1176
  %v1178 = vpop.f32.mrb[0].mxu0
  %v1179 = vpop.f32.mrb[0].mxu0
  %v1180 = vadd.f32 0.0, %v1179
  %v1181 = vpop.f32.mrb[0].mxu0
  %1182 = vmatprep.mubr.bf16.mxu0 0
  %1183 = vmatmul.mubr.bf16.gmra.mrb[0].mxu0 %v182
  %v1184 = vpop.f32.mrb[0].mxu0
  %v1185 = vadd.f32 0.0, %v1184
  %v1186 = vpop.f32.mrb[0].mxu0
  %v1187 = vpop.f32.mrb[0].mxu0
  %v1188 = vadd.f32 0.0, %v1187
  %v1189 = vpop.f32.mrb[0].mxu0
  %1190 = vmatprep.mubr.bf16.mxu0 0
  %1191 = vmatmul.mubr.bf16.gmra.mrb[0].mxu0 %v183
  %v1192 = vpop.f32.mrb[0].mxu0
  %v1193 = vadd.f32 0.0, %v1192
  %v1194 = vpop.f32.mrb[0].mxu0
  %v1195 = vpop.f32.mrb[0].mxu0
  %v1196 = vadd.f32 0.0, %v1195
  %v1197 = vpop.f32.mrb[0].mxu0
  %1198 = vmatprep.mubr.bf16.mxu0 0
  %1199 = vmatmul.mubr.bf16.gmra.mrb[0].mxu0 %v184
  %v1200 = vpop.f32.mrb[0].mxu0
  %v1201 = vadd.f32 0.0, %v1200
  %v1202 = vpop.f32.mrb[0].mxu0
  %v1203 = vpop.f32.mrb[0].mxu0
  %v1204 = vadd.f32 0.0, %v1203
  %v1205 = vpop.f32.mrb[0].mxu0
  %1206 = vmatprep.mubr.bf16.mxu0 0
  %1207 = vmatmul.mubr.bf16.gmra.mrb[0].mxu0 %v185
  %v1208 = vpop.f32.mrb[0].mxu0
  %v1209 = vadd.f32 0.0, %v1208
  %v1210 = vpop.f32.mrb[0].mxu0
  %v1211 = vpop.f32.mrb[0].mxu0
  %v1212 = vadd.f32 0.0, %v1211
  %v1213 = vpop.f32.mrb[0].mxu0
  %1214 = vmatprep.mubr.bf16.mxu0 0
  %1215 = vmatmul.mubr.bf16.gmra.mrb[0].mxu0 %v186
  %v1216 = vpop.f32.mrb[0].mxu0
  %v1217 = vadd.f32 0.0, %v1216
  %v1218 = vpop.f32.mrb[0].mxu0
  %v1219 = vpop.f32.mrb[0].mxu0
  %v1220 = vadd.f32 0.0, %v1219
  %v1221 = vpop.f32.mrb[0].mxu0
  %1222 = vmatprep.mubr.bf16.mxu0 0
  %1223 = vmatmul.mubr.bf16.gmra.mrb[0].mxu0 %v187
  %v1224 = vpop.f32.mrb[0].mxu0
  %v1225 = vadd.f32 0.0, %v1224
  %v1226 = vpop.f32.mrb[0].mxu0
  %v1227 = vpop.f32.mrb[0].mxu0
  %v1228 = vadd.f32 0.0, %v1227
  %v1229 = vpop.f32.mrb[0].mxu0
  %1230 = vmatprep.mubr.bf16.mxu0 0
  %1231 = vmatmul.mubr.bf16.gmra.mrb[0].mxu0 %v188
  %v1232 = vpop.f32.mrb[0].mxu0
  %v1233 = vadd.f32 0.0, %v1232
  %v1234 = vpop.f32.mrb[0].mxu0
  %v1235 = vpop.f32.mrb[0].mxu0
  %v1236 = vadd.f32 0.0, %v1235
  %v1237 = vpop.f32.mrb[0].mxu0
  %1238 = vmatprep.mubr.bf16.mxu0 0
  %1239 = vmatmul.mubr.bf16.gmra.mrb[0].mxu0 %v189
  %v1240 = vpop.f32.mrb[0].mxu0
  %v1241 = vadd.f32 0.0, %v1240
  %v1242 = vpop.f32.mrb[0].mxu0
  %v1243 = vpop.f32.mrb[0].mxu0
  %v1244 = vadd.f32 0.0, %v1243
  %v1245 = vpop.f32.mrb[0].mxu0
  %1246 = vdwg.mxu0
  %v1247 = vmax.f32 %v1121, %v1129
  %v1248 = vmax.f32 %v1247, %v1137
  %v1249 = vmax.f32 %v1248, %v1145
  %v1250 = vmax.f32 %v1249, %v1153
  %v1251 = vmax.f32 %v1250, %v1161
  %v1252 = vmax.f32 %v1251, %v1169
  %v1253 = vmax.f32 %v1252, %v1177
  %v1254 = vmax.f32 %v1124, %v1132
  %v1255 = vmax.f32 %v1254, %v1140
  %v1256 = vmax.f32 %v1255, %v1148
  %v1257 = vmax.f32 %v1256, %v1156
  %v1258 = vmax.f32 %v1257, %v1164
  %v1259 = vmax.f32 %v1258, %v1172
  %v1260 = vmax.f32 %v1259, %v1180
  %v1261 = vmax.f32 %v1185, %v1193
  %v1262 = vmax.f32 %v1261, %v1201
  %v1263 = vmax.f32 %v1262, %v1209
  %v1264 = vmax.f32 %v1263, %v1217
  %v1265 = vmax.f32 %v1264, %v1225
  %v1266 = vmax.f32 %v1265, %v1233
  %v1267 = vmax.f32 %v1266, %v1241
  %v1268 = vmax.f32 %v1188, %v1196
  %v1269 = vmax.f32 %v1268, %v1204
  %v1270 = vmax.f32 %v1269, %v1212
  %v1271 = vmax.f32 %v1270, %v1220
  %v1272 = vmax.f32 %v1271, %v1228
  %v1273 = vmax.f32 %v1272, %v1236
  %v1274 = vmax.f32 %v1273, %v1244
  %v1275 = vadd.f32 %v1253, %v446
  %v1276 = vadd.f32 %v1260, %v451
  %v1277 = vadd.f32 %v1267, %v446
  %v1278 = vadd.f32 %v1274, %v451
  %vm1279 = vcmp.gt.f32.partialorder %v1275, 0.0
  %vm1280 = vcmp.gt.f32.partialorder %v1276, 0.0
  %vm1281 = vcmp.gt.f32.partialorder %v1277, 0.0
  %vm1282 = vcmp.gt.f32.partialorder %v1278, 0.0
  %v1283 = vmul.f32 %v1275, 0.01
  %v1284 = vmul.f32 %v1276, 0.01
  %v1285 = vmul.f32 %v1277, 0.01
  %v1286 = vmul.f32 %v1278, 0.01
  %v1287 = vsel %vm1279, %v1275, %v1283
  %v1288 = vsel %vm1280, %v1276, %v1284
  %v1289 = vsel %vm1281, %v1277, %v1285
  %v1290 = vsel %vm1282, %v1278, %v1286
  %1291 = vst [vmem:[#allocation2 + $0x60] sm:$0xff] %v1287
  %1292 = vst [vmem:[#allocation2 + $0x68] sm:$0xff] %v1288
  %1293 = vst [vmem:[#allocation2 + $0x70] sm:$0xff] %v1289
  %1294 = vst [vmem:[#allocation2 + $0x78] sm:$0xff] %v1290
  %s1295 = scalar_lea.vmem %s0, 256
  %v1296 = vld [vmem:[%s1295] sm:$0xf]
  %v1297 = vld [vmem:[%s1295 + $0x4] sm:$0xf]
  %v1298 = vld [vmem:[%s1295 + $0x8] sm:$0xf]
  %v1299 = vld [vmem:[%s1295 + $0xc] sm:$0xf]
  %v1300 = vld [vmem:[%s1295 + $0x10] sm:$0xf]
  %v1301 = vld [vmem:[%s1295 + $0x14] sm:$0xf]
  %v1302 = vld [vmem:[%s1295 + $0x18] sm:$0xf]
  %v1303 = vld [vmem:[%s1295 + $0x1c] sm:$0xf]
  %v1304 = vld [vmem:[%s1295 + $0x20] sm:$0xf]
  %v1305 = vld [vmem:[%s1295 + $0x24] sm:$0xf]
  %v1306 = vld [vmem:[%s1295 + $0x28] sm:$0xf]
  %v1307 = vld [vmem:[%s1295 + $0x2c] sm:$0xf]
  %v1308 = vld [vmem:[%s1295 + $0x30] sm:$0xf]
  %v1309 = vld [vmem:[%s1295 + $0x34] sm:$0xf]
  %v1310 = vld [vmem:[%s1295 + $0x38] sm:$0xf]
  %v1311 = vld [vmem:[%s1295 + $0x3c] sm:$0xf]
  %v1328 = vunpack.c.l.b16 %v1296
  %v1329 = vunpack.c.l.b16 %v1297
  %v1330 = vunpack.c.l.b16 %v1298
  %v1331 = vunpack.c.l.b16 %v1299
  %v1332 = vunpack.c.l.b16 %v1300
  %v1333 = vunpack.c.l.b16 %v1301
  %v1334 = vunpack.c.l.b16 %v1302
  %v1335 = vunpack.c.l.b16 %v1303
  %v1336 = vunpack.c.l.b16 %v1304
  %v1337 = vunpack.c.l.b16 %v1305
  %v1338 = vunpack.c.l.b16 %v1306
  %v1339 = vunpack.c.l.b16 %v1307
  %v1340 = vunpack.c.l.b16 %v1308
  %v1341 = vunpack.c.l.b16 %v1309
  %v1342 = vunpack.c.l.b16 %v1310
  %v1343 = vunpack.c.l.b16 %v1311
  %v1344 = vpack.c.b16 %v1329, %v1328
  %v1345 = vpack.c.b16 %v1331, %v1330
  %v1346 = vpack.c.b16 %v1333, %v1332
  %v1347 = vpack.c.b16 %v1335, %v1334
  %v1348 = vpack.c.b16 %v1337, %v1336
  %v1349 = vpack.c.b16 %v1339, %v1338
  %v1350 = vpack.c.b16 %v1341, %v1340
  %v1351 = vpack.c.b16 %v1343, %v1342
  %1360 = vmatprep.subr.bf16.mxu0 0
  %1361 = vmatpush1.bf16.msra.mxu0 %v1344
  %1362 = vmatprep.subr.bf16.mxu0 0
  %1363 = vmatpush1.bf16.msra.mxu0 %v1345
  %1364 = vmatprep.subr.bf16.mxu0 0
  %1365 = vmatpush1.bf16.msra.mxu0 %v1346
  %1366 = vmatprep.subr.bf16.mxu0 0
  %1367 = vmatpush1.bf16.msra.mxu0 %v1347
  %1368 = vmatprep.subr.bf16.mxu0 0
  %1369 = vmatpush1.bf16.msra.mxu0 %v1348
  %1370 = vmatprep.subr.bf16.mxu0 0
  %1371 = vmatpush1.bf16.msra.mxu0 %v1349
  %1372 = vmatprep.subr.bf16.mxu0 0
  %1373 = vmatpush1.bf16.msra.mxu0 %v1350
  %1374 = vmatprep.subr.bf16.mxu0 0
  %1375 = vmatpush1.bf16.msra.mxu0 %v1351
  %1376 = vmatprep.subr.bf16.mxu0 0
  %1377 = vmatpush1.bf16.msra.mxu0 0
  %1378 = vmatprep.subr.bf16.mxu0 0
  %1379 = vmatpush1.bf16.msra.mxu0 0
  %1380 = vmatprep.subr.bf16.mxu0 0
  %1381 = vmatpush1.bf16.msra.mxu0 0
  %1382 = vmatprep.subr.bf16.mxu0 0
  %1383 = vmatpush1.bf16.msra.mxu0 0
  %1384 = vmatprep.subr.bf16.mxu0 0
  %1385 = vmatpush1.bf16.msra.mxu0 0
  %1386 = vmatprep.subr.bf16.mxu0 0
  %1387 = vmatpush1.bf16.msra.mxu0 0
  %1388 = vmatprep.subr.bf16.mxu0 0
  %1389 = vmatpush1.bf16.msra.mxu0 0
  %1390 = vmatprep.subr.bf16.mxu0 0
  %1391 = vmatpush1.bf16.msra.mxu0 0
  %1392 = vmatprep.mubr.bf16.mxu0 0
  %1393 = vmatmul.mubr.bf16.gmra.mrb[0].mxu0 %v174
  %v1394 = vpop.f32.mrb[0].mxu0
  %v1395 = vadd.f32 0.0, %v1394
  %v1396 = vpop.f32.mrb[0].mxu0
  %v1397 = vpop.f32.mrb[0].mxu0
  %v1398 = vadd.f32 0.0, %v1397
  %v1399 = vpop.f32.mrb[0].mxu0
  %1400 = vmatprep.mubr.bf16.mxu0 0
  %1401 = vmatmul.mubr.bf16.gmra.mrb[0].mxu0 %v175
  %v1402 = vpop.f32.mrb[0].mxu0
  %v1403 = vadd.f32 0.0, %v1402
  %v1404 = vpop.f32.mrb[0].mxu0
  %v1405 = vpop.f32.mrb[0].mxu0
  %v1406 = vadd.f32 0.0, %v1405
  %v1407 = vpop.f32.mrb[0].mxu0
  %1408 = vmatprep.mubr.bf16.mxu0 0
  %1409 = vmatmul.mubr.bf16.gmra.mrb[0].mxu0 %v176
  %v1410 = vpop.f32.mrb[0].mxu0
  %v1411 = vadd.f32 0.0, %v1410
  %v1412 = vpop.f32.mrb[0].mxu0
  %v1413 = vpop.f32.mrb[0].mxu0
  %v1414 = vadd.f32 0.0, %v1413
  %v1415 = vpop.f32.mrb[0].mxu0
  %1416 = vmatprep.mubr.bf16.mxu0 0
  %1417 = vmatmul.mubr.bf16.gmra.mrb[0].mxu0 %v177
  %v1418 = vpop.f32.mrb[0].mxu0
  %v1419 = vadd.f32 0.0, %v1418
  %v1420 = vpop.f32.mrb[0].mxu0
  %v1421 = vpop.f32.mrb[0].mxu0
  %v1422 = vadd.f32 0.0, %v1421
  %v1423 = vpop.f32.mrb[0].mxu0
  %1424 = vmatprep.mubr.bf16.mxu0 0
  %1425 = vmatmul.mubr.bf16.gmra.mrb[0].mxu0 %v178
  %v1426 = vpop.f32.mrb[0].mxu0
  %v1427 = vadd.f32 0.0, %v1426
  %v1428 = vpop.f32.mrb[0].mxu0
  %v1429 = vpop.f32.mrb[0].mxu0
  %v1430 = vadd.f32 0.0, %v1429
  %v1431 = vpop.f32.mrb[0].mxu0
  %1432 = vmatprep.mubr.bf16.mxu0 0
  %1433 = vmatmul.mubr.bf16.gmra.mrb[0].mxu0 %v179
  %v1434 = vpop.f32.mrb[0].mxu0
  %v1435 = vadd.f32 0.0, %v1434
  %v1436 = vpop.f32.mrb[0].mxu0
  %v1437 = vpop.f32.mrb[0].mxu0
  %v1438 = vadd.f32 0.0, %v1437
  %v1439 = vpop.f32.mrb[0].mxu0
  %1440 = vmatprep.mubr.bf16.mxu0 0
  %1441 = vmatmul.mubr.bf16.gmra.mrb[0].mxu0 %v180
  %v1442 = vpop.f32.mrb[0].mxu0
  %v1443 = vadd.f32 0.0, %v1442
  %v1444 = vpop.f32.mrb[0].mxu0
  %v1445 = vpop.f32.mrb[0].mxu0
  %v1446 = vadd.f32 0.0, %v1445
  %v1447 = vpop.f32.mrb[0].mxu0
  %1448 = vmatprep.mubr.bf16.mxu0 0
  %1449 = vmatmul.mubr.bf16.gmra.mrb[0].mxu0 %v181
  %v1450 = vpop.f32.mrb[0].mxu0
  %v1451 = vadd.f32 0.0, %v1450
  %v1452 = vpop.f32.mrb[0].mxu0
  %v1453 = vpop.f32.mrb[0].mxu0
  %v1454 = vadd.f32 0.0, %v1453
  %v1455 = vpop.f32.mrb[0].mxu0
  %1456 = vmatprep.mubr.bf16.mxu0 0
  %1457 = vmatmul.mubr.bf16.gmra.mrb[0].mxu0 %v182
  %v1458 = vpop.f32.mrb[0].mxu0
  %v1459 = vadd.f32 0.0, %v1458
  %v1460 = vpop.f32.mrb[0].mxu0
  %v1461 = vpop.f32.mrb[0].mxu0
  %v1462 = vadd.f32 0.0, %v1461
  %v1463 = vpop.f32.mrb[0].mxu0
  %1464 = vmatprep.mubr.bf16.mxu0 0
  %1465 = vmatmul.mubr.bf16.gmra.mrb[0].mxu0 %v183
  %v1466 = vpop.f32.mrb[0].mxu0
  %v1467 = vadd.f32 0.0, %v1466
  %v1468 = vpop.f32.mrb[0].mxu0
  %v1469 = vpop.f32.mrb[0].mxu0
  %v1470 = vadd.f32 0.0, %v1469
  %v1471 = vpop.f32.mrb[0].mxu0
  %1472 = vmatprep.mubr.bf16.mxu0 0
  %1473 = vmatmul.mubr.bf16.gmra.mrb[0].mxu0 %v184
  %v1474 = vpop.f32.mrb[0].mxu0
  %v1475 = vadd.f32 0.0, %v1474
  %v1476 = vpop.f32.mrb[0].mxu0
  %v1477 = vpop.f32.mrb[0].mxu0
  %v1478 = vadd.f32 0.0, %v1477
  %v1479 = vpop.f32.mrb[0].mxu0
  %1480 = vmatprep.mubr.bf16.mxu0 0
  %1481 = vmatmul.mubr.bf16.gmra.mrb[0].mxu0 %v185
  %v1482 = vpop.f32.mrb[0].mxu0
  %v1483 = vadd.f32 0.0, %v1482
  %v1484 = vpop.f32.mrb[0].mxu0
  %v1485 = vpop.f32.mrb[0].mxu0
  %v1486 = vadd.f32 0.0, %v1485
  %v1487 = vpop.f32.mrb[0].mxu0
  %1488 = vmatprep.mubr.bf16.mxu0 0
  %1489 = vmatmul.mubr.bf16.gmra.mrb[0].mxu0 %v186
  %v1490 = vpop.f32.mrb[0].mxu0
  %v1491 = vadd.f32 0.0, %v1490
  %v1492 = vpop.f32.mrb[0].mxu0
  %v1493 = vpop.f32.mrb[0].mxu0
  %v1494 = vadd.f32 0.0, %v1493
  %v1495 = vpop.f32.mrb[0].mxu0
  %1496 = vmatprep.mubr.bf16.mxu0 0
  %1497 = vmatmul.mubr.bf16.gmra.mrb[0].mxu0 %v187
  %v1498 = vpop.f32.mrb[0].mxu0
  %v1499 = vadd.f32 0.0, %v1498
  %v1500 = vpop.f32.mrb[0].mxu0
  %v1501 = vpop.f32.mrb[0].mxu0
  %v1502 = vadd.f32 0.0, %v1501
  %v1503 = vpop.f32.mrb[0].mxu0
  %1504 = vmatprep.mubr.bf16.mxu0 0
  %1505 = vmatmul.mubr.bf16.gmra.mrb[0].mxu0 %v188
  %v1506 = vpop.f32.mrb[0].mxu0
  %v1507 = vadd.f32 0.0, %v1506
  %v1508 = vpop.f32.mrb[0].mxu0
  %v1509 = vpop.f32.mrb[0].mxu0
  %v1510 = vadd.f32 0.0, %v1509
  %v1511 = vpop.f32.mrb[0].mxu0
  %1512 = vmatprep.mubr.bf16.mxu0 0
  %1513 = vmatmul.mubr.bf16.gmra.mrb[0].mxu0 %v189
  %v1514 = vpop.f32.mrb[0].mxu0
  %v1515 = vadd.f32 0.0, %v1514
  %v1516 = vpop.f32.mrb[0].mxu0
  %v1517 = vpop.f32.mrb[0].mxu0
  %v1518 = vadd.f32 0.0, %v1517
  %v1519 = vpop.f32.mrb[0].mxu0
  %1520 = vdwg.mxu0
  %v1521 = vmax.f32 %v1395, %v1403
  %v1522 = vmax.f32 %v1521, %v1411
  %v1523 = vmax.f32 %v1522, %v1419
  %v1524 = vmax.f32 %v1523, %v1427
  %v1525 = vmax.f32 %v1524, %v1435
  %v1526 = vmax.f32 %v1525, %v1443
  %v1527 = vmax.f32 %v1526, %v1451
  %v1528 = vmax.f32 %v1398, %v1406
  %v1529 = vmax.f32 %v1528, %v1414
  %v1530 = vmax.f32 %v1529, %v1422
  %v1531 = vmax.f32 %v1530, %v1430
  %v1532 = vmax.f32 %v1531, %v1438
  %v1533 = vmax.f32 %v1532, %v1446
  %v1534 = vmax.f32 %v1533, %v1454
  %v1535 = vmax.f32 %v1459, %v1467
  %v1536 = vmax.f32 %v1535, %v1475
  %v1537 = vmax.f32 %v1536, %v1483
  %v1538 = vmax.f32 %v1537, %v1491
  %v1539 = vmax.f32 %v1538, %v1499
  %v1540 = vmax.f32 %v1539, %v1507
  %v1541 = vmax.f32 %v1540, %v1515
  %v1542 = vmax.f32 %v1462, %v1470
  %v1543 = vmax.f32 %v1542, %v1478
  %v1544 = vmax.f32 %v1543, %v1486
  %v1545 = vmax.f32 %v1544, %v1494
  %v1546 = vmax.f32 %v1545, %v1502
  %v1547 = vmax.f32 %v1546, %v1510
  %v1548 = vmax.f32 %v1547, %v1518
  %v1549 = vadd.f32 %v1527, %v446
  %v1550 = vadd.f32 %v1534, %v451
  %v1551 = vadd.f32 %v1541, %v446
  %v1552 = vadd.f32 %v1548, %v451
  %vm1553 = vcmp.gt.f32.partialorder %v1549, 0.0
  %vm1554 = vcmp.gt.f32.partialorder %v1550, 0.0
  %vm1555 = vcmp.gt.f32.partialorder %v1551, 0.0
  %vm1556 = vcmp.gt.f32.partialorder %v1552, 0.0
  %v1557 = vmul.f32 %v1549, 0.01
  %v1558 = vmul.f32 %v1550, 0.01
  %v1559 = vmul.f32 %v1551, 0.01
  %v1560 = vmul.f32 %v1552, 0.01
  %v1561 = vsel %vm1553, %v1549, %v1557
  %v1562 = vsel %vm1554, %v1550, %v1558
  %v1563 = vsel %vm1555, %v1551, %v1559
  %v1564 = vsel %vm1556, %v1552, %v1560
  %1565 = vst [vmem:[#allocation2 + $0x80] sm:$0xff] %v1561
  %1566 = vst [vmem:[#allocation2 + $0x88] sm:$0xff] %v1562
  %1567 = vst [vmem:[#allocation2 + $0x90] sm:$0xff] %v1563
  %1568 = vst [vmem:[#allocation2 + $0x98] sm:$0xff] %v1564
  %s1569 = scalar_lea.vmem %s0, 320
  %v1570 = vld [vmem:[%s1569] sm:$0xf]
  %v1571 = vld [vmem:[%s1569 + $0x4] sm:$0xf]
  %v1572 = vld [vmem:[%s1569 + $0x8] sm:$0xf]
  %v1573 = vld [vmem:[%s1569 + $0xc] sm:$0xf]
  %v1574 = vld [vmem:[%s1569 + $0x10] sm:$0xf]
  %v1575 = vld [vmem:[%s1569 + $0x14] sm:$0xf]
  %v1576 = vld [vmem:[%s1569 + $0x18] sm:$0xf]
  %v1577 = vld [vmem:[%s1569 + $0x1c] sm:$0xf]
  %v1578 = vld [vmem:[%s1569 + $0x20] sm:$0xf]
  %v1579 = vld [vmem:[%s1569 + $0x24] sm:$0xf]
  %v1580 = vld [vmem:[%s1569 + $0x28] sm:$0xf]
  %v1581 = vld [vmem:[%s1569 + $0x2c] sm:$0xf]
  %v1582 = vld [vmem:[%s1569 + $0x30] sm:$0xf]
  %v1583 = vld [vmem:[%s1569 + $0x34] sm:$0xf]
  %v1584 = vld [vmem:[%s1569 + $0x38] sm:$0xf]
  %v1585 = vld [vmem:[%s1569 + $0x3c] sm:$0xf]
  %v1602 = vunpack.c.l.b16 %v1570
  %v1603 = vunpack.c.l.b16 %v1571
  %v1604 = vunpack.c.l.b16 %v1572
  %v1605 = vunpack.c.l.b16 %v1573
  %v1606 = vunpack.c.l.b16 %v1574
  %v1607 = vunpack.c.l.b16 %v1575
  %v1608 = vunpack.c.l.b16 %v1576
  %v1609 = vunpack.c.l.b16 %v1577
  %v1610 = vunpack.c.l.b16 %v1578
  %v1611 = vunpack.c.l.b16 %v1579
  %v1612 = vunpack.c.l.b16 %v1580
  %v1613 = vunpack.c.l.b16 %v1581
  %v1614 = vunpack.c.l.b16 %v1582
  %v1615 = vunpack.c.l.b16 %v1583
  %v1616 = vunpack.c.l.b16 %v1584
  %v1617 = vunpack.c.l.b16 %v1585
  %v1618 = vpack.c.b16 %v1603, %v1602
  %v1619 = vpack.c.b16 %v1605, %v1604
  %v1620 = vpack.c.b16 %v1607, %v1606
  %v1621 = vpack.c.b16 %v1609, %v1608
  %v1622 = vpack.c.b16 %v1611, %v1610
  %v1623 = vpack.c.b16 %v1613, %v1612
  %v1624 = vpack.c.b16 %v1615, %v1614
  %v1625 = vpack.c.b16 %v1617, %v1616
  %1634 = vmatprep.subr.bf16.mxu0 0
  %1635 = vmatpush1.bf16.msra.mxu0 %v1618
  %1636 = vmatprep.subr.bf16.mxu0 0
  %1637 = vmatpush1.bf16.msra.mxu0 %v1619
  %1638 = vmatprep.subr.bf16.mxu0 0
  %1639 = vmatpush1.bf16.msra.mxu0 %v1620
  %1640 = vmatprep.subr.bf16.mxu0 0
  %1641 = vmatpush1.bf16.msra.mxu0 %v1621
  %1642 = vmatprep.subr.bf16.mxu0 0
  %1643 = vmatpush1.bf16.msra.mxu0 %v1622
  %1644 = vmatprep.subr.bf16.mxu0 0
  %1645 = vmatpush1.bf16.msra.mxu0 %v1623
  %1646 = vmatprep.subr.bf16.mxu0 0
  %1647 = vmatpush1.bf16.msra.mxu0 %v1624
  %1648 = vmatprep.subr.bf16.mxu0 0
  %1649 = vmatpush1.bf16.msra.mxu0 %v1625
  %1650 = vmatprep.subr.bf16.mxu0 0
  %1651 = vmatpush1.bf16.msra.mxu0 0
  %1652 = vmatprep.subr.bf16.mxu0 0
  %1653 = vmatpush1.bf16.msra.mxu0 0
  %1654 = vmatprep.subr.bf16.mxu0 0
  %1655 = vmatpush1.bf16.msra.mxu0 0
  %1656 = vmatprep.subr.bf16.mxu0 0
  %1657 = vmatpush1.bf16.msra.mxu0 0
  %1658 = vmatprep.subr.bf16.mxu0 0
  %1659 = vmatpush1.bf16.msra.mxu0 0
  %1660 = vmatprep.subr.bf16.mxu0 0
  %1661 = vmatpush1.bf16.msra.mxu0 0
  %1662 = vmatprep.subr.bf16.mxu0 0
  %1663 = vmatpush1.bf16.msra.mxu0 0
  %1664 = vmatprep.subr.bf16.mxu0 0
  %1665 = vmatpush1.bf16.msra.mxu0 0
  %1666 = vmatprep.mubr.bf16.mxu0 0
  %1667 = vmatmul.mubr.bf16.gmra.mrb[0].mxu0 %v174
  %v1668 = vpop.f32.mrb[0].mxu0
  %v1669 = vadd.f32 0.0, %v1668
  %v1670 = vpop.f32.mrb[0].mxu0
  %v1671 = vpop.f32.mrb[0].mxu0
  %v1672 = vadd.f32 0.0, %v1671
  %v1673 = vpop.f32.mrb[0].mxu0
  %1674 = vmatprep.mubr.bf16.mxu0 0
  %1675 = vmatmul.mubr.bf16.gmra.mrb[0].mxu0 %v175
  %v1676 = vpop.f32.mrb[0].mxu0
  %v1677 = vadd.f32 0.0, %v1676
  %v1678 = vpop.f32.mrb[0].mxu0
  %v1679 = vpop.f32.mrb[0].mxu0
  %v1680 = vadd.f32 0.0, %v1679
  %v1681 = vpop.f32.mrb[0].mxu0
  %1682 = vmatprep.mubr.bf16.mxu0 0
  %1683 = vmatmul.mubr.bf16.gmra.mrb[0].mxu0 %v176
  %v1684 = vpop.f32.mrb[0].mxu0
  %v1685 = vadd.f32 0.0, %v1684
  %v1686 = vpop.f32.mrb[0].mxu0
  %v1687 = vpop.f32.mrb[0].mxu0
  %v1688 = vadd.f32 0.0, %v1687
  %v1689 = vpop.f32.mrb[0].mxu0
  %1690 = vmatprep.mubr.bf16.mxu0 0
  %1691 = vmatmul.mubr.bf16.gmra.mrb[0].mxu0 %v177
  %v1692 = vpop.f32.mrb[0].mxu0
  %v1693 = vadd.f32 0.0, %v1692
  %v1694 = vpop.f32.mrb[0].mxu0
  %v1695 = vpop.f32.mrb[0].mxu0
  %v1696 = vadd.f32 0.0, %v1695
  %v1697 = vpop.f32.mrb[0].mxu0
  %1698 = vmatprep.mubr.bf16.mxu0 0
  %1699 = vmatmul.mubr.bf16.gmra.mrb[0].mxu0 %v178
  %v1700 = vpop.f32.mrb[0].mxu0
  %v1701 = vadd.f32 0.0, %v1700
  %v1702 = vpop.f32.mrb[0].mxu0
  %v1703 = vpop.f32.mrb[0].mxu0
  %v1704 = vadd.f32 0.0, %v1703
  %v1705 = vpop.f32.mrb[0].mxu0
  %1706 = vmatprep.mubr.bf16.mxu0 0
  %1707 = vmatmul.mubr.bf16.gmra.mrb[0].mxu0 %v179
  %v1708 = vpop.f32.mrb[0].mxu0
  %v1709 = vadd.f32 0.0, %v1708
  %v1710 = vpop.f32.mrb[0].mxu0
  %v1711 = vpop.f32.mrb[0].mxu0
  %v1712 = vadd.f32 0.0, %v1711
  %v1713 = vpop.f32.mrb[0].mxu0
  %1714 = vmatprep.mubr.bf16.mxu0 0
  %1715 = vmatmul.mubr.bf16.gmra.mrb[0].mxu0 %v180
  %v1716 = vpop.f32.mrb[0].mxu0
  %v1717 = vadd.f32 0.0, %v1716
  %v1718 = vpop.f32.mrb[0].mxu0
  %v1719 = vpop.f32.mrb[0].mxu0
  %v1720 = vadd.f32 0.0, %v1719
  %v1721 = vpop.f32.mrb[0].mxu0
  %1722 = vmatprep.mubr.bf16.mxu0 0
  %1723 = vmatmul.mubr.bf16.gmra.mrb[0].mxu0 %v181
  %v1724 = vpop.f32.mrb[0].mxu0
  %v1725 = vadd.f32 0.0, %v1724
  %v1726 = vpop.f32.mrb[0].mxu0
  %v1727 = vpop.f32.mrb[0].mxu0
  %v1728 = vadd.f32 0.0, %v1727
  %v1729 = vpop.f32.mrb[0].mxu0
  %1730 = vmatprep.mubr.bf16.mxu0 0
  %1731 = vmatmul.mubr.bf16.gmra.mrb[0].mxu0 %v182
  %v1732 = vpop.f32.mrb[0].mxu0
  %v1733 = vadd.f32 0.0, %v1732
  %v1734 = vpop.f32.mrb[0].mxu0
  %v1735 = vpop.f32.mrb[0].mxu0
  %v1736 = vadd.f32 0.0, %v1735
  %v1737 = vpop.f32.mrb[0].mxu0
  %1738 = vmatprep.mubr.bf16.mxu0 0
  %1739 = vmatmul.mubr.bf16.gmra.mrb[0].mxu0 %v183
  %v1740 = vpop.f32.mrb[0].mxu0
  %v1741 = vadd.f32 0.0, %v1740
  %v1742 = vpop.f32.mrb[0].mxu0
  %v1743 = vpop.f32.mrb[0].mxu0
  %v1744 = vadd.f32 0.0, %v1743
  %v1745 = vpop.f32.mrb[0].mxu0
  %1746 = vmatprep.mubr.bf16.mxu0 0
  %1747 = vmatmul.mubr.bf16.gmra.mrb[0].mxu0 %v184
  %v1748 = vpop.f32.mrb[0].mxu0
  %v1749 = vadd.f32 0.0, %v1748
  %v1750 = vpop.f32.mrb[0].mxu0
  %v1751 = vpop.f32.mrb[0].mxu0
  %v1752 = vadd.f32 0.0, %v1751
  %v1753 = vpop.f32.mrb[0].mxu0
  %1754 = vmatprep.mubr.bf16.mxu0 0
  %1755 = vmatmul.mubr.bf16.gmra.mrb[0].mxu0 %v185
  %v1756 = vpop.f32.mrb[0].mxu0
  %v1757 = vadd.f32 0.0, %v1756
  %v1758 = vpop.f32.mrb[0].mxu0
  %v1759 = vpop.f32.mrb[0].mxu0
  %v1760 = vadd.f32 0.0, %v1759
  %v1761 = vpop.f32.mrb[0].mxu0
  %1762 = vmatprep.mubr.bf16.mxu0 0
  %1763 = vmatmul.mubr.bf16.gmra.mrb[0].mxu0 %v186
  %v1764 = vpop.f32.mrb[0].mxu0
  %v1765 = vadd.f32 0.0, %v1764
  %v1766 = vpop.f32.mrb[0].mxu0
  %v1767 = vpop.f32.mrb[0].mxu0
  %v1768 = vadd.f32 0.0, %v1767
  %v1769 = vpop.f32.mrb[0].mxu0
  %1770 = vmatprep.mubr.bf16.mxu0 0
  %1771 = vmatmul.mubr.bf16.gmra.mrb[0].mxu0 %v187
  %v1772 = vpop.f32.mrb[0].mxu0
  %v1773 = vadd.f32 0.0, %v1772
  %v1774 = vpop.f32.mrb[0].mxu0
  %v1775 = vpop.f32.mrb[0].mxu0
  %v1776 = vadd.f32 0.0, %v1775
  %v1777 = vpop.f32.mrb[0].mxu0
  %1778 = vmatprep.mubr.bf16.mxu0 0
  %1779 = vmatmul.mubr.bf16.gmra.mrb[0].mxu0 %v188
  %v1780 = vpop.f32.mrb[0].mxu0
  %v1781 = vadd.f32 0.0, %v1780
  %v1782 = vpop.f32.mrb[0].mxu0
  %v1783 = vpop.f32.mrb[0].mxu0
  %v1784 = vadd.f32 0.0, %v1783
  %v1785 = vpop.f32.mrb[0].mxu0
  %1786 = vmatprep.mubr.bf16.mxu0 0
  %1787 = vmatmul.mubr.bf16.gmra.mrb[0].mxu0 %v189
  %v1788 = vpop.f32.mrb[0].mxu0
  %v1789 = vadd.f32 0.0, %v1788
  %v1790 = vpop.f32.mrb[0].mxu0
  %v1791 = vpop.f32.mrb[0].mxu0
  %v1792 = vadd.f32 0.0, %v1791
  %v1793 = vpop.f32.mrb[0].mxu0
  %1794 = vdwg.mxu0
  %v1795 = vmax.f32 %v1669, %v1677
  %v1796 = vmax.f32 %v1795, %v1685
  %v1797 = vmax.f32 %v1796, %v1693
  %v1798 = vmax.f32 %v1797, %v1701
  %v1799 = vmax.f32 %v1798, %v1709
  %v1800 = vmax.f32 %v1799, %v1717
  %v1801 = vmax.f32 %v1800, %v1725
  %v1802 = vmax.f32 %v1672, %v1680
  %v1803 = vmax.f32 %v1802, %v1688
  %v1804 = vmax.f32 %v1803, %v1696
  %v1805 = vmax.f32 %v1804, %v1704
  %v1806 = vmax.f32 %v1805, %v1712
  %v1807 = vmax.f32 %v1806, %v1720
  %v1808 = vmax.f32 %v1807, %v1728
  %v1809 = vmax.f32 %v1733, %v1741
  %v1810 = vmax.f32 %v1809, %v1749
  %v1811 = vmax.f32 %v1810, %v1757
  %v1812 = vmax.f32 %v1811, %v1765
  %v1813 = vmax.f32 %v1812, %v1773
  %v1814 = vmax.f32 %v1813, %v1781
  %v1815 = vmax.f32 %v1814, %v1789
  %v1816 = vmax.f32 %v1736, %v1744
  %v1817 = vmax.f32 %v1816, %v1752
  %v1818 = vmax.f32 %v1817, %v1760
  %v1819 = vmax.f32 %v1818, %v1768
  %v1820 = vmax.f32 %v1819, %v1776
  %v1821 = vmax.f32 %v1820, %v1784
  %v1822 = vmax.f32 %v1821, %v1792
  %v1823 = vadd.f32 %v1801, %v446
  %v1824 = vadd.f32 %v1808, %v451
  %v1825 = vadd.f32 %v1815, %v446
  %v1826 = vadd.f32 %v1822, %v451
  %vm1827 = vcmp.gt.f32.partialorder %v1823, 0.0
  %vm1828 = vcmp.gt.f32.partialorder %v1824, 0.0
  %vm1829 = vcmp.gt.f32.partialorder %v1825, 0.0
  %vm1830 = vcmp.gt.f32.partialorder %v1826, 0.0
  %v1831 = vmul.f32 %v1823, 0.01
  %v1832 = vmul.f32 %v1824, 0.01
  %v1833 = vmul.f32 %v1825, 0.01
  %v1834 = vmul.f32 %v1826, 0.01
  %v1835 = vsel %vm1827, %v1823, %v1831
  %v1836 = vsel %vm1828, %v1824, %v1832
  %v1837 = vsel %vm1829, %v1825, %v1833
  %v1838 = vsel %vm1830, %v1826, %v1834
  %1839 = vst [vmem:[#allocation2 + $0xa0] sm:$0xff] %v1835
  %1840 = vst [vmem:[#allocation2 + $0xa8] sm:$0xff] %v1836
  %1841 = vst [vmem:[#allocation2 + $0xb0] sm:$0xff] %v1837
  %1842 = vst [vmem:[#allocation2 + $0xb8] sm:$0xff] %v1838
  %s1843 = scalar_lea.vmem %s0, 384
  %v1844 = vld [vmem:[%s1843] sm:$0xf]
  %v1845 = vld [vmem:[%s1843 + $0x4] sm:$0xf]
  %v1846 = vld [vmem:[%s1843 + $0x8] sm:$0xf]
  %v1847 = vld [vmem:[%s1843 + $0xc] sm:$0xf]
  %v1848 = vld [vmem:[%s1843 + $0x10] sm:$0xf]
  %v1849 = vld [vmem:[%s1843 + $0x14] sm:$0xf]
  %v1850 = vld [vmem:[%s1843 + $0x18] sm:$0xf]
  %v1851 = vld [vmem:[%s1843 + $0x1c] sm:$0xf]
  %v1852 = vld [vmem:[%s1843 + $0x20] sm:$0xf]
  %v1853 = vld [vmem:[%s1843 + $0x24] sm:$0xf]
  %v1854 = vld [vmem:[%s1843 + $0x28] sm:$0xf]
  %v1855 = vld [vmem:[%s1843 + $0x2c] sm:$0xf]
  %v1856 = vld [vmem:[%s1843 + $0x30] sm:$0xf]
  %v1857 = vld [vmem:[%s1843 + $0x34] sm:$0xf]
  %v1858 = vld [vmem:[%s1843 + $0x38] sm:$0xf]
  %v1859 = vld [vmem:[%s1843 + $0x3c] sm:$0xf]
  %v1876 = vunpack.c.l.b16 %v1844
  %v1877 = vunpack.c.l.b16 %v1845
  %v1878 = vunpack.c.l.b16 %v1846
  %v1879 = vunpack.c.l.b16 %v1847
  %v1880 = vunpack.c.l.b16 %v1848
  %v1881 = vunpack.c.l.b16 %v1849
  %v1882 = vunpack.c.l.b16 %v1850
  %v1883 = vunpack.c.l.b16 %v1851
  %v1884 = vunpack.c.l.b16 %v1852
  %v1885 = vunpack.c.l.b16 %v1853
  %v1886 = vunpack.c.l.b16 %v1854
  %v1887 = vunpack.c.l.b16 %v1855
  %v1888 = vunpack.c.l.b16 %v1856
  %v1889 = vunpack.c.l.b16 %v1857
  %v1890 = vunpack.c.l.b16 %v1858
  %v1891 = vunpack.c.l.b16 %v1859
  %v1892 = vpack.c.b16 %v1877, %v1876
  %v1893 = vpack.c.b16 %v1879, %v1878
  %v1894 = vpack.c.b16 %v1881, %v1880
  %v1895 = vpack.c.b16 %v1883, %v1882
  %v1896 = vpack.c.b16 %v1885, %v1884
  %v1897 = vpack.c.b16 %v1887, %v1886
  %v1898 = vpack.c.b16 %v1889, %v1888
  %v1899 = vpack.c.b16 %v1891, %v1890
  %1908 = vmatprep.subr.bf16.mxu0 0
  %1909 = vmatpush1.bf16.msra.mxu0 %v1892
  %1910 = vmatprep.subr.bf16.mxu0 0
  %1911 = vmatpush1.bf16.msra.mxu0 %v1893
  %1912 = vmatprep.subr.bf16.mxu0 0
  %1913 = vmatpush1.bf16.msra.mxu0 %v1894
  %1914 = vmatprep.subr.bf16.mxu0 0
  %1915 = vmatpush1.bf16.msra.mxu0 %v1895
  %1916 = vmatprep.subr.bf16.mxu0 0
  %1917 = vmatpush1.bf16.msra.mxu0 %v1896
  %1918 = vmatprep.subr.bf16.mxu0 0
  %1919 = vmatpush1.bf16.msra.mxu0 %v1897
  %1920 = vmatprep.subr.bf16.mxu0 0
  %1921 = vmatpush1.bf16.msra.mxu0 %v1898
  %1922 = vmatprep.subr.bf16.mxu0 0
  %1923 = vmatpush1.bf16.msra.mxu0 %v1899
  %1924 = vmatprep.subr.bf16.mxu0 0
  %1925 = vmatpush1.bf16.msra.mxu0 0
  %1926 = vmatprep.subr.bf16.mxu0 0
  %1927 = vmatpush1.bf16.msra.mxu0 0
  %1928 = vmatprep.subr.bf16.mxu0 0
  %1929 = vmatpush1.bf16.msra.mxu0 0
  %1930 = vmatprep.subr.bf16.mxu0 0
  %1931 = vmatpush1.bf16.msra.mxu0 0
  %1932 = vmatprep.subr.bf16.mxu0 0
  %1933 = vmatpush1.bf16.msra.mxu0 0
  %1934 = vmatprep.subr.bf16.mxu0 0
  %1935 = vmatpush1.bf16.msra.mxu0 0
  %1936 = vmatprep.subr.bf16.mxu0 0
  %1937 = vmatpush1.bf16.msra.mxu0 0
  %1938 = vmatprep.subr.bf16.mxu0 0
  %1939 = vmatpush1.bf16.msra.mxu0 0
  %1940 = vmatprep.mubr.bf16.mxu0 0
  %1941 = vmatmul.mubr.bf16.gmra.mrb[0].mxu0 %v174
  %v1942 = vpop.f32.mrb[0].mxu0
  %v1943 = vadd.f32 0.0, %v1942
  %v1944 = vpop.f32.mrb[0].mxu0
  %v1945 = vpop.f32.mrb[0].mxu0
  %v1946 = vadd.f32 0.0, %v1945
  %v1947 = vpop.f32.mrb[0].mxu0
  %1948 = vmatprep.mubr.bf16.mxu0 0
  %1949 = vmatmul.mubr.bf16.gmra.mrb[0].mxu0 %v175
  %v1950 = vpop.f32.mrb[0].mxu0
  %v1951 = vadd.f32 0.0, %v1950
  %v1952 = vpop.f32.mrb[0].mxu0
  %v1953 = vpop.f32.mrb[0].mxu0
  %v1954 = vadd.f32 0.0, %v1953
  %v1955 = vpop.f32.mrb[0].mxu0
  %1956 = vmatprep.mubr.bf16.mxu0 0
  %1957 = vmatmul.mubr.bf16.gmra.mrb[0].mxu0 %v176
  %v1958 = vpop.f32.mrb[0].mxu0
  %v1959 = vadd.f32 0.0, %v1958
  %v1960 = vpop.f32.mrb[0].mxu0
  %v1961 = vpop.f32.mrb[0].mxu0
  %v1962 = vadd.f32 0.0, %v1961
  %v1963 = vpop.f32.mrb[0].mxu0
  %1964 = vmatprep.mubr.bf16.mxu0 0
  %1965 = vmatmul.mubr.bf16.gmra.mrb[0].mxu0 %v177
  %v1966 = vpop.f32.mrb[0].mxu0
  %v1967 = vadd.f32 0.0, %v1966
  %v1968 = vpop.f32.mrb[0].mxu0
  %v1969 = vpop.f32.mrb[0].mxu0
  %v1970 = vadd.f32 0.0, %v1969
  %v1971 = vpop.f32.mrb[0].mxu0
  %1972 = vmatprep.mubr.bf16.mxu0 0
  %1973 = vmatmul.mubr.bf16.gmra.mrb[0].mxu0 %v178
  %v1974 = vpop.f32.mrb[0].mxu0
  %v1975 = vadd.f32 0.0, %v1974
  %v1976 = vpop.f32.mrb[0].mxu0
  %v1977 = vpop.f32.mrb[0].mxu0
  %v1978 = vadd.f32 0.0, %v1977
  %v1979 = vpop.f32.mrb[0].mxu0
  %1980 = vmatprep.mubr.bf16.mxu0 0
  %1981 = vmatmul.mubr.bf16.gmra.mrb[0].mxu0 %v179
  %v1982 = vpop.f32.mrb[0].mxu0
  %v1983 = vadd.f32 0.0, %v1982
  %v1984 = vpop.f32.mrb[0].mxu0
  %v1985 = vpop.f32.mrb[0].mxu0
  %v1986 = vadd.f32 0.0, %v1985
  %v1987 = vpop.f32.mrb[0].mxu0
  %1988 = vmatprep.mubr.bf16.mxu0 0
  %1989 = vmatmul.mubr.bf16.gmra.mrb[0].mxu0 %v180
  %v1990 = vpop.f32.mrb[0].mxu0
  %v1991 = vadd.f32 0.0, %v1990
  %v1992 = vpop.f32.mrb[0].mxu0
  %v1993 = vpop.f32.mrb[0].mxu0
  %v1994 = vadd.f32 0.0, %v1993
  %v1995 = vpop.f32.mrb[0].mxu0
  %1996 = vmatprep.mubr.bf16.mxu0 0
  %1997 = vmatmul.mubr.bf16.gmra.mrb[0].mxu0 %v181
  %v1998 = vpop.f32.mrb[0].mxu0
  %v1999 = vadd.f32 0.0, %v1998
  %v2000 = vpop.f32.mrb[0].mxu0
  %v2001 = vpop.f32.mrb[0].mxu0
  %v2002 = vadd.f32 0.0, %v2001
  %v2003 = vpop.f32.mrb[0].mxu0
  %2004 = vmatprep.mubr.bf16.mxu0 0
  %2005 = vmatmul.mubr.bf16.gmra.mrb[0].mxu0 %v182
  %v2006 = vpop.f32.mrb[0].mxu0
  %v2007 = vadd.f32 0.0, %v2006
  %v2008 = vpop.f32.mrb[0].mxu0
  %v2009 = vpop.f32.mrb[0].mxu0
  %v2010 = vadd.f32 0.0, %v2009
  %v2011 = vpop.f32.mrb[0].mxu0
  %2012 = vmatprep.mubr.bf16.mxu0 0
  %2013 = vmatmul.mubr.bf16.gmra.mrb[0].mxu0 %v183
  %v2014 = vpop.f32.mrb[0].mxu0
  %v2015 = vadd.f32 0.0, %v2014
  %v2016 = vpop.f32.mrb[0].mxu0
  %v2017 = vpop.f32.mrb[0].mxu0
  %v2018 = vadd.f32 0.0, %v2017
  %v2019 = vpop.f32.mrb[0].mxu0
  %2020 = vmatprep.mubr.bf16.mxu0 0
  %2021 = vmatmul.mubr.bf16.gmra.mrb[0].mxu0 %v184
  %v2022 = vpop.f32.mrb[0].mxu0
  %v2023 = vadd.f32 0.0, %v2022
  %v2024 = vpop.f32.mrb[0].mxu0
  %v2025 = vpop.f32.mrb[0].mxu0
  %v2026 = vadd.f32 0.0, %v2025
  %v2027 = vpop.f32.mrb[0].mxu0
  %2028 = vmatprep.mubr.bf16.mxu0 0
  %2029 = vmatmul.mubr.bf16.gmra.mrb[0].mxu0 %v185
  %v2030 = vpop.f32.mrb[0].mxu0
  %v2031 = vadd.f32 0.0, %v2030
  %v2032 = vpop.f32.mrb[0].mxu0
  %v2033 = vpop.f32.mrb[0].mxu0
  %v2034 = vadd.f32 0.0, %v2033
  %v2035 = vpop.f32.mrb[0].mxu0
  %2036 = vmatprep.mubr.bf16.mxu0 0
  %2037 = vmatmul.mubr.bf16.gmra.mrb[0].mxu0 %v186
  %v2038 = vpop.f32.mrb[0].mxu0
  %v2039 = vadd.f32 0.0, %v2038
  %v2040 = vpop.f32.mrb[0].mxu0
  %v2041 = vpop.f32.mrb[0].mxu0
  %v2042 = vadd.f32 0.0, %v2041
  %v2043 = vpop.f32.mrb[0].mxu0
  %2044 = vmatprep.mubr.bf16.mxu0 0
  %2045 = vmatmul.mubr.bf16.gmra.mrb[0].mxu0 %v187
  %v2046 = vpop.f32.mrb[0].mxu0
  %v2047 = vadd.f32 0.0, %v2046
  %v2048 = vpop.f32.mrb[0].mxu0
  %v2049 = vpop.f32.mrb[0].mxu0
  %v2050 = vadd.f32 0.0, %v2049
  %v2051 = vpop.f32.mrb[0].mxu0
  %2052 = vmatprep.mubr.bf16.mxu0 0
  %2053 = vmatmul.mubr.bf16.gmra.mrb[0].mxu0 %v188
  %v2054 = vpop.f32.mrb[0].mxu0
  %v2055 = vadd.f32 0.0, %v2054
  %v2056 = vpop.f32.mrb[0].mxu0
  %v2057 = vpop.f32.mrb[0].mxu0
  %v2058 = vadd.f32 0.0, %v2057
  %v2059 = vpop.f32.mrb[0].mxu0
  %2060 = vmatprep.mubr.bf16.mxu0 0
  %2061 = vmatmul.mubr.bf16.gmra.mrb[0].mxu0 %v189
  %v2062 = vpop.f32.mrb[0].mxu0
  %v2063 = vadd.f32 0.0, %v2062
  %v2064 = vpop.f32.mrb[0].mxu0
  %v2065 = vpop.f32.mrb[0].mxu0
  %v2066 = vadd.f32 0.0, %v2065
  %v2067 = vpop.f32.mrb[0].mxu0
  %2068 = vdwg.mxu0
  %v2069 = vmax.f32 %v1943, %v1951
  %v2070 = vmax.f32 %v2069, %v1959
  %v2071 = vmax.f32 %v2070, %v1967
  %v2072 = vmax.f32 %v2071, %v1975
  %v2073 = vmax.f32 %v2072, %v1983
  %v2074 = vmax.f32 %v2073, %v1991
  %v2075 = vmax.f32 %v2074, %v1999
  %v2076 = vmax.f32 %v1946, %v1954
  %v2077 = vmax.f32 %v2076, %v1962
  %v2078 = vmax.f32 %v2077, %v1970
  %v2079 = vmax.f32 %v2078, %v1978
  %v2080 = vmax.f32 %v2079, %v1986
  %v2081 = vmax.f32 %v2080, %v1994
  %v2082 = vmax.f32 %v2081, %v2002
  %v2083 = vmax.f32 %v2007, %v2015
  %v2084 = vmax.f32 %v2083, %v2023
  %v2085 = vmax.f32 %v2084, %v2031
  %v2086 = vmax.f32 %v2085, %v2039
  %v2087 = vmax.f32 %v2086, %v2047
  %v2088 = vmax.f32 %v2087, %v2055
  %v2089 = vmax.f32 %v2088, %v2063
  %v2090 = vmax.f32 %v2010, %v2018
  %v2091 = vmax.f32 %v2090, %v2026
  %v2092 = vmax.f32 %v2091, %v2034
  %v2093 = vmax.f32 %v2092, %v2042
  %v2094 = vmax.f32 %v2093, %v2050
  %v2095 = vmax.f32 %v2094, %v2058
  %v2096 = vmax.f32 %v2095, %v2066
  %v2097 = vadd.f32 %v2075, %v446
  %v2098 = vadd.f32 %v2082, %v451
  %v2099 = vadd.f32 %v2089, %v446
  %v2100 = vadd.f32 %v2096, %v451
  %vm2101 = vcmp.gt.f32.partialorder %v2097, 0.0
  %vm2102 = vcmp.gt.f32.partialorder %v2098, 0.0
  %vm2103 = vcmp.gt.f32.partialorder %v2099, 0.0
  %vm2104 = vcmp.gt.f32.partialorder %v2100, 0.0
  %v2105 = vmul.f32 %v2097, 0.01
  %v2106 = vmul.f32 %v2098, 0.01
  %v2107 = vmul.f32 %v2099, 0.01
  %v2108 = vmul.f32 %v2100, 0.01
  %v2109 = vsel %vm2101, %v2097, %v2105
  %v2110 = vsel %vm2102, %v2098, %v2106
  %v2111 = vsel %vm2103, %v2099, %v2107
  %v2112 = vsel %vm2104, %v2100, %v2108
  %2113 = vst [vmem:[#allocation2 + $0xc0] sm:$0xff] %v2109
  %2114 = vst [vmem:[#allocation2 + $0xc8] sm:$0xff] %v2110
  %2115 = vst [vmem:[#allocation2 + $0xd0] sm:$0xff] %v2111
  %2116 = vst [vmem:[#allocation2 + $0xd8] sm:$0xff] %v2112
  %s2117 = scalar_lea.vmem %s0, 448
  %v2118 = vld [vmem:[%s2117] sm:$0xf]
  %v2119 = vld [vmem:[%s2117 + $0x4] sm:$0xf]
  %v2120 = vld [vmem:[%s2117 + $0x8] sm:$0xf]
  %v2121 = vld [vmem:[%s2117 + $0xc] sm:$0xf]
  %v2122 = vld [vmem:[%s2117 + $0x10] sm:$0xf]
  %v2123 = vld [vmem:[%s2117 + $0x14] sm:$0xf]
  %v2124 = vld [vmem:[%s2117 + $0x18] sm:$0xf]
  %v2125 = vld [vmem:[%s2117 + $0x1c] sm:$0xf]
  %v2126 = vld [vmem:[%s2117 + $0x20] sm:$0xf]
  %v2127 = vld [vmem:[%s2117 + $0x24] sm:$0xf]
  %v2128 = vld [vmem:[%s2117 + $0x28] sm:$0xf]
  %v2129 = vld [vmem:[%s2117 + $0x2c] sm:$0xf]
  %v2130 = vld [vmem:[%s2117 + $0x30] sm:$0xf]
  %v2131 = vld [vmem:[%s2117 + $0x34] sm:$0xf]
  %v2132 = vld [vmem:[%s2117 + $0x38] sm:$0xf]
  %v2133 = vld [vmem:[%s2117 + $0x3c] sm:$0xf]
  %v2150 = vunpack.c.l.b16 %v2118
  %v2151 = vunpack.c.l.b16 %v2119
  %v2152 = vunpack.c.l.b16 %v2120
  %v2153 = vunpack.c.l.b16 %v2121
  %v2154 = vunpack.c.l.b16 %v2122
  %v2155 = vunpack.c.l.b16 %v2123
  %v2156 = vunpack.c.l.b16 %v2124
  %v2157 = vunpack.c.l.b16 %v2125
  %v2158 = vunpack.c.l.b16 %v2126
  %v2159 = vunpack.c.l.b16 %v2127
  %v2160 = vunpack.c.l.b16 %v2128
  %v2161 = vunpack.c.l.b16 %v2129
  %v2162 = vunpack.c.l.b16 %v2130
  %v2163 = vunpack.c.l.b16 %v2131
  %v2164 = vunpack.c.l.b16 %v2132
  %v2165 = vunpack.c.l.b16 %v2133
  %v2166 = vpack.c.b16 %v2151, %v2150
  %v2167 = vpack.c.b16 %v2153, %v2152
  %v2168 = vpack.c.b16 %v2155, %v2154
  %v2169 = vpack.c.b16 %v2157, %v2156
  %v2170 = vpack.c.b16 %v2159, %v2158
  %v2171 = vpack.c.b16 %v2161, %v2160
  %v2172 = vpack.c.b16 %v2163, %v2162
  %v2173 = vpack.c.b16 %v2165, %v2164
  %2182 = vmatprep.subr.bf16.mxu0 0
  %2183 = vmatpush1.bf16.msra.mxu0 %v2166
  %2184 = vmatprep.subr.bf16.mxu0 0
  %2185 = vmatpush1.bf16.msra.mxu0 %v2167
  %2186 = vmatprep.subr.bf16.mxu0 0
  %2187 = vmatpush1.bf16.msra.mxu0 %v2168
  %2188 = vmatprep.subr.bf16.mxu0 0
  %2189 = vmatpush1.bf16.msra.mxu0 %v2169
  %2190 = vmatprep.subr.bf16.mxu0 0
  %2191 = vmatpush1.bf16.msra.mxu0 %v2170
  %2192 = vmatprep.subr.bf16.mxu0 0
  %2193 = vmatpush1.bf16.msra.mxu0 %v2171
  %2194 = vmatprep.subr.bf16.mxu0 0
  %2195 = vmatpush1.bf16.msra.mxu0 %v2172
  %2196 = vmatprep.subr.bf16.mxu0 0
  %2197 = vmatpush1.bf16.msra.mxu0 %v2173
  %2198 = vmatprep.subr.bf16.mxu0 0
  %2199 = vmatpush1.bf16.msra.mxu0 0
  %2200 = vmatprep.subr.bf16.mxu0 0
  %2201 = vmatpush1.bf16.msra.mxu0 0
  %2202 = vmatprep.subr.bf16.mxu0 0
  %2203 = vmatpush1.bf16.msra.mxu0 0
  %2204 = vmatprep.subr.bf16.mxu0 0
  %2205 = vmatpush1.bf16.msra.mxu0 0
  %2206 = vmatprep.subr.bf16.mxu0 0
  %2207 = vmatpush1.bf16.msra.mxu0 0
  %2208 = vmatprep.subr.bf16.mxu0 0
  %2209 = vmatpush1.bf16.msra.mxu0 0
  %2210 = vmatprep.subr.bf16.mxu0 0
  %2211 = vmatpush1.bf16.msra.mxu0 0
  %2212 = vmatprep.subr.bf16.mxu0 0
  %2213 = vmatpush1.bf16.msra.mxu0 0
  %2214 = vmatprep.mubr.bf16.mxu0 0
  %2215 = vmatmul.mubr.bf16.gmra.mrb[0].mxu0 %v174
  %v2216 = vpop.f32.mrb[0].mxu0
  %v2217 = vadd.f32 0.0, %v2216
  %v2218 = vpop.f32.mrb[0].mxu0
  %v2219 = vpop.f32.mrb[0].mxu0
  %v2220 = vadd.f32 0.0, %v2219
  %v2221 = vpop.f32.mrb[0].mxu0
  %2222 = vmatprep.mubr.bf16.mxu0 0
  %2223 = vmatmul.mubr.bf16.gmra.mrb[0].mxu0 %v175
  %v2224 = vpop.f32.mrb[0].mxu0
  %v2225 = vadd.f32 0.0, %v2224
  %v2226 = vpop.f32.mrb[0].mxu0
  %v2227 = vpop.f32.mrb[0].mxu0
  %v2228 = vadd.f32 0.0, %v2227
  %v2229 = vpop.f32.mrb[0].mxu0
  %2230 = vmatprep.mubr.bf16.mxu0 0
  %2231 = vmatmul.mubr.bf16.gmra.mrb[0].mxu0 %v176
  %v2232 = vpop.f32.mrb[0].mxu0
  %v2233 = vadd.f32 0.0, %v2232
  %v2234 = vpop.f32.mrb[0].mxu0
  %v2235 = vpop.f32.mrb[0].mxu0
  %v2236 = vadd.f32 0.0, %v2235
  %v2237 = vpop.f32.mrb[0].mxu0
  %2238 = vmatprep.mubr.bf16.mxu0 0
  %2239 = vmatmul.mubr.bf16.gmra.mrb[0].mxu0 %v177
  %v2240 = vpop.f32.mrb[0].mxu0
  %v2241 = vadd.f32 0.0, %v2240
  %v2242 = vpop.f32.mrb[0].mxu0
  %v2243 = vpop.f32.mrb[0].mxu0
  %v2244 = vadd.f32 0.0, %v2243
  %v2245 = vpop.f32.mrb[0].mxu0
  %2246 = vmatprep.mubr.bf16.mxu0 0
  %2247 = vmatmul.mubr.bf16.gmra.mrb[0].mxu0 %v178
  %v2248 = vpop.f32.mrb[0].mxu0
  %v2249 = vadd.f32 0.0, %v2248
  %v2250 = vpop.f32.mrb[0].mxu0
  %v2251 = vpop.f32.mrb[0].mxu0
  %v2252 = vadd.f32 0.0, %v2251
  %v2253 = vpop.f32.mrb[0].mxu0
  %2254 = vmatprep.mubr.bf16.mxu0 0
  %2255 = vmatmul.mubr.bf16.gmra.mrb[0].mxu0 %v179
  %v2256 = vpop.f32.mrb[0].mxu0
  %v2257 = vadd.f32 0.0, %v2256
  %v2258 = vpop.f32.mrb[0].mxu0
  %v2259 = vpop.f32.mrb[0].mxu0
  %v2260 = vadd.f32 0.0, %v2259
  %v2261 = vpop.f32.mrb[0].mxu0
  %2262 = vmatprep.mubr.bf16.mxu0 0
  %2263 = vmatmul.mubr.bf16.gmra.mrb[0].mxu0 %v180
  %v2264 = vpop.f32.mrb[0].mxu0
  %v2265 = vadd.f32 0.0, %v2264
  %v2266 = vpop.f32.mrb[0].mxu0
  %v2267 = vpop.f32.mrb[0].mxu0
  %v2268 = vadd.f32 0.0, %v2267
  %v2269 = vpop.f32.mrb[0].mxu0
  %2270 = vmatprep.mubr.bf16.mxu0 0
  %2271 = vmatmul.mubr.bf16.gmra.mrb[0].mxu0 %v181
  %v2272 = vpop.f32.mrb[0].mxu0
  %v2273 = vadd.f32 0.0, %v2272
  %v2274 = vpop.f32.mrb[0].mxu0
  %v2275 = vpop.f32.mrb[0].mxu0
  %v2276 = vadd.f32 0.0, %v2275
  %v2277 = vpop.f32.mrb[0].mxu0
  %2278 = vmatprep.mubr.bf16.mxu0 0
  %2279 = vmatmul.mubr.bf16.gmra.mrb[0].mxu0 %v182
  %v2280 = vpop.f32.mrb[0].mxu0
  %v2281 = vadd.f32 0.0, %v2280
  %v2282 = vpop.f32.mrb[0].mxu0
  %v2283 = vpop.f32.mrb[0].mxu0
  %v2284 = vadd.f32 0.0, %v2283
  %v2285 = vpop.f32.mrb[0].mxu0
  %2286 = vmatprep.mubr.bf16.mxu0 0
  %2287 = vmatmul.mubr.bf16.gmra.mrb[0].mxu0 %v183
  %v2288 = vpop.f32.mrb[0].mxu0
  %v2289 = vadd.f32 0.0, %v2288
  %v2290 = vpop.f32.mrb[0].mxu0
  %v2291 = vpop.f32.mrb[0].mxu0
  %v2292 = vadd.f32 0.0, %v2291
  %v2293 = vpop.f32.mrb[0].mxu0
  %2294 = vmatprep.mubr.bf16.mxu0 0
  %2295 = vmatmul.mubr.bf16.gmra.mrb[0].mxu0 %v184
  %v2296 = vpop.f32.mrb[0].mxu0
  %v2297 = vadd.f32 0.0, %v2296
  %v2298 = vpop.f32.mrb[0].mxu0
  %v2299 = vpop.f32.mrb[0].mxu0
  %v2300 = vadd.f32 0.0, %v2299
  %v2301 = vpop.f32.mrb[0].mxu0
  %2302 = vmatprep.mubr.bf16.mxu0 0
  %2303 = vmatmul.mubr.bf16.gmra.mrb[0].mxu0 %v185
  %v2304 = vpop.f32.mrb[0].mxu0
  %v2305 = vadd.f32 0.0, %v2304
  %v2306 = vpop.f32.mrb[0].mxu0
  %v2307 = vpop.f32.mrb[0].mxu0
  %v2308 = vadd.f32 0.0, %v2307
  %v2309 = vpop.f32.mrb[0].mxu0
  %2310 = vmatprep.mubr.bf16.mxu0 0
  %2311 = vmatmul.mubr.bf16.gmra.mrb[0].mxu0 %v186
  %v2312 = vpop.f32.mrb[0].mxu0
  %v2313 = vadd.f32 0.0, %v2312
  %v2314 = vpop.f32.mrb[0].mxu0
  %v2315 = vpop.f32.mrb[0].mxu0
  %v2316 = vadd.f32 0.0, %v2315
  %v2317 = vpop.f32.mrb[0].mxu0
  %2318 = vmatprep.mubr.bf16.mxu0 0
  %2319 = vmatmul.mubr.bf16.gmra.mrb[0].mxu0 %v187
  %v2320 = vpop.f32.mrb[0].mxu0
  %v2321 = vadd.f32 0.0, %v2320
  %v2322 = vpop.f32.mrb[0].mxu0
  %v2323 = vpop.f32.mrb[0].mxu0
  %v2324 = vadd.f32 0.0, %v2323
  %v2325 = vpop.f32.mrb[0].mxu0
  %2326 = vmatprep.mubr.bf16.mxu0 0
  %2327 = vmatmul.mubr.bf16.gmra.mrb[0].mxu0 %v188
  %v2328 = vpop.f32.mrb[0].mxu0
  %v2329 = vadd.f32 0.0, %v2328
  %v2330 = vpop.f32.mrb[0].mxu0
  %v2331 = vpop.f32.mrb[0].mxu0
  %v2332 = vadd.f32 0.0, %v2331
  %v2333 = vpop.f32.mrb[0].mxu0
  %2334 = vmatprep.mubr.bf16.mxu0 0
  %2335 = vmatmul.mubr.bf16.gmra.mrb[0].mxu0 %v189
  %v2336 = vpop.f32.mrb[0].mxu0
  %v2337 = vadd.f32 0.0, %v2336
  %v2338 = vpop.f32.mrb[0].mxu0
  %v2339 = vpop.f32.mrb[0].mxu0
  %v2340 = vadd.f32 0.0, %v2339
  %v2341 = vpop.f32.mrb[0].mxu0
  %2342 = vdwg.mxu0
  %v2343 = vmax.f32 %v2217, %v2225
  %v2344 = vmax.f32 %v2343, %v2233
  %v2345 = vmax.f32 %v2344, %v2241
  %v2346 = vmax.f32 %v2345, %v2249
  %v2347 = vmax.f32 %v2346, %v2257
  %v2348 = vmax.f32 %v2347, %v2265
  %v2349 = vmax.f32 %v2348, %v2273
  %v2350 = vmax.f32 %v2220, %v2228
  %v2351 = vmax.f32 %v2350, %v2236
  %v2352 = vmax.f32 %v2351, %v2244
  %v2353 = vmax.f32 %v2352, %v2252
  %v2354 = vmax.f32 %v2353, %v2260
  %v2355 = vmax.f32 %v2354, %v2268
  %v2356 = vmax.f32 %v2355, %v2276
  %v2357 = vmax.f32 %v2281, %v2289
  %v2358 = vmax.f32 %v2357, %v2297
  %v2359 = vmax.f32 %v2358, %v2305
  %v2360 = vmax.f32 %v2359, %v2313
  %v2361 = vmax.f32 %v2360, %v2321
  %v2362 = vmax.f32 %v2361, %v2329
  %v2363 = vmax.f32 %v2362, %v2337
  %v2364 = vmax.f32 %v2284, %v2292
  %v2365 = vmax.f32 %v2364, %v2300
  %v2366 = vmax.f32 %v2365, %v2308
  %v2367 = vmax.f32 %v2366, %v2316
  %v2368 = vmax.f32 %v2367, %v2324
  %v2369 = vmax.f32 %v2368, %v2332
  %v2370 = vmax.f32 %v2369, %v2340
  %v2371 = vadd.f32 %v2349, %v446
  %v2372 = vadd.f32 %v2356, %v451
  %v2373 = vadd.f32 %v2363, %v446
  %v2374 = vadd.f32 %v2370, %v451
  %vm2375 = vcmp.gt.f32.partialorder %v2371, 0.0
  %vm2376 = vcmp.gt.f32.partialorder %v2372, 0.0
  %vm2377 = vcmp.gt.f32.partialorder %v2373, 0.0
  %vm2378 = vcmp.gt.f32.partialorder %v2374, 0.0
  %v2379 = vmul.f32 %v2371, 0.01
  %v2380 = vmul.f32 %v2372, 0.01
  %v2381 = vmul.f32 %v2373, 0.01
  %v2382 = vmul.f32 %v2374, 0.01
  %v2383 = vsel %vm2375, %v2371, %v2379
  %v2384 = vsel %vm2376, %v2372, %v2380
  %v2385 = vsel %vm2377, %v2373, %v2381
  %v2386 = vsel %vm2378, %v2374, %v2382
  %2387 = vst [vmem:[#allocation2 + $0xe0] sm:$0xff] %v2383
  %2388 = vst [vmem:[#allocation2 + $0xe8] sm:$0xff] %v2384
  %2389 = vst [vmem:[#allocation2 + $0xf0] sm:$0xff] %v2385
  %2390 = vst [vmem:[#allocation2 + $0xf8] sm:$0xff] %v2386
  %s2391 = scalar_lea.vmem %s0, 512
  %v2392 = vld [vmem:[%s2391] sm:$0xf]
  %v2393 = vld [vmem:[%s2391 + $0x4] sm:$0xf]
  %v2394 = vld [vmem:[%s2391 + $0x8] sm:$0xf]
  %v2395 = vld [vmem:[%s2391 + $0xc] sm:$0xf]
  %v2396 = vld [vmem:[%s2391 + $0x10] sm:$0xf]
  %v2397 = vld [vmem:[%s2391 + $0x14] sm:$0xf]
  %v2398 = vld [vmem:[%s2391 + $0x18] sm:$0xf]
  %v2399 = vld [vmem:[%s2391 + $0x1c] sm:$0xf]
  %v2400 = vld [vmem:[%s2391 + $0x20] sm:$0xf]
  %v2401 = vld [vmem:[%s2391 + $0x24] sm:$0xf]
  %v2402 = vld [vmem:[%s2391 + $0x28] sm:$0xf]
  %v2403 = vld [vmem:[%s2391 + $0x2c] sm:$0xf]
  %v2404 = vld [vmem:[%s2391 + $0x30] sm:$0xf]
  %v2405 = vld [vmem:[%s2391 + $0x34] sm:$0xf]
  %v2406 = vld [vmem:[%s2391 + $0x38] sm:$0xf]
  %v2407 = vld [vmem:[%s2391 + $0x3c] sm:$0xf]
  %v2424 = vunpack.c.l.b16 %v2392
  %v2425 = vunpack.c.l.b16 %v2393
  %v2426 = vunpack.c.l.b16 %v2394
  %v2427 = vunpack.c.l.b16 %v2395
  %v2428 = vunpack.c.l.b16 %v2396
  %v2429 = vunpack.c.l.b16 %v2397
  %v2430 = vunpack.c.l.b16 %v2398
  %v2431 = vunpack.c.l.b16 %v2399
  %v2432 = vunpack.c.l.b16 %v2400
  %v2433 = vunpack.c.l.b16 %v2401
  %v2434 = vunpack.c.l.b16 %v2402
  %v2435 = vunpack.c.l.b16 %v2403
  %v2436 = vunpack.c.l.b16 %v2404
  %v2437 = vunpack.c.l.b16 %v2405
  %v2438 = vunpack.c.l.b16 %v2406
  %v2439 = vunpack.c.l.b16 %v2407
  %v2440 = vpack.c.b16 %v2425, %v2424
  %v2441 = vpack.c.b16 %v2427, %v2426
  %v2442 = vpack.c.b16 %v2429, %v2428
  %v2443 = vpack.c.b16 %v2431, %v2430
  %v2444 = vpack.c.b16 %v2433, %v2432
  %v2445 = vpack.c.b16 %v2435, %v2434
  %v2446 = vpack.c.b16 %v2437, %v2436
  %v2447 = vpack.c.b16 %v2439, %v2438
  %2456 = vmatprep.subr.bf16.mxu0 0
  %2457 = vmatpush1.bf16.msra.mxu0 %v2440
  %2458 = vmatprep.subr.bf16.mxu0 0
  %2459 = vmatpush1.bf16.msra.mxu0 %v2441
  %2460 = vmatprep.subr.bf16.mxu0 0
  %2461 = vmatpush1.bf16.msra.mxu0 %v2442
  %2462 = vmatprep.subr.bf16.mxu0 0
  %2463 = vmatpush1.bf16.msra.mxu0 %v2443
  %2464 = vmatprep.subr.bf16.mxu0 0
  %2465 = vmatpush1.bf16.msra.mxu0 %v2444
  %2466 = vmatprep.subr.bf16.mxu0 0
  %2467 = vmatpush1.bf16.msra.mxu0 %v2445
  %2468 = vmatprep.subr.bf16.mxu0 0
  %2469 = vmatpush1.bf16.msra.mxu0 %v2446
  %2470 = vmatprep.subr.bf16.mxu0 0
  %2471 = vmatpush1.bf16.msra.mxu0 %v2447
  %2472 = vmatprep.subr.bf16.mxu0 0
  %2473 = vmatpush1.bf16.msra.mxu0 0
  %2474 = vmatprep.subr.bf16.mxu0 0
  %2475 = vmatpush1.bf16.msra.mxu0 0
  %2476 = vmatprep.subr.bf16.mxu0 0
  %2477 = vmatpush1.bf16.msra.mxu0 0
  %2478 = vmatprep.subr.bf16.mxu0 0
  %2479 = vmatpush1.bf16.msra.mxu0 0
  %2480 = vmatprep.subr.bf16.mxu0 0
  %2481 = vmatpush1.bf16.msra.mxu0 0
  %2482 = vmatprep.subr.bf16.mxu0 0
  %2483 = vmatpush1.bf16.msra.mxu0 0
  %2484 = vmatprep.subr.bf16.mxu0 0
  %2485 = vmatpush1.bf16.msra.mxu0 0
  %2486 = vmatprep.subr.bf16.mxu0 0
  %2487 = vmatpush1.bf16.msra.mxu0 0
  %2488 = vmatprep.mubr.bf16.mxu0 0
  %2489 = vmatmul.mubr.bf16.gmra.mrb[0].mxu0 %v174
  %v2490 = vpop.f32.mrb[0].mxu0
  %v2491 = vadd.f32 0.0, %v2490
  %v2492 = vpop.f32.mrb[0].mxu0
  %v2493 = vpop.f32.mrb[0].mxu0
  %v2494 = vadd.f32 0.0, %v2493
  %v2495 = vpop.f32.mrb[0].mxu0
  %2496 = vmatprep.mubr.bf16.mxu0 0
  %2497 = vmatmul.mubr.bf16.gmra.mrb[0].mxu0 %v175
  %v2498 = vpop.f32.mrb[0].mxu0
  %v2499 = vadd.f32 0.0, %v2498
  %v2500 = vpop.f32.mrb[0].mxu0
  %v2501 = vpop.f32.mrb[0].mxu0
  %v2502 = vadd.f32 0.0, %v2501
  %v2503 = vpop.f32.mrb[0].mxu0
  %2504 = vmatprep.mubr.bf16.mxu0 0
  %2505 = vmatmul.mubr.bf16.gmra.mrb[0].mxu0 %v176
  %v2506 = vpop.f32.mrb[0].mxu0
  %v2507 = vadd.f32 0.0, %v2506
  %v2508 = vpop.f32.mrb[0].mxu0
  %v2509 = vpop.f32.mrb[0].mxu0
  %v2510 = vadd.f32 0.0, %v2509
  %v2511 = vpop.f32.mrb[0].mxu0
  %2512 = vmatprep.mubr.bf16.mxu0 0
  %2513 = vmatmul.mubr.bf16.gmra.mrb[0].mxu0 %v177
  %v2514 = vpop.f32.mrb[0].mxu0
  %v2515 = vadd.f32 0.0, %v2514
  %v2516 = vpop.f32.mrb[0].mxu0
  %v2517 = vpop.f32.mrb[0].mxu0
  %v2518 = vadd.f32 0.0, %v2517
  %v2519 = vpop.f32.mrb[0].mxu0
  %2520 = vmatprep.mubr.bf16.mxu0 0
  %2521 = vmatmul.mubr.bf16.gmra.mrb[0].mxu0 %v178
  %v2522 = vpop.f32.mrb[0].mxu0
  %v2523 = vadd.f32 0.0, %v2522
  %v2524 = vpop.f32.mrb[0].mxu0
  %v2525 = vpop.f32.mrb[0].mxu0
  %v2526 = vadd.f32 0.0, %v2525
  %v2527 = vpop.f32.mrb[0].mxu0
  %2528 = vmatprep.mubr.bf16.mxu0 0
  %2529 = vmatmul.mubr.bf16.gmra.mrb[0].mxu0 %v179
  %v2530 = vpop.f32.mrb[0].mxu0
  %v2531 = vadd.f32 0.0, %v2530
  %v2532 = vpop.f32.mrb[0].mxu0
  %v2533 = vpop.f32.mrb[0].mxu0
  %v2534 = vadd.f32 0.0, %v2533
  %v2535 = vpop.f32.mrb[0].mxu0
  %2536 = vmatprep.mubr.bf16.mxu0 0
  %2537 = vmatmul.mubr.bf16.gmra.mrb[0].mxu0 %v180
  %v2538 = vpop.f32.mrb[0].mxu0
  %v2539 = vadd.f32 0.0, %v2538
  %v2540 = vpop.f32.mrb[0].mxu0
  %v2541 = vpop.f32.mrb[0].mxu0
  %v2542 = vadd.f32 0.0, %v2541
  %v2543 = vpop.f32.mrb[0].mxu0
  %2544 = vmatprep.mubr.bf16.mxu0 0
  %2545 = vmatmul.mubr.bf16.gmra.mrb[0].mxu0 %v181
  %v2546 = vpop.f32.mrb[0].mxu0
  %v2547 = vadd.f32 0.0, %v2546
  %v2548 = vpop.f32.mrb[0].mxu0
  %v2549 = vpop.f32.mrb[0].mxu0
  %v2550 = vadd.f32 0.0, %v2549
  %v2551 = vpop.f32.mrb[0].mxu0
  %2552 = vmatprep.mubr.bf16.mxu0 0
  %2553 = vmatmul.mubr.bf16.gmra.mrb[0].mxu0 %v182
  %v2554 = vpop.f32.mrb[0].mxu0
  %v2555 = vadd.f32 0.0, %v2554
  %v2556 = vpop.f32.mrb[0].mxu0
  %v2557 = vpop.f32.mrb[0].mxu0
  %v2558 = vadd.f32 0.0, %v2557
  %v2559 = vpop.f32.mrb[0].mxu0
  %2560 = vmatprep.mubr.bf16.mxu0 0
  %2561 = vmatmul.mubr.bf16.gmra.mrb[0].mxu0 %v183
  %v2562 = vpop.f32.mrb[0].mxu0
  %v2563 = vadd.f32 0.0, %v2562
  %v2564 = vpop.f32.mrb[0].mxu0
  %v2565 = vpop.f32.mrb[0].mxu0
  %v2566 = vadd.f32 0.0, %v2565
  %v2567 = vpop.f32.mrb[0].mxu0
  %2568 = vmatprep.mubr.bf16.mxu0 0
  %2569 = vmatmul.mubr.bf16.gmra.mrb[0].mxu0 %v184
  %v2570 = vpop.f32.mrb[0].mxu0
  %v2571 = vadd.f32 0.0, %v2570
  %v2572 = vpop.f32.mrb[0].mxu0
  %v2573 = vpop.f32.mrb[0].mxu0
  %v2574 = vadd.f32 0.0, %v2573
  %v2575 = vpop.f32.mrb[0].mxu0
  %2576 = vmatprep.mubr.bf16.mxu0 0
  %2577 = vmatmul.mubr.bf16.gmra.mrb[0].mxu0 %v185
  %v2578 = vpop.f32.mrb[0].mxu0
  %v2579 = vadd.f32 0.0, %v2578
  %v2580 = vpop.f32.mrb[0].mxu0
  %v2581 = vpop.f32.mrb[0].mxu0
  %v2582 = vadd.f32 0.0, %v2581
  %v2583 = vpop.f32.mrb[0].mxu0
  %2584 = vmatprep.mubr.bf16.mxu0 0
  %2585 = vmatmul.mubr.bf16.gmra.mrb[0].mxu0 %v186
  %v2586 = vpop.f32.mrb[0].mxu0
  %v2587 = vadd.f32 0.0, %v2586
  %v2588 = vpop.f32.mrb[0].mxu0
  %v2589 = vpop.f32.mrb[0].mxu0
  %v2590 = vadd.f32 0.0, %v2589
  %v2591 = vpop.f32.mrb[0].mxu0
  %2592 = vmatprep.mubr.bf16.mxu0 0
  %2593 = vmatmul.mubr.bf16.gmra.mrb[0].mxu0 %v187
  %v2594 = vpop.f32.mrb[0].mxu0
  %v2595 = vadd.f32 0.0, %v2594
  %v2596 = vpop.f32.mrb[0].mxu0
  %v2597 = vpop.f32.mrb[0].mxu0
  %v2598 = vadd.f32 0.0, %v2597
  %v2599 = vpop.f32.mrb[0].mxu0
  %2600 = vmatprep.mubr.bf16.mxu0 0
  %2601 = vmatmul.mubr.bf16.gmra.mrb[0].mxu0 %v188
  %v2602 = vpop.f32.mrb[0].mxu0
  %v2603 = vadd.f32 0.0, %v2602
  %v2604 = vpop.f32.mrb[0].mxu0
  %v2605 = vpop.f32.mrb[0].mxu0
  %v2606 = vadd.f32 0.0, %v2605
  %v2607 = vpop.f32.mrb[0].mxu0
  %2608 = vmatprep.mubr.bf16.mxu0 0
  %2609 = vmatmul.mubr.bf16.gmra.mrb[0].mxu0 %v189
  %v2610 = vpop.f32.mrb[0].mxu0
  %v2611 = vadd.f32 0.0, %v2610
  %v2612 = vpop.f32.mrb[0].mxu0
  %v2613 = vpop.f32.mrb[0].mxu0
  %v2614 = vadd.f32 0.0, %v2613
  %v2615 = vpop.f32.mrb[0].mxu0
  %2616 = vdwg.mxu0
  %v2617 = vmax.f32 %v2491, %v2499
  %v2618 = vmax.f32 %v2617, %v2507
  %v2619 = vmax.f32 %v2618, %v2515
  %v2620 = vmax.f32 %v2619, %v2523
  %v2621 = vmax.f32 %v2620, %v2531
  %v2622 = vmax.f32 %v2621, %v2539
  %v2623 = vmax.f32 %v2622, %v2547
  %v2624 = vmax.f32 %v2494, %v2502
  %v2625 = vmax.f32 %v2624, %v2510
  %v2626 = vmax.f32 %v2625, %v2518
  %v2627 = vmax.f32 %v2626, %v2526
  %v2628 = vmax.f32 %v2627, %v2534
  %v2629 = vmax.f32 %v2628, %v2542
  %v2630 = vmax.f32 %v2629, %v2550
  %v2631 = vmax.f32 %v2555, %v2563
  %v2632 = vmax.f32 %v2631, %v2571
  %v2633 = vmax.f32 %v2632, %v2579
  %v2634 = vmax.f32 %v2633, %v2587
  %v2635 = vmax.f32 %v2634, %v2595
  %v2636 = vmax.f32 %v2635, %v2603
  %v2637 = vmax.f32 %v2636, %v2611
  %v2638 = vmax.f32 %v2558, %v2566
  %v2639 = vmax.f32 %v2638, %v2574
  %v2640 = vmax.f32 %v2639, %v2582
  %v2641 = vmax.f32 %v2640, %v2590
  %v2642 = vmax.f32 %v2641, %v2598
  %v2643 = vmax.f32 %v2642, %v2606
  %v2644 = vmax.f32 %v2643, %v2614
  %v2645 = vadd.f32 %v2623, %v446
  %v2646 = vadd.f32 %v2630, %v451
  %v2647 = vadd.f32 %v2637, %v446
  %v2648 = vadd.f32 %v2644, %v451
  %vm2649 = vcmp.gt.f32.partialorder %v2645, 0.0
  %vm2650 = vcmp.gt.f32.partialorder %v2646, 0.0
  %vm2651 = vcmp.gt.f32.partialorder %v2647, 0.0
  %vm2652 = vcmp.gt.f32.partialorder %v2648, 0.0
  %v2653 = vmul.f32 %v2645, 0.01
  %v2654 = vmul.f32 %v2646, 0.01
  %v2655 = vmul.f32 %v2647, 0.01
  %v2656 = vmul.f32 %v2648, 0.01
  %v2657 = vsel %vm2649, %v2645, %v2653
  %v2658 = vsel %vm2650, %v2646, %v2654
  %v2659 = vsel %vm2651, %v2647, %v2655
  %v2660 = vsel %vm2652, %v2648, %v2656
  %2661 = vst [vmem:[#allocation2 + $0x100] sm:$0xff] %v2657
  %2662 = vst [vmem:[#allocation2 + $0x108] sm:$0xff] %v2658
  %2663 = vst [vmem:[#allocation2 + $0x110] sm:$0xff] %v2659
  %2664 = vst [vmem:[#allocation2 + $0x118] sm:$0xff] %v2660
  %s2665 = scalar_lea.vmem %s0, 576
  %v2666 = vld [vmem:[%s2665] sm:$0xf]
  %v2667 = vld [vmem:[%s2665 + $0x4] sm:$0xf]
  %v2668 = vld [vmem:[%s2665 + $0x8] sm:$0xf]
  %v2669 = vld [vmem:[%s2665 + $0xc] sm:$0xf]
  %v2670 = vld [vmem:[%s2665 + $0x10] sm:$0xf]
  %v2671 = vld [vmem:[%s2665 + $0x14] sm:$0xf]
  %v2672 = vld [vmem:[%s2665 + $0x18] sm:$0xf]
  %v2673 = vld [vmem:[%s2665 + $0x1c] sm:$0xf]
  %v2674 = vld [vmem:[%s2665 + $0x20] sm:$0xf]
  %v2675 = vld [vmem:[%s2665 + $0x24] sm:$0xf]
  %v2676 = vld [vmem:[%s2665 + $0x28] sm:$0xf]
  %v2677 = vld [vmem:[%s2665 + $0x2c] sm:$0xf]
  %v2678 = vld [vmem:[%s2665 + $0x30] sm:$0xf]
  %v2679 = vld [vmem:[%s2665 + $0x34] sm:$0xf]
  %v2680 = vld [vmem:[%s2665 + $0x38] sm:$0xf]
  %v2681 = vld [vmem:[%s2665 + $0x3c] sm:$0xf]
  %v2698 = vunpack.c.l.b16 %v2666
  %v2699 = vunpack.c.l.b16 %v2667
  %v2700 = vunpack.c.l.b16 %v2668
  %v2701 = vunpack.c.l.b16 %v2669
  %v2702 = vunpack.c.l.b16 %v2670
  %v2703 = vunpack.c.l.b16 %v2671
  %v2704 = vunpack.c.l.b16 %v2672
  %v2705 = vunpack.c.l.b16 %v2673
  %v2706 = vunpack.c.l.b16 %v2674
  %v2707 = vunpack.c.l.b16 %v2675
  %v2708 = vunpack.c.l.b16 %v2676
  %v2709 = vunpack.c.l.b16 %v2677
  %v2710 = vunpack.c.l.b16 %v2678
  %v2711 = vunpack.c.l.b16 %v2679
  %v2712 = vunpack.c.l.b16 %v2680
  %v2713 = vunpack.c.l.b16 %v2681
  %v2714 = vpack.c.b16 %v2699, %v2698
  %v2715 = vpack.c.b16 %v2701, %v2700
  %v2716 = vpack.c.b16 %v2703, %v2702
  %v2717 = vpack.c.b16 %v2705, %v2704
  %v2718 = vpack.c.b16 %v2707, %v2706
  %v2719 = vpack.c.b16 %v2709, %v2708
  %v2720 = vpack.c.b16 %v2711, %v2710
  %v2721 = vpack.c.b16 %v2713, %v2712
  %2730 = vmatprep.subr.bf16.mxu0 0
  %2731 = vmatpush1.bf16.msra.mxu0 %v2714
  %2732 = vmatprep.subr.bf16.mxu0 0
  %2733 = vmatpush1.bf16.msra.mxu0 %v2715
  %2734 = vmatprep.subr.bf16.mxu0 0
  %2735 = vmatpush1.bf16.msra.mxu0 %v2716
  %2736 = vmatprep.subr.bf16.mxu0 0
  %2737 = vmatpush1.bf16.msra.mxu0 %v2717
  %2738 = vmatprep.subr.bf16.mxu0 0
  %2739 = vmatpush1.bf16.msra.mxu0 %v2718
  %2740 = vmatprep.subr.bf16.mxu0 0
  %2741 = vmatpush1.bf16.msra.mxu0 %v2719
  %2742 = vmatprep.subr.bf16.mxu0 0
  %2743 = vmatpush1.bf16.msra.mxu0 %v2720
  %2744 = vmatprep.subr.bf16.mxu0 0
  %2745 = vmatpush1.bf16.msra.mxu0 %v2721
  %2746 = vmatprep.subr.bf16.mxu0 0
  %2747 = vmatpush1.bf16.msra.mxu0 0
  %2748 = vmatprep.subr.bf16.mxu0 0
  %2749 = vmatpush1.bf16.msra.mxu0 0
  %2750 = vmatprep.subr.bf16.mxu0 0
  %2751 = vmatpush1.bf16.msra.mxu0 0
  %2752 = vmatprep.subr.bf16.mxu0 0
  %2753 = vmatpush1.bf16.msra.mxu0 0
  %2754 = vmatprep.subr.bf16.mxu0 0
  %2755 = vmatpush1.bf16.msra.mxu0 0
  %2756 = vmatprep.subr.bf16.mxu0 0
  %2757 = vmatpush1.bf16.msra.mxu0 0
  %2758 = vmatprep.subr.bf16.mxu0 0
  %2759 = vmatpush1.bf16.msra.mxu0 0
  %2760 = vmatprep.subr.bf16.mxu0 0
  %2761 = vmatpush1.bf16.msra.mxu0 0
  %2762 = vmatprep.mubr.bf16.mxu0 0
  %2763 = vmatmul.mubr.bf16.gmra.mrb[0].mxu0 %v174
  %v2764 = vpop.f32.mrb[0].mxu0
  %v2765 = vadd.f32 0.0, %v2764
  %v2766 = vpop.f32.mrb[0].mxu0
  %v2767 = vpop.f32.mrb[0].mxu0
  %v2768 = vadd.f32 0.0, %v2767
  %v2769 = vpop.f32.mrb[0].mxu0
  %2770 = vmatprep.mubr.bf16.mxu0 0
  %2771 = vmatmul.mubr.bf16.gmra.mrb[0].mxu0 %v175
  %v2772 = vpop.f32.mrb[0].mxu0
  %v2773 = vadd.f32 0.0, %v2772
  %v2774 = vpop.f32.mrb[0].mxu0
  %v2775 = vpop.f32.mrb[0].mxu0
  %v2776 = vadd.f32 0.0, %v2775
  %v2777 = vpop.f32.mrb[0].mxu0
  %2778 = vmatprep.mubr.bf16.mxu0 0
  %2779 = vmatmul.mubr.bf16.gmra.mrb[0].mxu0 %v176
  %v2780 = vpop.f32.mrb[0].mxu0
  %v2781 = vadd.f32 0.0, %v2780
  %v2782 = vpop.f32.mrb[0].mxu0
  %v2783 = vpop.f32.mrb[0].mxu0
  %v2784 = vadd.f32 0.0, %v2783
  %v2785 = vpop.f32.mrb[0].mxu0
  %2786 = vmatprep.mubr.bf16.mxu0 0
  %2787 = vmatmul.mubr.bf16.gmra.mrb[0].mxu0 %v177
  %v2788 = vpop.f32.mrb[0].mxu0
  %v2789 = vadd.f32 0.0, %v2788
  %v2790 = vpop.f32.mrb[0].mxu0
  %v2791 = vpop.f32.mrb[0].mxu0
  %v2792 = vadd.f32 0.0, %v2791
  %v2793 = vpop.f32.mrb[0].mxu0
  %2794 = vmatprep.mubr.bf16.mxu0 0
  %2795 = vmatmul.mubr.bf16.gmra.mrb[0].mxu0 %v178
  %v2796 = vpop.f32.mrb[0].mxu0
  %v2797 = vadd.f32 0.0, %v2796
  %v2798 = vpop.f32.mrb[0].mxu0
  %v2799 = vpop.f32.mrb[0].mxu0
  %v2800 = vadd.f32 0.0, %v2799
  %v2801 = vpop.f32.mrb[0].mxu0
  %2802 = vmatprep.mubr.bf16.mxu0 0
  %2803 = vmatmul.mubr.bf16.gmra.mrb[0].mxu0 %v179
  %v2804 = vpop.f32.mrb[0].mxu0
  %v2805 = vadd.f32 0.0, %v2804
  %v2806 = vpop.f32.mrb[0].mxu0
  %v2807 = vpop.f32.mrb[0].mxu0
  %v2808 = vadd.f32 0.0, %v2807
  %v2809 = vpop.f32.mrb[0].mxu0
  %2810 = vmatprep.mubr.bf16.mxu0 0
  %2811 = vmatmul.mubr.bf16.gmra.mrb[0].mxu0 %v180
  %v2812 = vpop.f32.mrb[0].mxu0
  %v2813 = vadd.f32 0.0, %v2812
  %v2814 = vpop.f32.mrb[0].mxu0
  %v2815 = vpop.f32.mrb[0].mxu0
  %v2816 = vadd.f32 0.0, %v2815
  %v2817 = vpop.f32.mrb[0].mxu0
  %2818 = vmatprep.mubr.bf16.mxu0 0
  %2819 = vmatmul.mubr.bf16.gmra.mrb[0].mxu0 %v181
  %v2820 = vpop.f32.mrb[0].mxu0
  %v2821 = vadd.f32 0.0, %v2820
  %v2822 = vpop.f32.mrb[0].mxu0
  %v2823 = vpop.f32.mrb[0].mxu0
  %v2824 = vadd.f32 0.0, %v2823
  %v2825 = vpop.f32.mrb[0].mxu0
  %2826 = vmatprep.mubr.bf16.mxu0 0
  %2827 = vmatmul.mubr.bf16.gmra.mrb[0].mxu0 %v182
  %v2828 = vpop.f32.mrb[0].mxu0
  %v2829 = vadd.f32 0.0, %v2828
  %v2830 = vpop.f32.mrb[0].mxu0
  %v2831 = vpop.f32.mrb[0].mxu0
  %v2832 = vadd.f32 0.0, %v2831
  %v2833 = vpop.f32.mrb[0].mxu0
  %2834 = vmatprep.mubr.bf16.mxu0 0
  %2835 = vmatmul.mubr.bf16.gmra.mrb[0].mxu0 %v183
  %v2836 = vpop.f32.mrb[0].mxu0
  %v2837 = vadd.f32 0.0, %v2836
  %v2838 = vpop.f32.mrb[0].mxu0
  %v2839 = vpop.f32.mrb[0].mxu0
  %v2840 = vadd.f32 0.0, %v2839
  %v2841 = vpop.f32.mrb[0].mxu0
  %2842 = vmatprep.mubr.bf16.mxu0 0
  %2843 = vmatmul.mubr.bf16.gmra.mrb[0].mxu0 %v184
  %v2844 = vpop.f32.mrb[0].mxu0
  %v2845 = vadd.f32 0.0, %v2844
  %v2846 = vpop.f32.mrb[0].mxu0
  %v2847 = vpop.f32.mrb[0].mxu0
  %v2848 = vadd.f32 0.0, %v2847
  %v2849 = vpop.f32.mrb[0].mxu0
  %2850 = vmatprep.mubr.bf16.mxu0 0
  %2851 = vmatmul.mubr.bf16.gmra.mrb[0].mxu0 %v185
  %v2852 = vpop.f32.mrb[0].mxu0
  %v2853 = vadd.f32 0.0, %v2852
  %v2854 = vpop.f32.mrb[0].mxu0
  %v2855 = vpop.f32.mrb[0].mxu0
  %v2856 = vadd.f32 0.0, %v2855
  %v2857 = vpop.f32.mrb[0].mxu0
  %2858 = vmatprep.mubr.bf16.mxu0 0
  %2859 = vmatmul.mubr.bf16.gmra.mrb[0].mxu0 %v186
  %v2860 = vpop.f32.mrb[0].mxu0
  %v2861 = vadd.f32 0.0, %v2860
  %v2862 = vpop.f32.mrb[0].mxu0
  %v2863 = vpop.f32.mrb[0].mxu0
  %v2864 = vadd.f32 0.0, %v2863
  %v2865 = vpop.f32.mrb[0].mxu0
  %2866 = vmatprep.mubr.bf16.mxu0 0
  %2867 = vmatmul.mubr.bf16.gmra.mrb[0].mxu0 %v187
  %v2868 = vpop.f32.mrb[0].mxu0
  %v2869 = vadd.f32 0.0, %v2868
  %v2870 = vpop.f32.mrb[0].mxu0
  %v2871 = vpop.f32.mrb[0].mxu0
  %v2872 = vadd.f32 0.0, %v2871
  %v2873 = vpop.f32.mrb[0].mxu0
  %2874 = vmatprep.mubr.bf16.mxu0 0
  %2875 = vmatmul.mubr.bf16.gmra.mrb[0].mxu0 %v188
  %v2876 = vpop.f32.mrb[0].mxu0
  %v2877 = vadd.f32 0.0, %v2876
  %v2878 = vpop.f32.mrb[0].mxu0
  %v2879 = vpop.f32.mrb[0].mxu0
  %v2880 = vadd.f32 0.0, %v2879
  %v2881 = vpop.f32.mrb[0].mxu0
  %2882 = vmatprep.mubr.bf16.mxu0 0
  %2883 = vmatmul.mubr.bf16.gmra.mrb[0].mxu0 %v189
  %v2884 = vpop.f32.mrb[0].mxu0
  %v2885 = vadd.f32 0.0, %v2884
  %v2886 = vpop.f32.mrb[0].mxu0
  %v2887 = vpop.f32.mrb[0].mxu0
  %v2888 = vadd.f32 0.0, %v2887
  %v2889 = vpop.f32.mrb[0].mxu0
  %2890 = vdwg.mxu0
  %v2891 = vmax.f32 %v2765, %v2773
  %v2892 = vmax.f32 %v2891, %v2781
  %v2893 = vmax.f32 %v2892, %v2789
  %v2894 = vmax.f32 %v2893, %v2797
  %v2895 = vmax.f32 %v2894, %v2805
  %v2896 = vmax.f32 %v2895, %v2813
  %v2897 = vmax.f32 %v2896, %v2821
  %v2898 = vmax.f32 %v2768, %v2776
  %v2899 = vmax.f32 %v2898, %v2784
  %v2900 = vmax.f32 %v2899, %v2792
  %v2901 = vmax.f32 %v2900, %v2800
  %v2902 = vmax.f32 %v2901, %v2808
  %v2903 = vmax.f32 %v2902, %v2816
  %v2904 = vmax.f32 %v2903, %v2824
  %v2905 = vmax.f32 %v2829, %v2837
  %v2906 = vmax.f32 %v2905, %v2845
  %v2907 = vmax.f32 %v2906, %v2853
  %v2908 = vmax.f32 %v2907, %v2861
  %v2909 = vmax.f32 %v2908, %v2869
  %v2910 = vmax.f32 %v2909, %v2877
  %v2911 = vmax.f32 %v2910, %v2885
  %v2912 = vmax.f32 %v2832, %v2840
  %v2913 = vmax.f32 %v2912, %v2848
  %v2914 = vmax.f32 %v2913, %v2856
  %v2915 = vmax.f32 %v2914, %v2864
  %v2916 = vmax.f32 %v2915, %v2872
  %v2917 = vmax.f32 %v2916, %v2880
  %v2918 = vmax.f32 %v2917, %v2888
  %v2919 = vadd.f32 %v2897, %v446
  %v2920 = vadd.f32 %v2904, %v451
  %v2921 = vadd.f32 %v2911, %v446
  %v2922 = vadd.f32 %v2918, %v451
  %vm2923 = vcmp.gt.f32.partialorder %v2919, 0.0
  %vm2924 = vcmp.gt.f32.partialorder %v2920, 0.0
  %vm2925 = vcmp.gt.f32.partialorder %v2921, 0.0
  %vm2926 = vcmp.gt.f32.partialorder %v2922, 0.0
  %v2927 = vmul.f32 %v2919, 0.01
  %v2928 = vmul.f32 %v2920, 0.01
  %v2929 = vmul.f32 %v2921, 0.01
  %v2930 = vmul.f32 %v2922, 0.01
  %v2931 = vsel %vm2923, %v2919, %v2927
  %v2932 = vsel %vm2924, %v2920, %v2928
  %v2933 = vsel %vm2925, %v2921, %v2929
  %v2934 = vsel %vm2926, %v2922, %v2930
  %2935 = vst [vmem:[#allocation2 + $0x120] sm:$0xff] %v2931
  %2936 = vst [vmem:[#allocation2 + $0x128] sm:$0xff] %v2932
  %2937 = vst [vmem:[#allocation2 + $0x130] sm:$0xff] %v2933
  %2938 = vst [vmem:[#allocation2 + $0x138] sm:$0xff] %v2934
  %s2939 = scalar_lea.vmem %s0, 640
  %v2940 = vld [vmem:[%s2939] sm:$0xf]
  %v2941 = vld [vmem:[%s2939 + $0x4] sm:$0xf]
  %v2942 = vld [vmem:[%s2939 + $0x8] sm:$0xf]
  %v2943 = vld [vmem:[%s2939 + $0xc] sm:$0xf]
  %v2944 = vld [vmem:[%s2939 + $0x10] sm:$0xf]
  %v2945 = vld [vmem:[%s2939 + $0x14] sm:$0xf]
  %v2946 = vld [vmem:[%s2939 + $0x18] sm:$0xf]
  %v2947 = vld [vmem:[%s2939 + $0x1c] sm:$0xf]
  %v2948 = vld [vmem:[%s2939 + $0x20] sm:$0xf]
  %v2949 = vld [vmem:[%s2939 + $0x24] sm:$0xf]
  %v2950 = vld [vmem:[%s2939 + $0x28] sm:$0xf]
  %v2951 = vld [vmem:[%s2939 + $0x2c] sm:$0xf]
  %v2952 = vld [vmem:[%s2939 + $0x30] sm:$0xf]
  %v2953 = vld [vmem:[%s2939 + $0x34] sm:$0xf]
  %v2954 = vld [vmem:[%s2939 + $0x38] sm:$0xf]
  %v2955 = vld [vmem:[%s2939 + $0x3c] sm:$0xf]
  %v2972 = vunpack.c.l.b16 %v2940
  %v2973 = vunpack.c.l.b16 %v2941
  %v2974 = vunpack.c.l.b16 %v2942
  %v2975 = vunpack.c.l.b16 %v2943
  %v2976 = vunpack.c.l.b16 %v2944
  %v2977 = vunpack.c.l.b16 %v2945
  %v2978 = vunpack.c.l.b16 %v2946
  %v2979 = vunpack.c.l.b16 %v2947
  %v2980 = vunpack.c.l.b16 %v2948
  %v2981 = vunpack.c.l.b16 %v2949
  %v2982 = vunpack.c.l.b16 %v2950
  %v2983 = vunpack.c.l.b16 %v2951
  %v2984 = vunpack.c.l.b16 %v2952
  %v2985 = vunpack.c.l.b16 %v2953
  %v2986 = vunpack.c.l.b16 %v2954
  %v2987 = vunpack.c.l.b16 %v2955
  %v2988 = vpack.c.b16 %v2973, %v2972
  %v2989 = vpack.c.b16 %v2975, %v2974
  %v2990 = vpack.c.b16 %v2977, %v2976
  %v2991 = vpack.c.b16 %v2979, %v2978
  %v2992 = vpack.c.b16 %v2981, %v2980
  %v2993 = vpack.c.b16 %v2983, %v2982
  %v2994 = vpack.c.b16 %v2985, %v2984
  %v2995 = vpack.c.b16 %v2987, %v2986
  %3004 = vmatprep.subr.bf16.mxu0 0
  %3005 = vmatpush1.bf16.msra.mxu0 %v2988
  %3006 = vmatprep.subr.bf16.mxu0 0
  %3007 = vmatpush1.bf16.msra.mxu0 %v2989
  %3008 = vmatprep.subr.bf16.mxu0 0
  %3009 = vmatpush1.bf16.msra.mxu0 %v2990
  %3010 = vmatprep.subr.bf16.mxu0 0
  %3011 = vmatpush1.bf16.msra.mxu0 %v2991
  %3012 = vmatprep.subr.bf16.mxu0 0
  %3013 = vmatpush1.bf16.msra.mxu0 %v2992
  %3014 = vmatprep.subr.bf16.mxu0 0
  %3015 = vmatpush1.bf16.msra.mxu0 %v2993
  %3016 = vmatprep.subr.bf16.mxu0 0
  %3017 = vmatpush1.bf16.msra.mxu0 %v2994
  %3018 = vmatprep.subr.bf16.mxu0 0
  %3019 = vmatpush1.bf16.msra.mxu0 %v2995
  %3020 = vmatprep.subr.bf16.mxu0 0
  %3021 = vmatpush1.bf16.msra.mxu0 0
  %3022 = vmatprep.subr.bf16.mxu0 0
  %3023 = vmatpush1.bf16.msra.mxu0 0
  %3024 = vmatprep.subr.bf16.mxu0 0
  %3025 = vmatpush1.bf16.msra.mxu0 0
  %3026 = vmatprep.subr.bf16.mxu0 0
  %3027 = vmatpush1.bf16.msra.mxu0 0
  %3028 = vmatprep.subr.bf16.mxu0 0
  %3029 = vmatpush1.bf16.msra.mxu0 0
  %3030 = vmatprep.subr.bf16.mxu0 0
  %3031 = vmatpush1.bf16.msra.mxu0 0
  %3032 = vmatprep.subr.bf16.mxu0 0
  %3033 = vmatpush1.bf16.msra.mxu0 0
  %3034 = vmatprep.subr.bf16.mxu0 0
  %3035 = vmatpush1.bf16.msra.mxu0 0
  %3036 = vmatprep.mubr.bf16.mxu0 0
  %3037 = vmatmul.mubr.bf16.gmra.mrb[0].mxu0 %v174
  %v3038 = vpop.f32.mrb[0].mxu0
  %v3039 = vadd.f32 0.0, %v3038
  %v3040 = vpop.f32.mrb[0].mxu0
  %v3041 = vpop.f32.mrb[0].mxu0
  %v3042 = vadd.f32 0.0, %v3041
  %v3043 = vpop.f32.mrb[0].mxu0
  %3044 = vmatprep.mubr.bf16.mxu0 0
  %3045 = vmatmul.mubr.bf16.gmra.mrb[0].mxu0 %v175
  %v3046 = vpop.f32.mrb[0].mxu0
  %v3047 = vadd.f32 0.0, %v3046
  %v3048 = vpop.f32.mrb[0].mxu0
  %v3049 = vpop.f32.mrb[0].mxu0
  %v3050 = vadd.f32 0.0, %v3049
  %v3051 = vpop.f32.mrb[0].mxu0
  %3052 = vmatprep.mubr.bf16.mxu0 0
  %3053 = vmatmul.mubr.bf16.gmra.mrb[0].mxu0 %v176
  %v3054 = vpop.f32.mrb[0].mxu0
  %v3055 = vadd.f32 0.0, %v3054
  %v3056 = vpop.f32.mrb[0].mxu0
  %v3057 = vpop.f32.mrb[0].mxu0
  %v3058 = vadd.f32 0.0, %v3057
  %v3059 = vpop.f32.mrb[0].mxu0
  %3060 = vmatprep.mubr.bf16.mxu0 0
  %3061 = vmatmul.mubr.bf16.gmra.mrb[0].mxu0 %v177
  %v3062 = vpop.f32.mrb[0].mxu0
  %v3063 = vadd.f32 0.0, %v3062
  %v3064 = vpop.f32.mrb[0].mxu0
  %v3065 = vpop.f32.mrb[0].mxu0
  %v3066 = vadd.f32 0.0, %v3065
  %v3067 = vpop.f32.mrb[0].mxu0
  %3068 = vmatprep.mubr.bf16.mxu0 0
  %3069 = vmatmul.mubr.bf16.gmra.mrb[0].mxu0 %v178
  %v3070 = vpop.f32.mrb[0].mxu0
  %v3071 = vadd.f32 0.0, %v3070
  %v3072 = vpop.f32.mrb[0].mxu0
  %v3073 = vpop.f32.mrb[0].mxu0
  %v3074 = vadd.f32 0.0, %v3073
  %v3075 = vpop.f32.mrb[0].mxu0
  %3076 = vmatprep.mubr.bf16.mxu0 0
  %3077 = vmatmul.mubr.bf16.gmra.mrb[0].mxu0 %v179
  %v3078 = vpop.f32.mrb[0].mxu0
  %v3079 = vadd.f32 0.0, %v3078
  %v3080 = vpop.f32.mrb[0].mxu0
  %v3081 = vpop.f32.mrb[0].mxu0
  %v3082 = vadd.f32 0.0, %v3081
  %v3083 = vpop.f32.mrb[0].mxu0
  %3084 = vmatprep.mubr.bf16.mxu0 0
  %3085 = vmatmul.mubr.bf16.gmra.mrb[0].mxu0 %v180
  %v3086 = vpop.f32.mrb[0].mxu0
  %v3087 = vadd.f32 0.0, %v3086
  %v3088 = vpop.f32.mrb[0].mxu0
  %v3089 = vpop.f32.mrb[0].mxu0
  %v3090 = vadd.f32 0.0, %v3089
  %v3091 = vpop.f32.mrb[0].mxu0
  %3092 = vmatprep.mubr.bf16.mxu0 0
  %3093 = vmatmul.mubr.bf16.gmra.mrb[0].mxu0 %v181
  %v3094 = vpop.f32.mrb[0].mxu0
  %v3095 = vadd.f32 0.0, %v3094
  %v3096 = vpop.f32.mrb[0].mxu0
  %v3097 = vpop.f32.mrb[0].mxu0
  %v3098 = vadd.f32 0.0, %v3097
  %v3099 = vpop.f32.mrb[0].mxu0
  %3100 = vmatprep.mubr.bf16.mxu0 0
  %3101 = vmatmul.mubr.bf16.gmra.mrb[0].mxu0 %v182
  %v3102 = vpop.f32.mrb[0].mxu0
  %v3103 = vadd.f32 0.0, %v3102
  %v3104 = vpop.f32.mrb[0].mxu0
  %v3105 = vpop.f32.mrb[0].mxu0
  %v3106 = vadd.f32 0.0, %v3105
  %v3107 = vpop.f32.mrb[0].mxu0
  %3108 = vmatprep.mubr.bf16.mxu0 0
  %3109 = vmatmul.mubr.bf16.gmra.mrb[0].mxu0 %v183
  %v3110 = vpop.f32.mrb[0].mxu0
  %v3111 = vadd.f32 0.0, %v3110
  %v3112 = vpop.f32.mrb[0].mxu0
  %v3113 = vpop.f32.mrb[0].mxu0
  %v3114 = vadd.f32 0.0, %v3113
  %v3115 = vpop.f32.mrb[0].mxu0
  %3116 = vmatprep.mubr.bf16.mxu0 0
  %3117 = vmatmul.mubr.bf16.gmra.mrb[0].mxu0 %v184
  %v3118 = vpop.f32.mrb[0].mxu0
  %v3119 = vadd.f32 0.0, %v3118
  %v3120 = vpop.f32.mrb[0].mxu0
  %v3121 = vpop.f32.mrb[0].mxu0
  %v3122 = vadd.f32 0.0, %v3121
  %v3123 = vpop.f32.mrb[0].mxu0
  %3124 = vmatprep.mubr.bf16.mxu0 0
  %3125 = vmatmul.mubr.bf16.gmra.mrb[0].mxu0 %v185
  %v3126 = vpop.f32.mrb[0].mxu0
  %v3127 = vadd.f32 0.0, %v3126
  %v3128 = vpop.f32.mrb[0].mxu0
  %v3129 = vpop.f32.mrb[0].mxu0
  %v3130 = vadd.f32 0.0, %v3129
  %v3131 = vpop.f32.mrb[0].mxu0
  %3132 = vmatprep.mubr.bf16.mxu0 0
  %3133 = vmatmul.mubr.bf16.gmra.mrb[0].mxu0 %v186
  %v3134 = vpop.f32.mrb[0].mxu0
  %v3135 = vadd.f32 0.0, %v3134
  %v3136 = vpop.f32.mrb[0].mxu0
  %v3137 = vpop.f32.mrb[0].mxu0
  %v3138 = vadd.f32 0.0, %v3137
  %v3139 = vpop.f32.mrb[0].mxu0
  %3140 = vmatprep.mubr.bf16.mxu0 0
  %3141 = vmatmul.mubr.bf16.gmra.mrb[0].mxu0 %v187
  %v3142 = vpop.f32.mrb[0].mxu0
  %v3143 = vadd.f32 0.0, %v3142
  %v3144 = vpop.f32.mrb[0].mxu0
  %v3145 = vpop.f32.mrb[0].mxu0
  %v3146 = vadd.f32 0.0, %v3145
  %v3147 = vpop.f32.mrb[0].mxu0
  %3148 = vmatprep.mubr.bf16.mxu0 0
  %3149 = vmatmul.mubr.bf16.gmra.mrb[0].mxu0 %v188
  %v3150 = vpop.f32.mrb[0].mxu0
  %v3151 = vadd.f32 0.0, %v3150
  %v3152 = vpop.f32.mrb[0].mxu0
  %v3153 = vpop.f32.mrb[0].mxu0
  %v3154 = vadd.f32 0.0, %v3153
  %v3155 = vpop.f32.mrb[0].mxu0
  %3156 = vmatprep.mubr.bf16.mxu0 0
  %3157 = vmatmul.mubr.bf16.gmra.mrb[0].mxu0 %v189
  %v3158 = vpop.f32.mrb[0].mxu0
  %v3159 = vadd.f32 0.0, %v3158
  %v3160 = vpop.f32.mrb[0].mxu0
  %v3161 = vpop.f32.mrb[0].mxu0
  %v3162 = vadd.f32 0.0, %v3161
  %v3163 = vpop.f32.mrb[0].mxu0
  %3164 = vdwg.mxu0
  %v3165 = vmax.f32 %v3039, %v3047
  %v3166 = vmax.f32 %v3165, %v3055
  %v3167 = vmax.f32 %v3166, %v3063
  %v3168 = vmax.f32 %v3167, %v3071
  %v3169 = vmax.f32 %v3168, %v3079
  %v3170 = vmax.f32 %v3169, %v3087
  %v3171 = vmax.f32 %v3170, %v3095
  %v3172 = vmax.f32 %v3042, %v3050
  %v3173 = vmax.f32 %v3172, %v3058
  %v3174 = vmax.f32 %v3173, %v3066
  %v3175 = vmax.f32 %v3174, %v3074
  %v3176 = vmax.f32 %v3175, %v3082
  %v3177 = vmax.f32 %v3176, %v3090
  %v3178 = vmax.f32 %v3177, %v3098
  %v3179 = vmax.f32 %v3103, %v3111
  %v3180 = vmax.f32 %v3179, %v3119
  %v3181 = vmax.f32 %v3180, %v3127
  %v3182 = vmax.f32 %v3181, %v3135
  %v3183 = vmax.f32 %v3182, %v3143
  %v3184 = vmax.f32 %v3183, %v3151
  %v3185 = vmax.f32 %v3184, %v3159
  %v3186 = vmax.f32 %v3106, %v3114
  %v3187 = vmax.f32 %v3186, %v3122
  %v3188 = vmax.f32 %v3187, %v3130
  %v3189 = vmax.f32 %v3188, %v3138
  %v3190 = vmax.f32 %v3189, %v3146
  %v3191 = vmax.f32 %v3190, %v3154
  %v3192 = vmax.f32 %v3191, %v3162
  %v3193 = vadd.f32 %v3171, %v446
  %v3194 = vadd.f32 %v3178, %v451
  %v3195 = vadd.f32 %v3185, %v446
  %v3196 = vadd.f32 %v3192, %v451
  %vm3197 = vcmp.gt.f32.partialorder %v3193, 0.0
  %vm3198 = vcmp.gt.f32.partialorder %v3194, 0.0
  %vm3199 = vcmp.gt.f32.partialorder %v3195, 0.0
  %vm3200 = vcmp.gt.f32.partialorder %v3196, 0.0
  %v3201 = vmul.f32 %v3193, 0.01
  %v3202 = vmul.f32 %v3194, 0.01
  %v3203 = vmul.f32 %v3195, 0.01
  %v3204 = vmul.f32 %v3196, 0.01
  %v3205 = vsel %vm3197, %v3193, %v3201
  %v3206 = vsel %vm3198, %v3194, %v3202
  %v3207 = vsel %vm3199, %v3195, %v3203
  %v3208 = vsel %vm3200, %v3196, %v3204
  %3209 = vst [vmem:[#allocation2 + $0x140] sm:$0xff] %v3205
  %3210 = vst [vmem:[#allocation2 + $0x148] sm:$0xff] %v3206
  %3211 = vst [vmem:[#allocation2 + $0x150] sm:$0xff] %v3207
  %3212 = vst [vmem:[#allocation2 + $0x158] sm:$0xff] %v3208
  %s3213 = scalar_lea.vmem %s0, 704
  %v3214 = vld [vmem:[%s3213] sm:$0xf]
  %v3215 = vld [vmem:[%s3213 + $0x4] sm:$0xf]
  %v3216 = vld [vmem:[%s3213 + $0x8] sm:$0xf]
  %v3217 = vld [vmem:[%s3213 + $0xc] sm:$0xf]
  %v3218 = vld [vmem:[%s3213 + $0x10] sm:$0xf]
  %v3219 = vld [vmem:[%s3213 + $0x14] sm:$0xf]
  %v3220 = vld [vmem:[%s3213 + $0x18] sm:$0xf]
  %v3221 = vld [vmem:[%s3213 + $0x1c] sm:$0xf]
  %v3222 = vld [vmem:[%s3213 + $0x20] sm:$0xf]
  %v3223 = vld [vmem:[%s3213 + $0x24] sm:$0xf]
  %v3224 = vld [vmem:[%s3213 + $0x28] sm:$0xf]
  %v3225 = vld [vmem:[%s3213 + $0x2c] sm:$0xf]
  %v3226 = vld [vmem:[%s3213 + $0x30] sm:$0xf]
  %v3227 = vld [vmem:[%s3213 + $0x34] sm:$0xf]
  %v3228 = vld [vmem:[%s3213 + $0x38] sm:$0xf]
  %v3229 = vld [vmem:[%s3213 + $0x3c] sm:$0xf]
  %v3246 = vunpack.c.l.b16 %v3214
  %v3247 = vunpack.c.l.b16 %v3215
  %v3248 = vunpack.c.l.b16 %v3216
  %v3249 = vunpack.c.l.b16 %v3217
  %v3250 = vunpack.c.l.b16 %v3218
  %v3251 = vunpack.c.l.b16 %v3219
  %v3252 = vunpack.c.l.b16 %v3220
  %v3253 = vunpack.c.l.b16 %v3221
  %v3254 = vunpack.c.l.b16 %v3222
  %v3255 = vunpack.c.l.b16 %v3223
  %v3256 = vunpack.c.l.b16 %v3224
  %v3257 = vunpack.c.l.b16 %v3225
  %v3258 = vunpack.c.l.b16 %v3226
  %v3259 = vunpack.c.l.b16 %v3227
  %v3260 = vunpack.c.l.b16 %v3228
  %v3261 = vunpack.c.l.b16 %v3229
  %v3262 = vpack.c.b16 %v3247, %v3246
  %v3263 = vpack.c.b16 %v3249, %v3248
  %v3264 = vpack.c.b16 %v3251, %v3250
  %v3265 = vpack.c.b16 %v3253, %v3252
  %v3266 = vpack.c.b16 %v3255, %v3254
  %v3267 = vpack.c.b16 %v3257, %v3256
  %v3268 = vpack.c.b16 %v3259, %v3258
  %v3269 = vpack.c.b16 %v3261, %v3260
  %3278 = vmatprep.subr.bf16.mxu0 0
  %3279 = vmatpush1.bf16.msra.mxu0 %v3262
  %3280 = vmatprep.subr.bf16.mxu0 0
  %3281 = vmatpush1.bf16.msra.mxu0 %v3263
  %3282 = vmatprep.subr.bf16.mxu0 0
  %3283 = vmatpush1.bf16.msra.mxu0 %v3264
  %3284 = vmatprep.subr.bf16.mxu0 0
  %3285 = vmatpush1.bf16.msra.mxu0 %v3265
  %3286 = vmatprep.subr.bf16.mxu0 0
  %3287 = vmatpush1.bf16.msra.mxu0 %v3266
  %3288 = vmatprep.subr.bf16.mxu0 0
  %3289 = vmatpush1.bf16.msra.mxu0 %v3267
  %3290 = vmatprep.subr.bf16.mxu0 0
  %3291 = vmatpush1.bf16.msra.mxu0 %v3268
  %3292 = vmatprep.subr.bf16.mxu0 0
  %3293 = vmatpush1.bf16.msra.mxu0 %v3269
  %3294 = vmatprep.subr.bf16.mxu0 0
  %3295 = vmatpush1.bf16.msra.mxu0 0
  %3296 = vmatprep.subr.bf16.mxu0 0
  %3297 = vmatpush1.bf16.msra.mxu0 0
  %3298 = vmatprep.subr.bf16.mxu0 0
  %3299 = vmatpush1.bf16.msra.mxu0 0
  %3300 = vmatprep.subr.bf16.mxu0 0
  %3301 = vmatpush1.bf16.msra.mxu0 0
  %3302 = vmatprep.subr.bf16.mxu0 0
  %3303 = vmatpush1.bf16.msra.mxu0 0
  %3304 = vmatprep.subr.bf16.mxu0 0
  %3305 = vmatpush1.bf16.msra.mxu0 0
  %3306 = vmatprep.subr.bf16.mxu0 0
  %3307 = vmatpush1.bf16.msra.mxu0 0
  %3308 = vmatprep.subr.bf16.mxu0 0
  %3309 = vmatpush1.bf16.msra.mxu0 0
  %3310 = vmatprep.mubr.bf16.mxu0 0
  %3311 = vmatmul.mubr.bf16.gmra.mrb[0].mxu0 %v174
  %v3312 = vpop.f32.mrb[0].mxu0
  %v3313 = vadd.f32 0.0, %v3312
  %v3314 = vpop.f32.mrb[0].mxu0
  %v3315 = vpop.f32.mrb[0].mxu0
  %v3316 = vadd.f32 0.0, %v3315
  %v3317 = vpop.f32.mrb[0].mxu0
  %3318 = vmatprep.mubr.bf16.mxu0 0
  %3319 = vmatmul.mubr.bf16.gmra.mrb[0].mxu0 %v175
  %v3320 = vpop.f32.mrb[0].mxu0
  %v3321 = vadd.f32 0.0, %v3320
  %v3322 = vpop.f32.mrb[0].mxu0
  %v3323 = vpop.f32.mrb[0].mxu0
  %v3324 = vadd.f32 0.0, %v3323
  %v3325 = vpop.f32.mrb[0].mxu0
  %3326 = vmatprep.mubr.bf16.mxu0 0
  %3327 = vmatmul.mubr.bf16.gmra.mrb[0].mxu0 %v176
  %v3328 = vpop.f32.mrb[0].mxu0
  %v3329 = vadd.f32 0.0, %v3328
  %v3330 = vpop.f32.mrb[0].mxu0
  %v3331 = vpop.f32.mrb[0].mxu0
  %v3332 = vadd.f32 0.0, %v3331
  %v3333 = vpop.f32.mrb[0].mxu0
  %3334 = vmatprep.mubr.bf16.mxu0 0
  %3335 = vmatmul.mubr.bf16.gmra.mrb[0].mxu0 %v177
  %v3336 = vpop.f32.mrb[0].mxu0
  %v3337 = vadd.f32 0.0, %v3336
  %v3338 = vpop.f32.mrb[0].mxu0
  %v3339 = vpop.f32.mrb[0].mxu0
  %v3340 = vadd.f32 0.0, %v3339
  %v3341 = vpop.f32.mrb[0].mxu0
  %3342 = vmatprep.mubr.bf16.mxu0 0
  %3343 = vmatmul.mubr.bf16.gmra.mrb[0].mxu0 %v178
  %v3344 = vpop.f32.mrb[0].mxu0
  %v3345 = vadd.f32 0.0, %v3344
  %v3346 = vpop.f32.mrb[0].mxu0
  %v3347 = vpop.f32.mrb[0].mxu0
  %v3348 = vadd.f32 0.0, %v3347
  %v3349 = vpop.f32.mrb[0].mxu0
  %3350 = vmatprep.mubr.bf16.mxu0 0
  %3351 = vmatmul.mubr.bf16.gmra.mrb[0].mxu0 %v179
  %v3352 = vpop.f32.mrb[0].mxu0
  %v3353 = vadd.f32 0.0, %v3352
  %v3354 = vpop.f32.mrb[0].mxu0
  %v3355 = vpop.f32.mrb[0].mxu0
  %v3356 = vadd.f32 0.0, %v3355
  %v3357 = vpop.f32.mrb[0].mxu0
  %3358 = vmatprep.mubr.bf16.mxu0 0
  %3359 = vmatmul.mubr.bf16.gmra.mrb[0].mxu0 %v180
  %v3360 = vpop.f32.mrb[0].mxu0
  %v3361 = vadd.f32 0.0, %v3360
  %v3362 = vpop.f32.mrb[0].mxu0
  %v3363 = vpop.f32.mrb[0].mxu0
  %v3364 = vadd.f32 0.0, %v3363
  %v3365 = vpop.f32.mrb[0].mxu0
  %3366 = vmatprep.mubr.bf16.mxu0 0
  %3367 = vmatmul.mubr.bf16.gmra.mrb[0].mxu0 %v181
  %v3368 = vpop.f32.mrb[0].mxu0
  %v3369 = vadd.f32 0.0, %v3368
  %v3370 = vpop.f32.mrb[0].mxu0
  %v3371 = vpop.f32.mrb[0].mxu0
  %v3372 = vadd.f32 0.0, %v3371
  %v3373 = vpop.f32.mrb[0].mxu0
  %3374 = vmatprep.mubr.bf16.mxu0 0
  %3375 = vmatmul.mubr.bf16.gmra.mrb[0].mxu0 %v182
  %v3376 = vpop.f32.mrb[0].mxu0
  %v3377 = vadd.f32 0.0, %v3376
  %v3378 = vpop.f32.mrb[0].mxu0
  %v3379 = vpop.f32.mrb[0].mxu0
  %v3380 = vadd.f32 0.0, %v3379
  %v3381 = vpop.f32.mrb[0].mxu0
  %3382 = vmatprep.mubr.bf16.mxu0 0
  %3383 = vmatmul.mubr.bf16.gmra.mrb[0].mxu0 %v183
  %v3384 = vpop.f32.mrb[0].mxu0
  %v3385 = vadd.f32 0.0, %v3384
  %v3386 = vpop.f32.mrb[0].mxu0
  %v3387 = vpop.f32.mrb[0].mxu0
  %v3388 = vadd.f32 0.0, %v3387
  %v3389 = vpop.f32.mrb[0].mxu0
  %3390 = vmatprep.mubr.bf16.mxu0 0
  %3391 = vmatmul.mubr.bf16.gmra.mrb[0].mxu0 %v184
  %v3392 = vpop.f32.mrb[0].mxu0
  %v3393 = vadd.f32 0.0, %v3392
  %v3394 = vpop.f32.mrb[0].mxu0
  %v3395 = vpop.f32.mrb[0].mxu0
  %v3396 = vadd.f32 0.0, %v3395
  %v3397 = vpop.f32.mrb[0].mxu0
  %3398 = vmatprep.mubr.bf16.mxu0 0
  %3399 = vmatmul.mubr.bf16.gmra.mrb[0].mxu0 %v185
  %v3400 = vpop.f32.mrb[0].mxu0
  %v3401 = vadd.f32 0.0, %v3400
  %v3402 = vpop.f32.mrb[0].mxu0
  %v3403 = vpop.f32.mrb[0].mxu0
  %v3404 = vadd.f32 0.0, %v3403
  %v3405 = vpop.f32.mrb[0].mxu0
  %3406 = vmatprep.mubr.bf16.mxu0 0
  %3407 = vmatmul.mubr.bf16.gmra.mrb[0].mxu0 %v186
  %v3408 = vpop.f32.mrb[0].mxu0
  %v3409 = vadd.f32 0.0, %v3408
  %v3410 = vpop.f32.mrb[0].mxu0
  %v3411 = vpop.f32.mrb[0].mxu0
  %v3412 = vadd.f32 0.0, %v3411
  %v3413 = vpop.f32.mrb[0].mxu0
  %3414 = vmatprep.mubr.bf16.mxu0 0
  %3415 = vmatmul.mubr.bf16.gmra.mrb[0].mxu0 %v187
  %v3416 = vpop.f32.mrb[0].mxu0
  %v3417 = vadd.f32 0.0, %v3416
  %v3418 = vpop.f32.mrb[0].mxu0
  %v3419 = vpop.f32.mrb[0].mxu0
  %v3420 = vadd.f32 0.0, %v3419
  %v3421 = vpop.f32.mrb[0].mxu0
  %3422 = vmatprep.mubr.bf16.mxu0 0
  %3423 = vmatmul.mubr.bf16.gmra.mrb[0].mxu0 %v188
  %v3424 = vpop.f32.mrb[0].mxu0
  %v3425 = vadd.f32 0.0, %v3424
  %v3426 = vpop.f32.mrb[0].mxu0
  %v3427 = vpop.f32.mrb[0].mxu0
  %v3428 = vadd.f32 0.0, %v3427
  %v3429 = vpop.f32.mrb[0].mxu0
  %3430 = vmatprep.mubr.bf16.mxu0 0
  %3431 = vmatmul.mubr.bf16.gmra.mrb[0].mxu0 %v189
  %v3432 = vpop.f32.mrb[0].mxu0
  %v3433 = vadd.f32 0.0, %v3432
  %v3434 = vpop.f32.mrb[0].mxu0
  %v3435 = vpop.f32.mrb[0].mxu0
  %v3436 = vadd.f32 0.0, %v3435
  %v3437 = vpop.f32.mrb[0].mxu0
  %3438 = vdwg.mxu0
  %v3439 = vmax.f32 %v3313, %v3321
  %v3440 = vmax.f32 %v3439, %v3329
  %v3441 = vmax.f32 %v3440, %v3337
  %v3442 = vmax.f32 %v3441, %v3345
  %v3443 = vmax.f32 %v3442, %v3353
  %v3444 = vmax.f32 %v3443, %v3361
  %v3445 = vmax.f32 %v3444, %v3369
  %v3446 = vmax.f32 %v3316, %v3324
  %v3447 = vmax.f32 %v3446, %v3332
  %v3448 = vmax.f32 %v3447, %v3340
  %v3449 = vmax.f32 %v3448, %v3348
  %v3450 = vmax.f32 %v3449, %v3356
  %v3451 = vmax.f32 %v3450, %v3364
  %v3452 = vmax.f32 %v3451, %v3372
  %v3453 = vmax.f32 %v3377, %v3385
  %v3454 = vmax.f32 %v3453, %v3393
  %v3455 = vmax.f32 %v3454, %v3401
  %v3456 = vmax.f32 %v3455, %v3409
  %v3457 = vmax.f32 %v3456, %v3417
  %v3458 = vmax.f32 %v3457, %v3425
  %v3459 = vmax.f32 %v3458, %v3433
  %v3460 = vmax.f32 %v3380, %v3388
  %v3461 = vmax.f32 %v3460, %v3396
  %v3462 = vmax.f32 %v3461, %v3404
  %v3463 = vmax.f32 %v3462, %v3412
  %v3464 = vmax.f32 %v3463, %v3420
  %v3465 = vmax.f32 %v3464, %v3428
  %v3466 = vmax.f32 %v3465, %v3436
  %v3467 = vadd.f32 %v3445, %v446
  %v3468 = vadd.f32 %v3452, %v451
  %v3469 = vadd.f32 %v3459, %v446
  %v3470 = vadd.f32 %v3466, %v451
  %vm3471 = vcmp.gt.f32.partialorder %v3467, 0.0
  %vm3472 = vcmp.gt.f32.partialorder %v3468, 0.0
  %vm3473 = vcmp.gt.f32.partialorder %v3469, 0.0
  %vm3474 = vcmp.gt.f32.partialorder %v3470, 0.0
  %v3475 = vmul.f32 %v3467, 0.01
  %v3476 = vmul.f32 %v3468, 0.01
  %v3477 = vmul.f32 %v3469, 0.01
  %v3478 = vmul.f32 %v3470, 0.01
  %v3479 = vsel %vm3471, %v3467, %v3475
  %v3480 = vsel %vm3472, %v3468, %v3476
  %v3481 = vsel %vm3473, %v3469, %v3477
  %v3482 = vsel %vm3474, %v3470, %v3478
  %3483 = vst [vmem:[#allocation2 + $0x160] sm:$0xff] %v3479
  %3484 = vst [vmem:[#allocation2 + $0x168] sm:$0xff] %v3480
  %3485 = vst [vmem:[#allocation2 + $0x170] sm:$0xff] %v3481
  %3486 = vst [vmem:[#allocation2 + $0x178] sm:$0xff] %v3482
  %s3487 = scalar_lea.vmem %s0, 768
  %v3488 = vld [vmem:[%s3487] sm:$0xf]
  %v3489 = vld [vmem:[%s3487 + $0x4] sm:$0xf]
  %v3490 = vld [vmem:[%s3487 + $0x8] sm:$0xf]
  %v3491 = vld [vmem:[%s3487 + $0xc] sm:$0xf]
  %v3492 = vld [vmem:[%s3487 + $0x10] sm:$0xf]
  %v3493 = vld [vmem:[%s3487 + $0x14] sm:$0xf]
  %v3494 = vld [vmem:[%s3487 + $0x18] sm:$0xf]
  %v3495 = vld [vmem:[%s3487 + $0x1c] sm:$0xf]
  %v3496 = vld [vmem:[%s3487 + $0x20] sm:$0xf]
  %v3497 = vld [vmem:[%s3487 + $0x24] sm:$0xf]
  %v3498 = vld [vmem:[%s3487 + $0x28] sm:$0xf]
  %v3499 = vld [vmem:[%s3487 + $0x2c] sm:$0xf]
  %v3500 = vld [vmem:[%s3487 + $0x30] sm:$0xf]
  %v3501 = vld [vmem:[%s3487 + $0x34] sm:$0xf]
  %v3502 = vld [vmem:[%s3487 + $0x38] sm:$0xf]
  %v3503 = vld [vmem:[%s3487 + $0x3c] sm:$0xf]
  %v3520 = vunpack.c.l.b16 %v3488
  %v3521 = vunpack.c.l.b16 %v3489
  %v3522 = vunpack.c.l.b16 %v3490
  %v3523 = vunpack.c.l.b16 %v3491
  %v3524 = vunpack.c.l.b16 %v3492
  %v3525 = vunpack.c.l.b16 %v3493
  %v3526 = vunpack.c.l.b16 %v3494
  %v3527 = vunpack.c.l.b16 %v3495
  %v3528 = vunpack.c.l.b16 %v3496
  %v3529 = vunpack.c.l.b16 %v3497
  %v3530 = vunpack.c.l.b16 %v3498
  %v3531 = vunpack.c.l.b16 %v3499
  %v3532 = vunpack.c.l.b16 %v3500
  %v3533 = vunpack.c.l.b16 %v3501
  %v3534 = vunpack.c.l.b16 %v3502
  %v3535 = vunpack.c.l.b16 %v3503
  %v3536 = vpack.c.b16 %v3521, %v3520
  %v3537 = vpack.c.b16 %v3523, %v3522
  %v3538 = vpack.c.b16 %v3525, %v3524
  %v3539 = vpack.c.b16 %v3527, %v3526
  %v3540 = vpack.c.b16 %v3529, %v3528
  %v3541 = vpack.c.b16 %v3531, %v3530
  %v3542 = vpack.c.b16 %v3533, %v3532
  %v3543 = vpack.c.b16 %v3535, %v3534
  %3552 = vmatprep.subr.bf16.mxu0 0
  %3553 = vmatpush1.bf16.msra.mxu0 %v3536
  %3554 = vmatprep.subr.bf16.mxu0 0
  %3555 = vmatpush1.bf16.msra.mxu0 %v3537
  %3556 = vmatprep.subr.bf16.mxu0 0
  %3557 = vmatpush1.bf16.msra.mxu0 %v3538
  %3558 = vmatprep.subr.bf16.mxu0 0
  %3559 = vmatpush1.bf16.msra.mxu0 %v3539
  %3560 = vmatprep.subr.bf16.mxu0 0
  %3561 = vmatpush1.bf16.msra.mxu0 %v3540
  %3562 = vmatprep.subr.bf16.mxu0 0
  %3563 = vmatpush1.bf16.msra.mxu0 %v3541
  %3564 = vmatprep.subr.bf16.mxu0 0
  %3565 = vmatpush1.bf16.msra.mxu0 %v3542
  %3566 = vmatprep.subr.bf16.mxu0 0
  %3567 = vmatpush1.bf16.msra.mxu0 %v3543
  %3568 = vmatprep.subr.bf16.mxu0 0
  %3569 = vmatpush1.bf16.msra.mxu0 0
  %3570 = vmatprep.subr.bf16.mxu0 0
  %3571 = vmatpush1.bf16.msra.mxu0 0
  %3572 = vmatprep.subr.bf16.mxu0 0
  %3573 = vmatpush1.bf16.msra.mxu0 0
  %3574 = vmatprep.subr.bf16.mxu0 0
  %3575 = vmatpush1.bf16.msra.mxu0 0
  %3576 = vmatprep.subr.bf16.mxu0 0
  %3577 = vmatpush1.bf16.msra.mxu0 0
  %3578 = vmatprep.subr.bf16.mxu0 0
  %3579 = vmatpush1.bf16.msra.mxu0 0
  %3580 = vmatprep.subr.bf16.mxu0 0
  %3581 = vmatpush1.bf16.msra.mxu0 0
  %3582 = vmatprep.subr.bf16.mxu0 0
  %3583 = vmatpush1.bf16.msra.mxu0 0
  %3584 = vmatprep.mubr.bf16.mxu0 0
  %3585 = vmatmul.mubr.bf16.gmra.mrb[0].mxu0 %v174
  %v3586 = vpop.f32.mrb[0].mxu0
  %v3587 = vadd.f32 0.0, %v3586
  %v3588 = vpop.f32.mrb[0].mxu0
  %v3589 = vpop.f32.mrb[0].mxu0
  %v3590 = vadd.f32 0.0, %v3589
  %v3591 = vpop.f32.mrb[0].mxu0
  %3592 = vmatprep.mubr.bf16.mxu0 0
  %3593 = vmatmul.mubr.bf16.gmra.mrb[0].mxu0 %v175
  %v3594 = vpop.f32.mrb[0].mxu0
  %v3595 = vadd.f32 0.0, %v3594
  %v3596 = vpop.f32.mrb[0].mxu0
  %v3597 = vpop.f32.mrb[0].mxu0
  %v3598 = vadd.f32 0.0, %v3597
  %v3599 = vpop.f32.mrb[0].mxu0
  %3600 = vmatprep.mubr.bf16.mxu0 0
  %3601 = vmatmul.mubr.bf16.gmra.mrb[0].mxu0 %v176
  %v3602 = vpop.f32.mrb[0].mxu0
  %v3603 = vadd.f32 0.0, %v3602
  %v3604 = vpop.f32.mrb[0].mxu0
  %v3605 = vpop.f32.mrb[0].mxu0
  %v3606 = vadd.f32 0.0, %v3605
  %v3607 = vpop.f32.mrb[0].mxu0
  %3608 = vmatprep.mubr.bf16.mxu0 0
  %3609 = vmatmul.mubr.bf16.gmra.mrb[0].mxu0 %v177
  %v3610 = vpop.f32.mrb[0].mxu0
  %v3611 = vadd.f32 0.0, %v3610
  %v3612 = vpop.f32.mrb[0].mxu0
  %v3613 = vpop.f32.mrb[0].mxu0
  %v3614 = vadd.f32 0.0, %v3613
  %v3615 = vpop.f32.mrb[0].mxu0
  %3616 = vmatprep.mubr.bf16.mxu0 0
  %3617 = vmatmul.mubr.bf16.gmra.mrb[0].mxu0 %v178
  %v3618 = vpop.f32.mrb[0].mxu0
  %v3619 = vadd.f32 0.0, %v3618
  %v3620 = vpop.f32.mrb[0].mxu0
  %v3621 = vpop.f32.mrb[0].mxu0
  %v3622 = vadd.f32 0.0, %v3621
  %v3623 = vpop.f32.mrb[0].mxu0
  %3624 = vmatprep.mubr.bf16.mxu0 0
  %3625 = vmatmul.mubr.bf16.gmra.mrb[0].mxu0 %v179
  %v3626 = vpop.f32.mrb[0].mxu0
  %v3627 = vadd.f32 0.0, %v3626
  %v3628 = vpop.f32.mrb[0].mxu0
  %v3629 = vpop.f32.mrb[0].mxu0
  %v3630 = vadd.f32 0.0, %v3629
  %v3631 = vpop.f32.mrb[0].mxu0
  %3632 = vmatprep.mubr.bf16.mxu0 0
  %3633 = vmatmul.mubr.bf16.gmra.mrb[0].mxu0 %v180
  %v3634 = vpop.f32.mrb[0].mxu0
  %v3635 = vadd.f32 0.0, %v3634
  %v3636 = vpop.f32.mrb[0].mxu0
  %v3637 = vpop.f32.mrb[0].mxu0
  %v3638 = vadd.f32 0.0, %v3637
  %v3639 = vpop.f32.mrb[0].mxu0
  %3640 = vmatprep.mubr.bf16.mxu0 0
  %3641 = vmatmul.mubr.bf16.gmra.mrb[0].mxu0 %v181
  %v3642 = vpop.f32.mrb[0].mxu0
  %v3643 = vadd.f32 0.0, %v3642
  %v3644 = vpop.f32.mrb[0].mxu0
  %v3645 = vpop.f32.mrb[0].mxu0
  %v3646 = vadd.f32 0.0, %v3645
  %v3647 = vpop.f32.mrb[0].mxu0
  %3648 = vmatprep.mubr.bf16.mxu0 0
  %3649 = vmatmul.mubr.bf16.gmra.mrb[0].mxu0 %v182
  %v3650 = vpop.f32.mrb[0].mxu0
  %v3651 = vadd.f32 0.0, %v3650
  %v3652 = vpop.f32.mrb[0].mxu0
  %v3653 = vpop.f32.mrb[0].mxu0
  %v3654 = vadd.f32 0.0, %v3653
  %v3655 = vpop.f32.mrb[0].mxu0
  %3656 = vmatprep.mubr.bf16.mxu0 0
  %3657 = vmatmul.mubr.bf16.gmra.mrb[0].mxu0 %v183
  %v3658 = vpop.f32.mrb[0].mxu0
  %v3659 = vadd.f32 0.0, %v3658
  %v3660 = vpop.f32.mrb[0].mxu0
  %v3661 = vpop.f32.mrb[0].mxu0
  %v3662 = vadd.f32 0.0, %v3661
  %v3663 = vpop.f32.mrb[0].mxu0
  %3664 = vmatprep.mubr.bf16.mxu0 0
  %3665 = vmatmul.mubr.bf16.gmra.mrb[0].mxu0 %v184
  %v3666 = vpop.f32.mrb[0].mxu0
  %v3667 = vadd.f32 0.0, %v3666
  %v3668 = vpop.f32.mrb[0].mxu0
  %v3669 = vpop.f32.mrb[0].mxu0
  %v3670 = vadd.f32 0.0, %v3669
  %v3671 = vpop.f32.mrb[0].mxu0
  %3672 = vmatprep.mubr.bf16.mxu0 0
  %3673 = vmatmul.mubr.bf16.gmra.mrb[0].mxu0 %v185
  %v3674 = vpop.f32.mrb[0].mxu0
  %v3675 = vadd.f32 0.0, %v3674
  %v3676 = vpop.f32.mrb[0].mxu0
  %v3677 = vpop.f32.mrb[0].mxu0
  %v3678 = vadd.f32 0.0, %v3677
  %v3679 = vpop.f32.mrb[0].mxu0
  %3680 = vmatprep.mubr.bf16.mxu0 0
  %3681 = vmatmul.mubr.bf16.gmra.mrb[0].mxu0 %v186
  %v3682 = vpop.f32.mrb[0].mxu0
  %v3683 = vadd.f32 0.0, %v3682
  %v3684 = vpop.f32.mrb[0].mxu0
  %v3685 = vpop.f32.mrb[0].mxu0
  %v3686 = vadd.f32 0.0, %v3685
  %v3687 = vpop.f32.mrb[0].mxu0
  %3688 = vmatprep.mubr.bf16.mxu0 0
  %3689 = vmatmul.mubr.bf16.gmra.mrb[0].mxu0 %v187
  %v3690 = vpop.f32.mrb[0].mxu0
  %v3691 = vadd.f32 0.0, %v3690
  %v3692 = vpop.f32.mrb[0].mxu0
  %v3693 = vpop.f32.mrb[0].mxu0
  %v3694 = vadd.f32 0.0, %v3693
  %v3695 = vpop.f32.mrb[0].mxu0
  %3696 = vmatprep.mubr.bf16.mxu0 0
  %3697 = vmatmul.mubr.bf16.gmra.mrb[0].mxu0 %v188
  %v3698 = vpop.f32.mrb[0].mxu0
  %v3699 = vadd.f32 0.0, %v3698
  %v3700 = vpop.f32.mrb[0].mxu0
  %v3701 = vpop.f32.mrb[0].mxu0
  %v3702 = vadd.f32 0.0, %v3701
  %v3703 = vpop.f32.mrb[0].mxu0
  %3704 = vmatprep.mubr.bf16.mxu0 0
  %3705 = vmatmul.mubr.bf16.gmra.mrb[0].mxu0 %v189
  %v3706 = vpop.f32.mrb[0].mxu0
  %v3707 = vadd.f32 0.0, %v3706
  %v3708 = vpop.f32.mrb[0].mxu0
  %v3709 = vpop.f32.mrb[0].mxu0
  %v3710 = vadd.f32 0.0, %v3709
  %v3711 = vpop.f32.mrb[0].mxu0
  %3712 = vdwg.mxu0
  %v3713 = vmax.f32 %v3587, %v3595
  %v3714 = vmax.f32 %v3713, %v3603
  %v3715 = vmax.f32 %v3714, %v3611
  %v3716 = vmax.f32 %v3715, %v3619
  %v3717 = vmax.f32 %v3716, %v3627
  %v3718 = vmax.f32 %v3717, %v3635
  %v3719 = vmax.f32 %v3718, %v3643
  %v3720 = vmax.f32 %v3590, %v3598
  %v3721 = vmax.f32 %v3720, %v3606
  %v3722 = vmax.f32 %v3721, %v3614
  %v3723 = vmax.f32 %v3722, %v3622
  %v3724 = vmax.f32 %v3723, %v3630
  %v3725 = vmax.f32 %v3724, %v3638
  %v3726 = vmax.f32 %v3725, %v3646
  %v3727 = vmax.f32 %v3651, %v3659
  %v3728 = vmax.f32 %v3727, %v3667
  %v3729 = vmax.f32 %v3728, %v3675
  %v3730 = vmax.f32 %v3729, %v3683
  %v3731 = vmax.f32 %v3730, %v3691
  %v3732 = vmax.f32 %v3731, %v3699
  %v3733 = vmax.f32 %v3732, %v3707
  %v3734 = vmax.f32 %v3654, %v3662
  %v3735 = vmax.f32 %v3734, %v3670
  %v3736 = vmax.f32 %v3735, %v3678
  %v3737 = vmax.f32 %v3736, %v3686
  %v3738 = vmax.f32 %v3737, %v3694
  %v3739 = vmax.f32 %v3738, %v3702
  %v3740 = vmax.f32 %v3739, %v3710
  %v3741 = vadd.f32 %v3719, %v446
  %v3742 = vadd.f32 %v3726, %v451
  %v3743 = vadd.f32 %v3733, %v446
  %v3744 = vadd.f32 %v3740, %v451
  %vm3745 = vcmp.gt.f32.partialorder %v3741, 0.0
  %vm3746 = vcmp.gt.f32.partialorder %v3742, 0.0
  %vm3747 = vcmp.gt.f32.partialorder %v3743, 0.0
  %vm3748 = vcmp.gt.f32.partialorder %v3744, 0.0
  %v3749 = vmul.f32 %v3741, 0.01
  %v3750 = vmul.f32 %v3742, 0.01
  %v3751 = vmul.f32 %v3743, 0.01
  %v3752 = vmul.f32 %v3744, 0.01
  %v3753 = vsel %vm3745, %v3741, %v3749
  %v3754 = vsel %vm3746, %v3742, %v3750
  %v3755 = vsel %vm3747, %v3743, %v3751
  %v3756 = vsel %vm3748, %v3744, %v3752
  %3757 = vst [vmem:[#allocation2 + $0x180] sm:$0xff] %v3753
  %3758 = vst [vmem:[#allocation2 + $0x188] sm:$0xff] %v3754
  %3759 = vst [vmem:[#allocation2 + $0x190] sm:$0xff] %v3755
  %3760 = vst [vmem:[#allocation2 + $0x198] sm:$0xff] %v3756
  %s3761 = scalar_lea.vmem %s0, 832
  %v3762 = vld [vmem:[%s3761] sm:$0xf]
  %v3763 = vld [vmem:[%s3761 + $0x4] sm:$0xf]
  %v3764 = vld [vmem:[%s3761 + $0x8] sm:$0xf]
  %v3765 = vld [vmem:[%s3761 + $0xc] sm:$0xf]
  %v3766 = vld [vmem:[%s3761 + $0x10] sm:$0xf]
  %v3767 = vld [vmem:[%s3761 + $0x14] sm:$0xf]
  %v3768 = vld [vmem:[%s3761 + $0x18] sm:$0xf]
  %v3769 = vld [vmem:[%s3761 + $0x1c] sm:$0xf]
  %v3770 = vld [vmem:[%s3761 + $0x20] sm:$0xf]
  %v3771 = vld [vmem:[%s3761 + $0x24] sm:$0xf]
  %v3772 = vld [vmem:[%s3761 + $0x28] sm:$0xf]
  %v3773 = vld [vmem:[%s3761 + $0x2c] sm:$0xf]
  %v3774 = vld [vmem:[%s3761 + $0x30] sm:$0xf]
  %v3775 = vld [vmem:[%s3761 + $0x34] sm:$0xf]
  %v3776 = vld [vmem:[%s3761 + $0x38] sm:$0xf]
  %v3777 = vld [vmem:[%s3761 + $0x3c] sm:$0xf]
  %v3794 = vunpack.c.l.b16 %v3762
  %v3795 = vunpack.c.l.b16 %v3763
  %v3796 = vunpack.c.l.b16 %v3764
  %v3797 = vunpack.c.l.b16 %v3765
  %v3798 = vunpack.c.l.b16 %v3766
  %v3799 = vunpack.c.l.b16 %v3767
  %v3800 = vunpack.c.l.b16 %v3768
  %v3801 = vunpack.c.l.b16 %v3769
  %v3802 = vunpack.c.l.b16 %v3770
  %v3803 = vunpack.c.l.b16 %v3771
  %v3804 = vunpack.c.l.b16 %v3772
  %v3805 = vunpack.c.l.b16 %v3773
  %v3806 = vunpack.c.l.b16 %v3774
  %v3807 = vunpack.c.l.b16 %v3775
  %v3808 = vunpack.c.l.b16 %v3776
  %v3809 = vunpack.c.l.b16 %v3777
  %v3810 = vpack.c.b16 %v3795, %v3794
  %v3811 = vpack.c.b16 %v3797, %v3796
  %v3812 = vpack.c.b16 %v3799, %v3798
  %v3813 = vpack.c.b16 %v3801, %v3800
  %v3814 = vpack.c.b16 %v3803, %v3802
  %v3815 = vpack.c.b16 %v3805, %v3804
  %v3816 = vpack.c.b16 %v3807, %v3806
  %v3817 = vpack.c.b16 %v3809, %v3808
  %3826 = vmatprep.subr.bf16.mxu0 0
  %3827 = vmatpush1.bf16.msra.mxu0 %v3810
  %3828 = vmatprep.subr.bf16.mxu0 0
  %3829 = vmatpush1.bf16.msra.mxu0 %v3811
  %3830 = vmatprep.subr.bf16.mxu0 0
  %3831 = vmatpush1.bf16.msra.mxu0 %v3812
  %3832 = vmatprep.subr.bf16.mxu0 0
  %3833 = vmatpush1.bf16.msra.mxu0 %v3813
  %3834 = vmatprep.subr.bf16.mxu0 0
  %3835 = vmatpush1.bf16.msra.mxu0 %v3814
  %3836 = vmatprep.subr.bf16.mxu0 0
  %3837 = vmatpush1.bf16.msra.mxu0 %v3815
  %3838 = vmatprep.subr.bf16.mxu0 0
  %3839 = vmatpush1.bf16.msra.mxu0 %v3816
  %3840 = vmatprep.subr.bf16.mxu0 0
  %3841 = vmatpush1.bf16.msra.mxu0 %v3817
  %3842 = vmatprep.subr.bf16.mxu0 0
  %3843 = vmatpush1.bf16.msra.mxu0 0
  %3844 = vmatprep.subr.bf16.mxu0 0
  %3845 = vmatpush1.bf16.msra.mxu0 0
  %3846 = vmatprep.subr.bf16.mxu0 0
  %3847 = vmatpush1.bf16.msra.mxu0 0
  %3848 = vmatprep.subr.bf16.mxu0 0
  %3849 = vmatpush1.bf16.msra.mxu0 0
  %3850 = vmatprep.subr.bf16.mxu0 0
  %3851 = vmatpush1.bf16.msra.mxu0 0
  %3852 = vmatprep.subr.bf16.mxu0 0
  %3853 = vmatpush1.bf16.msra.mxu0 0
  %3854 = vmatprep.subr.bf16.mxu0 0
  %3855 = vmatpush1.bf16.msra.mxu0 0
  %3856 = vmatprep.subr.bf16.mxu0 0
  %3857 = vmatpush1.bf16.msra.mxu0 0
  %3858 = vmatprep.mubr.bf16.mxu0 0
  %3859 = vmatmul.mubr.bf16.gmra.mrb[0].mxu0 %v174
  %v3860 = vpop.f32.mrb[0].mxu0
  %v3861 = vadd.f32 0.0, %v3860
  %v3862 = vpop.f32.mrb[0].mxu0
  %v3863 = vpop.f32.mrb[0].mxu0
  %v3864 = vadd.f32 0.0, %v3863
  %v3865 = vpop.f32.mrb[0].mxu0
  %3866 = vmatprep.mubr.bf16.mxu0 0
  %3867 = vmatmul.mubr.bf16.gmra.mrb[0].mxu0 %v175
  %v3868 = vpop.f32.mrb[0].mxu0
  %v3869 = vadd.f32 0.0, %v3868
  %v3870 = vpop.f32.mrb[0].mxu0
  %v3871 = vpop.f32.mrb[0].mxu0
  %v3872 = vadd.f32 0.0, %v3871
  %v3873 = vpop.f32.mrb[0].mxu0
  %3874 = vmatprep.mubr.bf16.mxu0 0
  %3875 = vmatmul.mubr.bf16.gmra.mrb[0].mxu0 %v176
  %v3876 = vpop.f32.mrb[0].mxu0
  %v3877 = vadd.f32 0.0, %v3876
  %v3878 = vpop.f32.mrb[0].mxu0
  %v3879 = vpop.f32.mrb[0].mxu0
  %v3880 = vadd.f32 0.0, %v3879
  %v3881 = vpop.f32.mrb[0].mxu0
  %3882 = vmatprep.mubr.bf16.mxu0 0
  %3883 = vmatmul.mubr.bf16.gmra.mrb[0].mxu0 %v177
  %v3884 = vpop.f32.mrb[0].mxu0
  %v3885 = vadd.f32 0.0, %v3884
  %v3886 = vpop.f32.mrb[0].mxu0
  %v3887 = vpop.f32.mrb[0].mxu0
  %v3888 = vadd.f32 0.0, %v3887
  %v3889 = vpop.f32.mrb[0].mxu0
  %3890 = vmatprep.mubr.bf16.mxu0 0
  %3891 = vmatmul.mubr.bf16.gmra.mrb[0].mxu0 %v178
  %v3892 = vpop.f32.mrb[0].mxu0
  %v3893 = vadd.f32 0.0, %v3892
  %v3894 = vpop.f32.mrb[0].mxu0
  %v3895 = vpop.f32.mrb[0].mxu0
  %v3896 = vadd.f32 0.0, %v3895
  %v3897 = vpop.f32.mrb[0].mxu0
  %3898 = vmatprep.mubr.bf16.mxu0 0
  %3899 = vmatmul.mubr.bf16.gmra.mrb[0].mxu0 %v179
  %v3900 = vpop.f32.mrb[0].mxu0
  %v3901 = vadd.f32 0.0, %v3900
  %v3902 = vpop.f32.mrb[0].mxu0
  %v3903 = vpop.f32.mrb[0].mxu0
  %v3904 = vadd.f32 0.0, %v3903
  %v3905 = vpop.f32.mrb[0].mxu0
  %3906 = vmatprep.mubr.bf16.mxu0 0
  %3907 = vmatmul.mubr.bf16.gmra.mrb[0].mxu0 %v180
  %v3908 = vpop.f32.mrb[0].mxu0
  %v3909 = vadd.f32 0.0, %v3908
  %v3910 = vpop.f32.mrb[0].mxu0
  %v3911 = vpop.f32.mrb[0].mxu0
  %v3912 = vadd.f32 0.0, %v3911
  %v3913 = vpop.f32.mrb[0].mxu0
  %3914 = vmatprep.mubr.bf16.mxu0 0
  %3915 = vmatmul.mubr.bf16.gmra.mrb[0].mxu0 %v181
  %v3916 = vpop.f32.mrb[0].mxu0
  %v3917 = vadd.f32 0.0, %v3916
  %v3918 = vpop.f32.mrb[0].mxu0
  %v3919 = vpop.f32.mrb[0].mxu0
  %v3920 = vadd.f32 0.0, %v3919
  %v3921 = vpop.f32.mrb[0].mxu0
  %3922 = vmatprep.mubr.bf16.mxu0 0
  %3923 = vmatmul.mubr.bf16.gmra.mrb[0].mxu0 %v182
  %v3924 = vpop.f32.mrb[0].mxu0
  %v3925 = vpop.f32.mrb[0].mxu0
  %v3926 = vpop.f32.mrb[0].mxu0
  %v3927 = vpop.f32.mrb[0].mxu0
  %3928 = vmatprep.mubr.bf16.mxu0 0
  %3929 = vmatmul.mubr.bf16.gmra.mrb[0].mxu0 %v183
  %v3930 = vpop.f32.mrb[0].mxu0
  %v3931 = vpop.f32.mrb[0].mxu0
  %v3932 = vpop.f32.mrb[0].mxu0
  %v3933 = vpop.f32.mrb[0].mxu0
  %3934 = vmatprep.mubr.bf16.mxu0 0
  %3935 = vmatmul.mubr.bf16.gmra.mrb[0].mxu0 %v184
  %v3936 = vpop.f32.mrb[0].mxu0
  %v3937 = vpop.f32.mrb[0].mxu0
  %v3938 = vpop.f32.mrb[0].mxu0
  %v3939 = vpop.f32.mrb[0].mxu0
  %3940 = vmatprep.mubr.bf16.mxu0 0
  %3941 = vmatmul.mubr.bf16.gmra.mrb[0].mxu0 %v185
  %v3942 = vpop.f32.mrb[0].mxu0
  %v3943 = vpop.f32.mrb[0].mxu0
  %v3944 = vpop.f32.mrb[0].mxu0
  %v3945 = vpop.f32.mrb[0].mxu0
  %3946 = vmatprep.mubr.bf16.mxu0 0
  %3947 = vmatmul.mubr.bf16.gmra.mrb[0].mxu0 %v186
  %v3948 = vpop.f32.mrb[0].mxu0
  %v3949 = vpop.f32.mrb[0].mxu0
  %v3950 = vpop.f32.mrb[0].mxu0
  %v3951 = vpop.f32.mrb[0].mxu0
  %3952 = vmatprep.mubr.bf16.mxu0 0
  %3953 = vmatmul.mubr.bf16.gmra.mrb[0].mxu0 %v187
  %v3954 = vpop.f32.mrb[0].mxu0
  %v3955 = vpop.f32.mrb[0].mxu0
  %v3956 = vpop.f32.mrb[0].mxu0
  %v3957 = vpop.f32.mrb[0].mxu0
  %3958 = vmatprep.mubr.bf16.mxu0 0
  %3959 = vmatmul.mubr.bf16.gmra.mrb[0].mxu0 %v188
  %v3960 = vpop.f32.mrb[0].mxu0
  %v3961 = vpop.f32.mrb[0].mxu0
  %v3962 = vpop.f32.mrb[0].mxu0
  %v3963 = vpop.f32.mrb[0].mxu0
  %3964 = vmatprep.mubr.bf16.mxu0 0
  %3965 = vmatmul.mubr.bf16.gmra.mrb[0].mxu0 %v189
  %v3966 = vpop.f32.mrb[0].mxu0
  %v3967 = vpop.f32.mrb[0].mxu0
  %v3968 = vpop.f32.mrb[0].mxu0
  %v3969 = vpop.f32.mrb[0].mxu0
  %3970 = vdwg.mxu0
  %v3971 = vmax.f32 %v3861, %v3869
  %v3972 = vmax.f32 %v3971, %v3877
  %v3973 = vmax.f32 %v3972, %v3885
  %v3974 = vmax.f32 %v3973, %v3893
  %v3975 = vmax.f32 %v3974, %v3901
  %v3976 = vmax.f32 %v3975, %v3909
  %v3977 = vmax.f32 %v3976, %v3917
  %v3978 = vmax.f32 %v3864, %v3872
  %v3979 = vmax.f32 %v3978, %v3880
  %v3980 = vmax.f32 %v3979, %v3888
  %v3981 = vmax.f32 %v3980, %v3896
  %v3982 = vmax.f32 %v3981, %v3904
  %v3983 = vmax.f32 %v3982, %v3912
  %v3984 = vmax.f32 %v3983, %v3920
  %v3985 = vadd.f32 %v3977, %v446
  %v3986 = vadd.f32 %v3984, %v451
  %vm3987 = vcmp.gt.f32.partialorder %v3985, 0.0
  %vm3988 = vcmp.gt.f32.partialorder %v3986, 0.0
  %v3989 = vmul.f32 %v3985, 0.01
  %v3990 = vmul.f32 %v3986, 0.01
  %v3991 = vsel %vm3987, %v3985, %v3989
  %v3992 = vsel %vm3988, %v3986, %v3990
  %3993 = vst [vmem:[#allocation2 + $0x1a0] sm:$0xff] %v3991
  %3994 = vst [vmem:[#allocation2 + $0x1a8] sm:$0xff] %v3992
  %v3995 = vld [vmem:[%s6] sm:$0xff]
  %v3996 = vld [vmem:[%s6 + $0x8] sm:$0xff]
  %v3997 = vld [vmem:[%s1] sm:$0x7]
  %v3998 = vld [vmem:[%s7] sm:$0xff]
  %v3999 = vld [vmem:[%s7 + $0x8] sm:$0xff]
  %4001 = vset.pattern.permute.xlu0 0
  %4002 = vperm.xlu0 %4001, %v3998
  %v4003 = vpop.permute.xlu0 %4002
  %4006 = vset.pattern.permute.xlu0 0
  %4007 = vperm.xlu0 %4006, %v3999
  %v4008 = vpop.permute.xlu0 %4007
  %vm4010 = vcmask 23552
  %v4012 = vsel %vm4010, %v3995, 0
  %v4015 = vsel %vm4010, %v3996, 0
  %vm4017 = vcmask 1042432
  %v4019 = vsel %vm4017, %v3997, 0
  %4021 = vmatprep.subr.mxu0 0.0
  %4022 = vmatpush1.msra.mxu0 %v4019
  %4023 = vmatprep.subr.mxu0 0.0
  %4024 = vmatpush1.msra.mxu0 0.0
  %4025 = vmatprep.subr.mxu0 0.0
  %4026 = vmatpush1.msra.mxu0 0.0
  %4027 = vmatprep.subr.mxu0 0.0
  %4028 = vmatpush1.msra.mxu0 0.0
  %4029 = vmatprep.subr.mxu0 0.0
  %4030 = vmatpush1.msra.mxu0 0.0
  %4031 = vmatprep.subr.mxu0 0.0
  %4032 = vmatpush1.msra.mxu0 0.0
  %4033 = vmatprep.subr.mxu0 0.0
  %4034 = vmatpush1.msra.mxu0 0.0
  %4035 = vmatprep.subr.mxu0 0.0
  %4036 = vmatpush1.msra.mxu0 0.0
  %4037 = vmatprep.subr.mxu0 0.0
  %4038 = vmatpush1.msra.mxu0 0.0
  %4039 = vmatprep.subr.mxu0 0.0
  %4040 = vmatpush1.msra.mxu0 0.0
  %4041 = vmatprep.subr.mxu0 0.0
  %4042 = vmatpush1.msra.mxu0 0.0
  %4043 = vmatprep.subr.mxu0 0.0
  %4044 = vmatpush1.msra.mxu0 0.0
  %4045 = vmatprep.subr.mxu0 0.0
  %4046 = vmatpush1.msra.mxu0 0.0
  %4047 = vmatprep.subr.mxu0 0.0
  %4048 = vmatpush1.msra.mxu0 0.0
  %4049 = vmatprep.subr.mxu0 0.0
  %4050 = vmatpush1.msra.mxu0 0.0
  %4051 = vmatprep.subr.mxu0 0.0
  %4052 = vmatpush1.msra.mxu0 0.0
  %4053 = vmatprep.subr.mxu0 0.0
  %4054 = vmatpush1.msra.mxu0 0.0
  %4055 = vmatprep.subr.mxu0 0.0
  %4056 = vmatpush1.msra.mxu0 0.0
  %4057 = vmatprep.subr.mxu0 0.0
  %4058 = vmatpush1.msra.mxu0 0.0
  %4059 = vmatprep.subr.mxu0 0.0
  %4060 = vmatpush1.msra.mxu0 0.0
  %4061 = vmatprep.subr.mxu0 0.0
  %4062 = vmatpush1.msra.mxu0 0.0
  %4063 = vmatprep.subr.mxu0 0.0
  %4064 = vmatpush1.msra.mxu0 0.0
  %4065 = vmatprep.subr.mxu0 0.0
  %4066 = vmatpush1.msra.mxu0 0.0
  %4067 = vmatprep.subr.mxu0 0.0
  %4068 = vmatpush1.msra.mxu0 0.0
  %4069 = vmatprep.subr.mxu0 0.0
  %4070 = vmatpush1.msra.mxu0 0.0
  %4071 = vmatprep.subr.mxu0 0.0
  %4072 = vmatpush1.msra.mxu0 0.0
  %4073 = vmatprep.subr.mxu0 0.0
  %4074 = vmatpush1.msra.mxu0 0.0
  %4075 = vmatprep.subr.mxu0 0.0
  %4076 = vmatpush1.msra.mxu0 0.0
  %4077 = vmatprep.subr.mxu0 0.0
  %4078 = vmatpush1.msra.mxu0 0.0
  %4079 = vmatprep.subr.mxu0 0.0
  %4080 = vmatpush1.msra.mxu0 0.0
  %4081 = vmatprep.subr.mxu0 0.0
  %4082 = vmatpush1.msra.mxu0 0.0
  %4083 = vmatprep.subr.mxu0 0.0
  %4084 = vmatpush1.msra.mxu0 0.0
  %4085 = vmatprep.mubr.f32.mxu0 0.0
  %4086 = vmatmul.mubr.f32.gmra.mrb[0].mxu0 %v4012
  %v4087 = vpop.f32.mrb[0].mxu0
  %v4088 = vadd.f32 %v4003, %v4087
  %v4089 = vpop.f32.mrb[0].mxu0
  %4090 = vmatprep.mubr.f32.mxu0 0.0
  %4091 = vmatmul.mubr.f32.gmra.mrb[0].mxu0 %v4015
  %v4092 = vpop.f32.mrb[0].mxu0
  %v4093 = vadd.f32 %v4008, %v4092
  %v4094 = vpop.f32.mrb[0].mxu0
  %4095 = vdwg.mxu0
  %v4096 = vmax.f32 %v4088, 0.0
  %v4097 = vmax.f32 %v4093, 0.0
  %4098 = vst [vmem:[#allocation2 + $0x1b0] sm:$0xff] %v4096
  %4099 = vst [vmem:[#allocation2 + $0x1b8] sm:$0xff] %v4097
  %v4100 = vld [vmem:[%s8] sm:$0xff]
  %v4101 = vld [vmem:[%s8 + $0x8] sm:$0xff]
  %v4102 = vld [vmem:[%s8 + $0x10] sm:$0xff]
  %v4103 = vld [vmem:[%s8 + $0x18] sm:$0xff]
  %v4104 = vld [vmem:[%s8 + $0x20] sm:$0xff]
  %v4105 = vld [vmem:[%s8 + $0x28] sm:$0xff]
  %v4106 = vld [vmem:[%s8 + $0x30] sm:$0xff]
  %v4107 = vld [vmem:[%s8 + $0x38] sm:$0xff]
  %v4108 = vld [vmem:[%s8 + $0x40] sm:$0xff]
  %v4109 = vld [vmem:[%s8 + $0x48] sm:$0xff]
  %v4110 = vld [vmem:[%s8 + $0x50] sm:$0xff]
  %v4111 = vld [vmem:[%s8 + $0x58] sm:$0xff]
  %v4112 = vld [vmem:[%s8 + $0x60] sm:$0xff]
  %v4113 = vld [vmem:[%s8 + $0x68] sm:$0xff]
  %v4114 = vld [vmem:[%s8 + $0x70] sm:$0xff]
  %v4115 = vld [vmem:[%s8 + $0x78] sm:$0xff]
  %v4116 = vld [vmem:[#allocation2] sm:$0xff]
  %v4117 = vld [vmem:[#allocation2 + $0x8] sm:$0xff]
  %v4118 = vld [vmem:[#allocation2 + $0x10] sm:$0xff]
  %v4119 = vld [vmem:[#allocation2 + $0x18] sm:$0xff]
  %v4120 = vld [vmem:[#allocation2 + $0x20] sm:$0xff]
  %v4121 = vld [vmem:[#allocation2 + $0x28] sm:$0xff]
  %v4122 = vld [vmem:[#allocation2 + $0x30] sm:$0xff]
  %v4123 = vld [vmem:[#allocation2 + $0x38] sm:$0xff]
  %v4124 = vld [vmem:[#allocation2 + $0x40] sm:$0xff]
  %v4125 = vld [vmem:[#allocation2 + $0x48] sm:$0xff]
  %v4126 = vld [vmem:[#allocation2 + $0x50] sm:$0xff]
  %v4127 = vld [vmem:[#allocation2 + $0x58] sm:$0xff]
  %v4128 = vld [vmem:[#allocation2 + $0x60] sm:$0xff]
  %v4129 = vld [vmem:[#allocation2 + $0x68] sm:$0xff]
  %v4130 = vld [vmem:[#allocation2 + $0x70] sm:$0xff]
  %v4131 = vld [vmem:[#allocation2 + $0x78] sm:$0xff]
  %v4132 = vld [vmem:[#allocation2 + $0x80] sm:$0xff]
  %v4133 = vld [vmem:[#allocation2 + $0x88] sm:$0xff]
  %v4134 = vld [vmem:[#allocation2 + $0x90] sm:$0xff]
  %v4135 = vld [vmem:[#allocation2 + $0x98] sm:$0xff]
  %v4136 = vld [vmem:[#allocation2 + $0xa0] sm:$0xff]
  %v4137 = vld [vmem:[#allocation2 + $0xa8] sm:$0xff]
  %v4138 = vld [vmem:[#allocation2 + $0xb0] sm:$0xff]
  %v4139 = vld [vmem:[#allocation2 + $0xb8] sm:$0xff]
  %v4140 = vld [vmem:[#allocation2 + $0xc0] sm:$0xff]
  %v4141 = vld [vmem:[#allocation2 + $0xc8] sm:$0xff]
  %v4142 = vld [vmem:[#allocation2 + $0xd0] sm:$0xff]
  %v4143 = vld [vmem:[#allocation2 + $0xd8] sm:$0xff]
  %v4144 = vld [vmem:[#allocation2 + $0xe0] sm:$0xff]
  %v4145 = vld [vmem:[#allocation2 + $0xe8] sm:$0xff]
  %v4146 = vld [vmem:[#allocation2 + $0xf0] sm:$0xff]
  %v4147 = vld [vmem:[#allocation2 + $0xf8] sm:$0xff]
  %v4148 = vld [vmem:[#allocation2 + $0x100] sm:$0xff]
  %v4149 = vld [vmem:[#allocation2 + $0x108] sm:$0xff]
  %v4150 = vld [vmem:[#allocation2 + $0x110] sm:$0xff]
  %v4151 = vld [vmem:[#allocation2 + $0x118] sm:$0xff]
  %v4152 = vld [vmem:[#allocation2 + $0x120] sm:$0xff]
  %v4153 = vld [vmem:[#allocation2 + $0x128] sm:$0xff]
  %v4154 = vld [vmem:[#allocation2 + $0x130] sm:$0xff]
  %v4155 = vld [vmem:[#allocation2 + $0x138] sm:$0xff]
  %v4156 = vld [vmem:[#allocation2 + $0x140] sm:$0xff]
  %v4157 = vld [vmem:[#allocation2 + $0x148] sm:$0xff]
  %v4158 = vld [vmem:[#allocation2 + $0x150] sm:$0xff]
  %v4159 = vld [vmem:[#allocation2 + $0x158] sm:$0xff]
  %v4160 = vld [vmem:[#allocation2 + $0x160] sm:$0xff]
  %v4161 = vld [vmem:[#allocation2 + $0x168] sm:$0xff]
  %v4162 = vld [vmem:[#allocation2 + $0x170] sm:$0xff]
  %v4163 = vld [vmem:[#allocation2 + $0x178] sm:$0xff]
  %v4164 = vld [vmem:[#allocation2 + $0x180] sm:$0xff]
  %v4165 = vld [vmem:[#allocation2 + $0x188] sm:$0xff]
  %v4166 = vld [vmem:[#allocation2 + $0x190] sm:$0xff]
  %v4167 = vld [vmem:[#allocation2 + $0x198] sm:$0xff]
  %v4168 = vld [vmem:[#allocation2 + $0x1a0] sm:$0xff]
  %v4169 = vld [vmem:[#allocation2 + $0x1a8] sm:$0xff]
  %v4170 = vld [vmem:[#allocation2 + $0x1b0] sm:$0xff]
  %v4171 = vld [vmem:[#allocation2 + $0x1b8] sm:$0xff]
  %v4172 = vld [vmem:[%s9] sm:$0xff]
  %v4173 = vld [vmem:[%s9 + $0x8] sm:$0xff]
  %v4174 = vld [vmem:[%s9 + $0x10] sm:$0xff]
  %v4175 = vld [vmem:[%s9 + $0x18] sm:$0xff]
  %4177 = vset.pattern.permute.xlu0 0
  %4178 = vperm.xlu0 %4177, %v4172
  %v4179 = vpop.permute.xlu0 %4178
  %4182 = vset.pattern.permute.xlu0 0
  %4183 = vperm.xlu0 %4182, %v4173
  %v4184 = vpop.permute.xlu0 %4183
  %4187 = vset.pattern.permute.xlu0 0
  %4188 = vperm.xlu0 %4187, %v4174
  %v4189 = vpop.permute.xlu0 %4188
  %4192 = vset.pattern.permute.xlu0 0
  %4193 = vperm.xlu0 %4192, %v4175
  %v4194 = vpop.permute.xlu0 %4193
  %vm4196 = vcmask 523264
  %v4198 = vsel %vm4196, %v4103, 0
  %v4201 = vsel %vm4196, %v4107, 0
  %v4204 = vsel %vm4196, %v4111, 0
  %v4207 = vsel %vm4196, %v4115, 0
  %4209 = vmatprep.subr.mxu0 0.0
  %4210 = vmatpush1.msra.mxu0 %v4116
  %4211 = vmatprep.subr.mxu0 0.0
  %4212 = vmatpush1.msra.mxu0 %v4117
  %4213 = vmatprep.subr.mxu0 0.0
  %4214 = vmatpush1.msra.mxu0 %v4118
  %4215 = vmatprep.subr.mxu0 0.0
  %4216 = vmatpush1.msra.mxu0 %v4119
  %4217 = vmatprep.subr.mxu0 0.0
  %4218 = vmatpush1.msra.mxu0 %v4120
  %4219 = vmatprep.subr.mxu0 0.0
  %4220 = vmatpush1.msra.mxu0 %v4121
  %4221 = vmatprep.subr.mxu0 0.0
  %4222 = vmatpush1.msra.mxu0 %v4122
  %4223 = vmatprep.subr.mxu0 0.0
  %4224 = vmatpush1.msra.mxu0 %v4123
  %4225 = vmatprep.subr.mxu0 0.0
  %4226 = vmatpush1.msra.mxu0 %v4124
  %4227 = vmatprep.subr.mxu0 0.0
  %4228 = vmatpush1.msra.mxu0 %v4125
  %4229 = vmatprep.subr.mxu0 0.0
  %4230 = vmatpush1.msra.mxu0 %v4126
  %4231 = vmatprep.subr.mxu0 0.0
  %4232 = vmatpush1.msra.mxu0 %v4127
  %4233 = vmatprep.subr.mxu0 0.0
  %4234 = vmatpush1.msra.mxu0 %v4128
  %4235 = vmatprep.subr.mxu0 0.0
  %4236 = vmatpush1.msra.mxu0 %v4129
  %4237 = vmatprep.subr.mxu0 0.0
  %4238 = vmatpush1.msra.mxu0 %v4130
  %4239 = vmatprep.subr.mxu0 0.0
  %4240 = vmatpush1.msra.mxu0 %v4131
  %4241 = vmatprep.subr.mxu0 0.0
  %4242 = vmatpush1.msra.mxu0 %v4132
  %4243 = vmatprep.subr.mxu0 0.0
  %4244 = vmatpush1.msra.mxu0 %v4133
  %4245 = vmatprep.subr.mxu0 0.0
  %4246 = vmatpush1.msra.mxu0 %v4134
  %4247 = vmatprep.subr.mxu0 0.0
  %4248 = vmatpush1.msra.mxu0 %v4135
  %4249 = vmatprep.subr.mxu0 0.0
  %4250 = vmatpush1.msra.mxu0 %v4136
  %4251 = vmatprep.subr.mxu0 0.0
  %4252 = vmatpush1.msra.mxu0 %v4137
  %4253 = vmatprep.subr.mxu0 0.0
  %4254 = vmatpush1.msra.mxu0 %v4138
  %4255 = vmatprep.subr.mxu0 0.0
  %4256 = vmatpush1.msra.mxu0 %v4139
  %4257 = vmatprep.subr.mxu0 0.0
  %4258 = vmatpush1.msra.mxu0 %v4140
  %4259 = vmatprep.subr.mxu0 0.0
  %4260 = vmatpush1.msra.mxu0 %v4141
  %4261 = vmatprep.subr.mxu0 0.0
  %4262 = vmatpush1.msra.mxu0 %v4142
  %4263 = vmatprep.subr.mxu0 0.0
  %4264 = vmatpush1.msra.mxu0 %v4143
  %4265 = vmatprep.subr.mxu0 0.0
  %4266 = vmatpush1.msra.mxu0 %v4144
  %4267 = vmatprep.subr.mxu0 0.0
  %4268 = vmatpush1.msra.mxu0 %v4145
  %4269 = vmatprep.subr.mxu0 0.0
  %4270 = vmatpush1.msra.mxu0 %v4146
  %4271 = vmatprep.subr.mxu0 0.0
  %4272 = vmatpush1.msra.mxu0 %v4147
  %4273 = vmatprep.mubr.f32.mxu0 %v4101
  %4274 = vmatmul.mubr.f32.gmra.mrb[0].mxu0 %v4100
  %v4275 = vpop.f32.mrb[0].mxu0
  %v4276 = vadd.f32 %v4179, %v4275
  %v4277 = vpop.f32.mrb[0].mxu0
  %4278 = vmatprep.mubr.f32.mxu0 %v4105
  %4279 = vmatmul.mubr.f32.gmra.mrb[0].mxu0 %v4104
  %v4280 = vpop.f32.mrb[0].mxu0
  %v4281 = vadd.f32 %v4184, %v4280
  %v4282 = vpop.f32.mrb[0].mxu0
  %4283 = vmatprep.mubr.f32.mxu0 %v4109
  %4284 = vmatmul.mubr.f32.gmra.mrb[0].mxu0 %v4108
  %v4285 = vpop.f32.mrb[0].mxu0
  %v4286 = vadd.f32 %v4189, %v4285
  %v4287 = vpop.f32.mrb[0].mxu0
  %4288 = vmatprep.mubr.f32.mxu0 %v4113
  %4289 = vmatmul.mubr.f32.gmra.mrb[0].mxu0 %v4112
  %v4290 = vpop.f32.mrb[0].mxu0
  %v4291 = vadd.f32 %v4194, %v4290
  %v4292 = vpop.f32.mrb[0].mxu0
  %4293 = vdwg.mxu0
  %4294 = vmatprep.subr.mxu0 0.0
  %4295 = vmatpush1.msra.mxu0 %v4148
  %4296 = vmatprep.subr.mxu0 0.0
  %4297 = vmatpush1.msra.mxu0 %v4149
  %4298 = vmatprep.subr.mxu0 0.0
  %4299 = vmatpush1.msra.mxu0 %v4150
  %4300 = vmatprep.subr.mxu0 0.0
  %4301 = vmatpush1.msra.mxu0 %v4151
  %4302 = vmatprep.subr.mxu0 0.0
  %4303 = vmatpush1.msra.mxu0 %v4152
  %4304 = vmatprep.subr.mxu0 0.0
  %4305 = vmatpush1.msra.mxu0 %v4153
  %4306 = vmatprep.subr.mxu0 0.0
  %4307 = vmatpush1.msra.mxu0 %v4154
  %4308 = vmatprep.subr.mxu0 0.0
  %4309 = vmatpush1.msra.mxu0 %v4155
  %4310 = vmatprep.subr.mxu0 0.0
  %4311 = vmatpush1.msra.mxu0 %v4156
  %4312 = vmatprep.subr.mxu0 0.0
  %4313 = vmatpush1.msra.mxu0 %v4157
  %4314 = vmatprep.subr.mxu0 0.0
  %4315 = vmatpush1.msra.mxu0 %v4158
  %4316 = vmatprep.subr.mxu0 0.0
  %4317 = vmatpush1.msra.mxu0 %v4159
  %4318 = vmatprep.subr.mxu0 0.0
  %4319 = vmatpush1.msra.mxu0 %v4160
  %4320 = vmatprep.subr.mxu0 0.0
  %4321 = vmatpush1.msra.mxu0 %v4161
  %4322 = vmatprep.subr.mxu0 0.0
  %4323 = vmatpush1.msra.mxu0 %v4162
  %4324 = vmatprep.subr.mxu0 0.0
  %4325 = vmatpush1.msra.mxu0 %v4163
  %4326 = vmatprep.subr.mxu0 0.0
  %4327 = vmatpush1.msra.mxu0 %v4164
  %4328 = vmatprep.subr.mxu0 0.0
  %4329 = vmatpush1.msra.mxu0 %v4165
  %4330 = vmatprep.subr.mxu0 0.0
  %4331 = vmatpush1.msra.mxu0 %v4166
  %4332 = vmatprep.subr.mxu0 0.0
  %4333 = vmatpush1.msra.mxu0 %v4167
  %4334 = vmatprep.subr.mxu0 0.0
  %4335 = vmatpush1.msra.mxu0 %v4168
  %4336 = vmatprep.subr.mxu0 0.0
  %4337 = vmatpush1.msra.mxu0 %v4169
  %4338 = vmatprep.subr.mxu0 0.0
  %4339 = vmatpush1.msra.mxu0 %v4170
  %4340 = vmatprep.subr.mxu0 0.0
  %4341 = vmatpush1.msra.mxu0 %v4171
  %4342 = vmatprep.subr.mxu0 0.0
  %4343 = vmatpush1.msra.mxu0 0.0
  %4344 = vmatprep.subr.mxu0 0.0
  %4345 = vmatpush1.msra.mxu0 0.0
  %4346 = vmatprep.subr.mxu0 0.0
  %4347 = vmatpush1.msra.mxu0 0.0
  %4348 = vmatprep.subr.mxu0 0.0
  %4349 = vmatpush1.msra.mxu0 0.0
  %4350 = vmatprep.subr.mxu0 0.0
  %4351 = vmatpush1.msra.mxu0 0.0
  %4352 = vmatprep.subr.mxu0 0.0
  %4353 = vmatpush1.msra.mxu0 0.0
  %4354 = vmatprep.subr.mxu0 0.0
  %4355 = vmatpush1.msra.mxu0 0.0
  %4356 = vmatprep.subr.mxu0 0.0
  %4357 = vmatpush1.msra.mxu0 0.0
  %4358 = vmatprep.mubr.f32.mxu0 %v4198
  %4359 = vmatmul.mubr.f32.gmra.mrb[0].mxu0 %v4102
  %v4360 = vpop.f32.mrb[0].mxu0
  %v4361 = vadd.f32 %v4276, %v4360
  %v4362 = vpop.f32.mrb[0].mxu0
  %4363 = vmatprep.mubr.f32.mxu0 %v4201
  %4364 = vmatmul.mubr.f32.gmra.mrb[0].mxu0 %v4106
  %v4365 = vpop.f32.mrb[0].mxu0
  %v4366 = vadd.f32 %v4281, %v4365
  %v4367 = vpop.f32.mrb[0].mxu0
  %4368 = vmatprep.mubr.f32.mxu0 %v4204
  %4369 = vmatmul.mubr.f32.gmra.mrb[0].mxu0 %v4110
  %v4370 = vpop.f32.mrb[0].mxu0
  %v4371 = vadd.f32 %v4286, %v4370
  %v4372 = vpop.f32.mrb[0].mxu0
  %4373 = vmatprep.mubr.f32.mxu0 %v4207
  %4374 = vmatmul.mubr.f32.gmra.mrb[0].mxu0 %v4114
  %v4375 = vpop.f32.mrb[0].mxu0
  %v4376 = vadd.f32 %v4291, %v4375
  %v4377 = vpop.f32.mrb[0].mxu0
  %4378 = vdwg.mxu0
  %vm4379 = vcmp.gt.f32.partialorder %v4361, 0.0
  %vm4380 = vcmp.gt.f32.partialorder %v4366, 0.0
  %vm4381 = vcmp.gt.f32.partialorder %v4371, 0.0
  %vm4382 = vcmp.gt.f32.partialorder %v4376, 0.0
  %v4383 = vmul.f32 %v4361, 0.01
  %v4384 = vmul.f32 %v4366, 0.01
  %v4385 = vmul.f32 %v4371, 0.01
  %v4386 = vmul.f32 %v4376, 0.01
  %v4387 = vsel %vm4379, %v4361, %v4383
  %v4388 = vsel %vm4380, %v4366, %v4384
  %v4389 = vsel %vm4381, %v4371, %v4385
  %v4390 = vsel %vm4382, %v4376, %v4386
  %v4391 = vld [vmem:[%s10] sm:$0xff]
  %v4392 = vld [vmem:[%s10 + $0x8] sm:$0xff]
  %v4393 = vld [vmem:[%s10 + $0x10] sm:$0xff]
  %v4394 = vld [vmem:[%s10 + $0x18] sm:$0xff]
  %4396 = vset.pattern.permute.xlu0 0
  %4397 = vperm.xlu0 %4396, %v4391
  %v4398 = vpop.permute.xlu0 %4397
  %4401 = vset.pattern.permute.xlu0 0
  %4402 = vperm.xlu0 %4401, %v4392
  %v4403 = vpop.permute.xlu0 %4402
  %4406 = vset.pattern.permute.xlu0 0
  %4407 = vperm.xlu0 %4406, %v4393
  %v4408 = vpop.permute.xlu0 %4407
  %4411 = vset.pattern.permute.xlu0 0
  %4412 = vperm.xlu0 %4411, %v4394
  %v4413 = vpop.permute.xlu0 %4412
  %v4415 = vmul.f32 %v4387, %v4398
  %v4416 = vmul.f32 %v4388, %v4403
  %v4417 = vmul.f32 %v4389, %v4408
  %v4418 = vmul.f32 %v4390, %v4413
  %v4419 = vld [vmem:[%s11] sm:$0xff]
  %v4420 = vld [vmem:[%s11 + $0x8] sm:$0xff]
  %v4421 = vld [vmem:[%s11 + $0x10] sm:$0xff]
  %v4422 = vld [vmem:[%s11 + $0x18] sm:$0xff]
  %4424 = vset.pattern.permute.xlu0 0
  %4425 = vperm.xlu0 %4424, %v4419
  %v4426 = vpop.permute.xlu0 %4425
  %4429 = vset.pattern.permute.xlu0 0
  %4430 = vperm.xlu0 %4429, %v4420
  %v4431 = vpop.permute.xlu0 %4430
  %4434 = vset.pattern.permute.xlu0 0
  %4435 = vperm.xlu0 %4434, %v4421
  %v4436 = vpop.permute.xlu0 %4435
  %4439 = vset.pattern.permute.xlu0 0
  %4440 = vperm.xlu0 %4439, %v4422
  %v4441 = vpop.permute.xlu0 %4440
  %v4443 = vadd.f32 %v4415, %v4426
  %v4444 = vadd.f32 %v4416, %v4431
  %v4445 = vadd.f32 %v4417, %v4436
  %v4446 = vadd.f32 %v4418, %v4441
  %v4447 = vld [vmem:[%s2] sm:$0xff]
  %v4448 = vld [vmem:[%s2 + $0x8] sm:$0xff]
  %v4449 = vld [vmem:[%s2 + $0x10] sm:$0xff]
  %v4450 = vld [vmem:[%s2 + $0x18] sm:$0xff]
  %v4451 = vmul.f32 %v4443, %v4447
  %v4452 = vmul.f32 %v4444, %v4448
  %v4453 = vmul.f32 %v4445, %v4449
  %v4454 = vmul.f32 %v4446, %v4450
  %v4455 = vld [vmem:[%s12] sm:$0xff]
  %v4456 = vld [vmem:[%s13] sm:$0xff]
  %4458 = vset.pattern.permute.xlu0 0
  %4459 = vperm.xlu0 %4458, %v4456
  %v4460 = vpop.permute.xlu0 %4459
  %vm4462 = vcmask 261120
  %v4464 = vsel %vm4462, %v4455, 0
  %4466 = vmatprep.subr.mxu0 0.0
  %4467 = vmatpush1.msra.mxu0 %v4451
  %4468 = vmatprep.subr.mxu0 0.0
  %4469 = vmatpush1.msra.mxu0 %v4452
  %4470 = vmatprep.subr.mxu0 0.0
  %4471 = vmatpush1.msra.mxu0 %v4453
  %4472 = vmatprep.subr.mxu0 0.0
  %4473 = vmatpush1.msra.mxu0 %v4454
  %4474 = vmatprep.subr.mxu0 0.0
  %4475 = vmatpush1.msra.mxu0 0.0
  %4476 = vmatprep.subr.mxu0 0.0
  %4477 = vmatpush1.msra.mxu0 0.0
  %4478 = vmatprep.subr.mxu0 0.0
  %4479 = vmatpush1.msra.mxu0 0.0
  %4480 = vmatprep.subr.mxu0 0.0
  %4481 = vmatpush1.msra.mxu0 0.0
  %4482 = vmatprep.subr.mxu0 0.0
  %4483 = vmatpush1.msra.mxu0 0.0
  %4484 = vmatprep.subr.mxu0 0.0
  %4485 = vmatpush1.msra.mxu0 0.0
  %4486 = vmatprep.subr.mxu0 0.0
  %4487 = vmatpush1.msra.mxu0 0.0
  %4488 = vmatprep.subr.mxu0 0.0
  %4489 = vmatpush1.msra.mxu0 0.0
  %4490 = vmatprep.subr.mxu0 0.0
  %4491 = vmatpush1.msra.mxu0 0.0
  %4492 = vmatprep.subr.mxu0 0.0
  %4493 = vmatpush1.msra.mxu0 0.0
  %4494 = vmatprep.subr.mxu0 0.0
  %4495 = vmatpush1.msra.mxu0 0.0
  %4496 = vmatprep.subr.mxu0 0.0
  %4497 = vmatpush1.msra.mxu0 0.0
  %4498 = vmatprep.subr.mxu0 0.0
  %4499 = vmatpush1.msra.mxu0 0.0
  %4500 = vmatprep.subr.mxu0 0.0
  %4501 = vmatpush1.msra.mxu0 0.0
  %4502 = vmatprep.subr.mxu0 0.0
  %4503 = vmatpush1.msra.mxu0 0.0
  %4504 = vmatprep.subr.mxu0 0.0
  %4505 = vmatpush1.msra.mxu0 0.0
  %4506 = vmatprep.subr.mxu0 0.0
  %4507 = vmatpush1.msra.mxu0 0.0
  %4508 = vmatprep.subr.mxu0 0.0
  %4509 = vmatpush1.msra.mxu0 0.0
  %4510 = vmatprep.subr.mxu0 0.0
  %4511 = vmatpush1.msra.mxu0 0.0
  %4512 = vmatprep.subr.mxu0 0.0
  %4513 = vmatpush1.msra.mxu0 0.0
  %4514 = vmatprep.subr.mxu0 0.0
  %4515 = vmatpush1.msra.mxu0 0.0
  %4516 = vmatprep.subr.mxu0 0.0
  %4517 = vmatpush1.msra.mxu0 0.0
  %4518 = vmatprep.subr.mxu0 0.0
  %4519 = vmatpush1.msra.mxu0 0.0
  %4520 = vmatprep.subr.mxu0 0.0
  %4521 = vmatpush1.msra.mxu0 0.0
  %4522 = vmatprep.subr.mxu0 0.0
  %4523 = vmatpush1.msra.mxu0 0.0
  %4524 = vmatprep.subr.mxu0 0.0
  %4525 = vmatpush1.msra.mxu0 0.0
  %4526 = vmatprep.subr.mxu0 0.0
  %4527 = vmatpush1.msra.mxu0 0.0
  %4528 = vmatprep.subr.mxu0 0.0
  %4529 = vmatpush1.msra.mxu0 0.0
  %4530 = vmatprep.mubr.f32.mxu0 0.0
  %4531 = vmatmul.mubr.f32.gmra.mrb[0].mxu0 %v4464
  %v4532 = vpop.f32.mrb[0].mxu0
  %v4533 = vadd.f32 %v4460, %v4532
  %v4534 = vpop.f32.mrb[0].mxu0
  %4535 = vdwg.mxu0
  %vm4536 = vcmp.gt.f32.partialorder %v4533, 0.0
  %v4537 = vmul.f32 %v4533, 0.01
  %v4538 = vsel %vm4536, %v4533, %v4537
  %v4539 = vld [vmem:[%s14] sm:$0xff]
  %4541 = vset.pattern.permute.xlu0 0
  %4542 = vperm.xlu0 %4541, %v4539
  %v4543 = vpop.permute.xlu0 %4542
  %v4545 = vmul.f32 %v4538, %v4543
  %v4546 = vld [vmem:[%s15] sm:$0xff]
  %4548 = vset.pattern.permute.xlu0 0
  %4549 = vperm.xlu0 %4548, %v4546
  %v4550 = vpop.permute.xlu0 %4549
  %v4552 = vadd.f32 %v4545, %v4550
  %v4553 = vld [vmem:[%s3] sm:$0xff]
  %v4554 = vmul.f32 %v4552, %v4553
  %v4555 = vld [vmem:[%s16] sm:$0x7]
  %v4556 = vld [vmem:[%s17] sm:$0x7]
  %4558 = vset.pattern.permute.xlu0 0
  %4559 = vperm.xlu0 %4558, %v4556
  %v4560 = vpop.permute.xlu0 %4559
  %vm4562 = vcmask 64512
  %v4564 = vsel %vm4562, %v4555, 0
  %4566 = vmatprep.subr.mxu0 0.0
  %4567 = vmatpush1.msra.mxu0 %v4554
  %4568 = vmatprep.subr.mxu0 0.0
  %4569 = vmatpush1.msra.mxu0 0.0
  %4570 = vmatprep.subr.mxu0 0.0
  %4571 = vmatpush1.msra.mxu0 0.0
  %4572 = vmatprep.subr.mxu0 0.0
  %4573 = vmatpush1.msra.mxu0 0.0
  %4574 = vmatprep.subr.mxu0 0.0
  %4575 = vmatpush1.msra.mxu0 0.0
  %4576 = vmatprep.subr.mxu0 0.0
  %4577 = vmatpush1.msra.mxu0 0.0
  %4578 = vmatprep.subr.mxu0 0.0
  %4579 = vmatpush1.msra.mxu0 0.0
  %4580 = vmatprep.subr.mxu0 0.0
  %4581 = vmatpush1.msra.mxu0 0.0
  %4582 = vmatprep.subr.mxu0 0.0
  %4583 = vmatpush1.msra.mxu0 0.0
  %4584 = vmatprep.subr.mxu0 0.0
  %4585 = vmatpush1.msra.mxu0 0.0
  %4586 = vmatprep.subr.mxu0 0.0
  %4587 = vmatpush1.msra.mxu0 0.0
  %4588 = vmatprep.subr.mxu0 0.0
  %4589 = vmatpush1.msra.mxu0 0.0
  %4590 = vmatprep.subr.mxu0 0.0
  %4591 = vmatpush1.msra.mxu0 0.0
  %4592 = vmatprep.subr.mxu0 0.0
  %4593 = vmatpush1.msra.mxu0 0.0
  %4594 = vmatprep.subr.mxu0 0.0
  %4595 = vmatpush1.msra.mxu0 0.0
  %4596 = vmatprep.subr.mxu0 0.0
  %4597 = vmatpush1.msra.mxu0 0.0
  %4598 = vmatprep.subr.mxu0 0.0
  %4599 = vmatpush1.msra.mxu0 0.0
  %4600 = vmatprep.subr.mxu0 0.0
  %4601 = vmatpush1.msra.mxu0 0.0
  %4602 = vmatprep.subr.mxu0 0.0
  %4603 = vmatpush1.msra.mxu0 0.0
  %4604 = vmatprep.subr.mxu0 0.0
  %4605 = vmatpush1.msra.mxu0 0.0
  %4606 = vmatprep.subr.mxu0 0.0
  %4607 = vmatpush1.msra.mxu0 0.0
  %4608 = vmatprep.subr.mxu0 0.0
  %4609 = vmatpush1.msra.mxu0 0.0
  %4610 = vmatprep.subr.mxu0 0.0
  %4611 = vmatpush1.msra.mxu0 0.0
  %4612 = vmatprep.subr.mxu0 0.0
  %4613 = vmatpush1.msra.mxu0 0.0
  %4614 = vmatprep.subr.mxu0 0.0
  %4615 = vmatpush1.msra.mxu0 0.0
  %4616 = vmatprep.subr.mxu0 0.0
  %4617 = vmatpush1.msra.mxu0 0.0
  %4618 = vmatprep.subr.mxu0 0.0
  %4619 = vmatpush1.msra.mxu0 0.0
  %4620 = vmatprep.subr.mxu0 0.0
  %4621 = vmatpush1.msra.mxu0 0.0
  %4622 = vmatprep.subr.mxu0 0.0
  %4623 = vmatpush1.msra.mxu0 0.0
  %4624 = vmatprep.subr.mxu0 0.0
  %4625 = vmatpush1.msra.mxu0 0.0
  %4626 = vmatprep.subr.mxu0 0.0
  %4627 = vmatpush1.msra.mxu0 0.0
  %4628 = vmatprep.subr.mxu0 0.0
  %4629 = vmatpush1.msra.mxu0 0.0
  %4630 = vmatprep.mubr.f32.mxu0 0.0
  %4631 = vmatmul.mubr.f32.gmra.mrb[0].mxu0 %v4564
  %v4632 = vpop.f32.mrb[0].mxu0
  %v4633 = vadd.f32 %v4560, %v4632
  %v4634 = vpop.f32.mrb[0].mxu0
  %4635 = vdwg.mxu0
  %4636 = vst [vmem:[%s18] sm:$0x7] %v4633
  // Predicated region
  $region74: #{simplenet3d_forward.1} parent=0 // pred_check
    _
  $region75: #{simplenet3d_forward.1} parent=0 // pred_check_branch
    %4638 = sbr.rel (0) target = $region77
  $region76: #{simplenet3d_forward.1} parent=0 // pred_region
    _
  $region77: #{simplenet3d_forward.1} parent=0 // pred_fallthru
    _
  // Predicated region
  $region78: #{simplenet3d_forward.1} parent=0 // pred_check
    _
  $region79: #{simplenet3d_forward.1} parent=0 // pred_check_branch
    %4640 = sbr.rel (0) target = $region81
  $region80: #{simplenet3d_forward.1} parent=0 // pred_region
    _
  $region81: #{simplenet3d_forward.1} parent=0 // pred_fallthru
    _

</llo_original>
